<compile_context>
chip_gen: v7x
topology: tpu7x:2x2x1
jax: 0.10.0
libtpu: 0.0.40
codegen_flags: <defaults>
</compile_context>

<pallas_src>
import math
import functools

import jax
import jax.numpy as jnp
from jax.experimental import pallas as pl
from jax.experimental.pallas import tpu as pltpu

# ---- small config consistent with the module's constructor ------------------
IN_DIM  = 1     # in_dim
OUT_DIM = 64    # out_dim
N_LAYER = 2     # n_layer
N_DIM   = 32    # n_dim
N_HEAD  = 4     # n_head (head_dim = 8)
KSIZE   = 7     # Conv1d kernel
STRIDE  = 2
PAD     = 3
LN_EPS  = 1e-5  # torch TransformerEncoderLayer default layer_norm_eps


# -----------------------------------------------------------------------------
# Fused per-sample kernel: conv matmul + PE + start token + N_LAYER post-norm
# encoder layers + class-token head.  One grid step == one batch sample.
# -----------------------------------------------------------------------------
def _encoder_kernel(cols_ref, conv_wt_ref, bias_pe_ref, w_ref, vec_ref,
                    out_wt_ref, out_b_ref, out_ref, emb_ref,
                    *, s_valid, s_pad):
    D = N_DIM
    H = N_HEAD
    dh = D // H
    scale = 1.0 / math.sqrt(dh)

    # Conv1d as im2col matmul; conv bias, positional encoding and the start
    # token are all pre-folded into bias_pe (row 0 = start token, rows 1..S-1
    # = conv_b + pe, pad rows = 0 and the im2col rows there are zero too).
    x = (jnp.dot(cols_ref[0], conv_wt_ref[...],
                 preferred_element_type=jnp.float32)
         + bias_pe_ref[...])                                    # (S_pad, D)

    # Additive key mask for the padded tail, built in-kernel (no HBM masks).
    col_ids = jax.lax.broadcasted_iota(jnp.int32, (1, s_pad), 1)
    key_bias = jnp.where(col_ids < s_valid, 0.0, -1e30).astype(jnp.float32)

    for layer in range(N_LAYER):
        w = w_ref[layer]       # (6, D, D): WqT, WkT, WvT, WoT, W1T, W2T
        vec = vec_ref[layer]   # (10, D):  bq, bk, bv, bo, b1, b2, g1, be1, g2, be2

        q = jnp.dot(x, w[0], preferred_element_type=jnp.float32) + vec[0:1]
        k = jnp.dot(x, w[1], preferred_element_type=jnp.float32) + vec[1:2]
        v = jnp.dot(x, w[2], preferred_element_type=jnp.float32) + vec[2:3]

        # Multi-head attention: per-head scores/softmax (numerically-correct
        # per-head max + exact normalization), head outputs folded straight
        # into the output projection (no lane concat of head contexts).
        attn = jnp.zeros((s_pad, D), jnp.float32)
        for h in range(H):
            sl = slice(h * dh, (h + 1) * dh)
            s = jax.lax.dot_general(
                q[:, sl], k[:, sl], (((1,), (1,)), ((), ())),
                preferred_element_type=jnp.float32) * scale + key_bias
            s = s - jnp.max(s, axis=-1, keepdims=True)
            p = jnp.exp(s)
            p = p / jnp.sum(p, axis=-1, keepdims=True)
            ctx = jnp.dot(p, v[:, sl], preferred_element_type=jnp.float32)
            attn = attn + jnp.dot(ctx, w[3][sl, :],
                                  preferred_element_type=jnp.float32)
        attn = attn + vec[3:4]

        # residual + LayerNorm1 (post-norm)
        y = x + attn
        mu = jnp.mean(y, axis=-1, keepdims=True)
        var = jnp.mean(jnp.square(y - mu), axis=-1, keepdims=True)
        y = (y - mu) * jax.lax.rsqrt(var + LN_EPS) * vec[6:7] + vec[7:8]

        # feed-forward (dim_feedforward = n_dim, relu, dropout=0)
        ff = jnp.dot(y, w[4], preferred_element_type=jnp.float32) + vec[4:5]
        ff = jnp.maximum(ff, 0.0)
        ff = jnp.dot(ff, w[5], preferred_element_type=jnp.float32) + vec[5:6]

        # residual + LayerNorm2
        z = y + ff
        mu2 = jnp.mean(z, axis=-1, keepdims=True)
        var2 = jnp.mean(jnp.square(z - mu2), axis=-1, keepdims=True)
        x = (z - mu2) * jax.lax.rsqrt(var2 + LN_EPS) * vec[8:9] + vec[9:10]

    # Lane-dense embedding output; (N, D, S) permute happens in the wrapper.
    emb_ref[0] = x.astype(emb_ref.dtype)
    cls = x[0:1, :]                                             # class token
    out_ref[0] = (jnp.dot(cls, out_wt_ref[...],
                          preferred_element_type=jnp.float32)
                  + out_b_ref[...]).astype(out_ref.dtype)


# -----------------------------------------------------------------------------
# Parameter init (deterministic, synthetic, PyTorch-shaped).
# -----------------------------------------------------------------------------
def init_params(key):
    keys = jax.random.split(key, 8 + 8 * N_LAYER)
    it = iter(keys)

    def rnd(shape, scale=0.05):
        return jax.random.normal(next(it), shape, jnp.float32) * scale

    params = {
        'conv_w': rnd((N_DIM, IN_DIM, KSIZE)),        # Conv1d weight
        'conv_b': rnd((N_DIM,)),
        'start_token': rnd((1, N_DIM, 1)),            # torch: (1, n_dim, 1)
        'out_w': rnd((OUT_DIM, N_DIM)),               # out_linear
        'out_b': rnd((OUT_DIM,)),
        'layers': [],
    }
    for _ in range(N_LAYER):
        params['layers'].append({
            'wqkv': rnd((3 * N_DIM, N_DIM)),          # in_proj_weight
            'bqkv': rnd((3 * N_DIM,)),                # in_proj_bias
            'wo':   rnd((N_DIM, N_DIM)),              # out_proj
            'bo':   rnd((N_DIM,)),
            'w1':   rnd((N_DIM, N_DIM)),              # linear1 (ffn = n_dim)
            'b1':   rnd((N_DIM,)),
            'w2':   rnd((N_DIM, N_DIM)),              # linear2
            'b2':   rnd((N_DIM,)),
            'g1':   jnp.ones((N_DIM,), jnp.float32),
            'be1':  jnp.zeros((N_DIM,), jnp.float32),
            'g2':   jnp.ones((N_DIM,), jnp.float32),
            'be2':  jnp.zeros((N_DIM,), jnp.float32),
        })
    return params


# -----------------------------------------------------------------------------
# Forward pass: host-side layout prep (im2col, PE+bias+start-token slab,
# stacked pre-transposed weights), then ONE fused Pallas call, grid over batch.
# -----------------------------------------------------------------------------
def transformer_forward(params, ts, normalize=True):
    ts = ts.astype(jnp.float32)
    if normalize:
        # TODO(synk): `_normalize_t` is not defined in the source module;
        # assuming per-sample z-normalization along time (population std,
        # ddof=0; torch.std defaults to ddof=1 -- verify against the source).
        mu = jnp.mean(ts, axis=-1, keepdims=True)
        sd = jnp.std(ts, axis=-1, keepdims=True)
        ts = (ts - mu) / (sd + 1e-8)

    N, C, L = ts.shape
    D = N_DIM
    L_out = (L + 2 * PAD - KSIZE) // STRIDE + 1
    S = L_out + 1
    S_pad = ((S + 7) // 8) * 8                       # sublane-aligned sequence
    kdim = C * KSIZE
    KPAD = ((kdim + 7) // 8) * 8                     # im2col K padded to 8n

    # --- im2col for Conv1d(in_dim, n_dim, 7, stride=2, padding=3) ------------
    x_pad = jnp.pad(ts, ((0, 0), (0, 0), (PAD, PAD)))
    idx = (jnp.arange(L_out) * STRIDE)[:, None] + jnp.arange(KSIZE)[None, :]
    patches = x_pad[:, :, idx]                              # (N, C, L_out, K)
    cols = patches.transpose(0, 2, 1, 3).reshape(N, L_out, kdim)
    # row 0 reserved for the start token (zero patch), tail rows are padding
    cols = jnp.pad(cols, ((0, 0), (1, S_pad - S), (0, KPAD - kdim)))

    conv_wt = jnp.pad(params['conv_w'].reshape(D, kdim),
                      ((0, 0), (0, KPAD - kdim))).T          # (KPAD, D)

    # --- positional encoding (same values as the torch (1, D, L) buffer) -----
    position = jnp.arange(L_out, dtype=jnp.float32)
    div_term = jnp.exp(jnp.arange(0, D, 2, dtype=jnp.float32)
                       * (-math.log(10000.0) / D))
    ang = position[:, None] * div_term[None, :]
    pe = jnp.zeros((L_out, D), jnp.float32)
    pe = pe.at[:, 0::2].set(jnp.sin(ang))
    pe = pe.at[:, 1::2].set(jnp.cos(ang))

    # start token + conv bias + PE folded into one shared (S_pad, D) slab
    bias_pe = jnp.zeros((S_pad, D), jnp.float32)
    bias_pe = bias_pe.at[0].set(params['start_token'].reshape(D))
    bias_pe = bias_pe.at[1:S].set(pe + params['conv_b'][None, :])

    # --- consolidated, pre-transposed per-layer weights / vectors ------------
    Ws, Vs = [], []
    for p in params['layers']:
        wqkv = p['wqkv']
        Ws.append(jnp.stack([wqkv[0:D].T, wqkv[D:2 * D].T, wqkv[2 * D:3 * D].T,
                             p['wo'].T, p['w1'].T, p['w2'].T]))
        b = p['bqkv']
        Vs.append(jnp.stack([b[0:D], b[D:2 * D], b[2 * D:3 * D],
                             p['bo'], p['b1'], p['b2'],
                             p['g1'], p['be1'], p['g2'], p['be2']]))
    W = jnp.stack(Ws)                                 # (N_LAYER, 6, D, D)
    V = jnp.stack(Vs)                                 # (N_LAYER, 10, D)

    out_wt = params['out_w'].T                        # (D, OUT_DIM)
    out_b = params['out_b'].reshape(1, OUT_DIM)

    kernel = functools.partial(_encoder_kernel, s_valid=S, s_pad=S_pad)

    out3, emb = pl.pallas_call(
        kernel,
        grid=(N,),
        out_shape=(jax.ShapeDtypeStruct((N, 1, OUT_DIM), jnp.float32),
                   jax.ShapeDtypeStruct((N, S_pad, D), jnp.float32)),
        in_specs=[
            pl.BlockSpec((1, S_pad, KPAD), lambda n: (n, 0, 0)),      # cols
            pl.BlockSpec((KPAD, D), lambda n: (0, 0)),                # conv_wt
            pl.BlockSpec((S_pad, D), lambda n: (0, 0)),               # bias_pe
            pl.BlockSpec((N_LAYER, 6, D, D), lambda n: (0, 0, 0, 0)),  # W
            pl.BlockSpec((N_LAYER, 10, D), lambda n: (0, 0, 0)),       # V
            pl.BlockSpec((D, OUT_DIM), lambda n: (0, 0)),             # out_wt
            pl.BlockSpec((1, OUT_DIM), lambda n: (0, 0)),             # out_b
        ],
        out_specs=(
            pl.BlockSpec((1, 1, OUT_DIM), lambda n: (n, 0, 0)),
            pl.BlockSpec((1, S_pad, D), lambda n: (n, 0, 0)),
        ),
        compiler_params=pltpu.CompilerParams(
            dimension_semantics=("parallel",)),
    )(cols, conv_wt, bias_pe, W, V, out_wt, out_b)

    out = out3.reshape(N, OUT_DIM)
    # lane-dense kernel output -> (N, D, S) permute done in XLA (cheap)
    ts_emb_out = jnp.transpose(emb[:, :S, :], (0, 2, 1))
    return out, ts_emb_out


if __name__ == "__main__":
    key = jax.random.PRNGKey(0)
    pkey, xkey = jax.random.split(key)
    params = init_params(pkey)

    N, L = 2, 32
    ts = jax.random.normal(xkey, (N, IN_DIM, L), jnp.float32)

    fwd = jax.jit(transformer_forward)
    out, ts_emb_out = fwd(params, ts)
    jax.block_until_ready((out, ts_emb_out))

    L_out = (L + 2 * PAD - KSIZE) // STRIDE + 1
    assert out.shape == (N, OUT_DIM)
    assert ts_emb_out.shape == (N, N_DIM, L_out + 1)
    assert jnp.all(jnp.isfinite(out)) and jnp.all(jnp.isfinite(ts_emb_out))
    print("KERNEL_OK")
</pallas_src>

<mosaic_0001>
module attributes {stable_mosaic.version = 11 : i64} {
  func.func @_encoder_kernel(%arg0: i32, %arg1: memref<1x24x8xf32, #tpu.memory_space<vmem>>, %arg2: memref<8x32xf32, #tpu.memory_space<vmem>>, %arg3: memref<24x32xf32, #tpu.memory_space<vmem>>, %arg4: memref<2x6x32x32xf32, #tpu.memory_space<vmem>>, %arg5: memref<2x10x32xf32, #tpu.memory_space<vmem>>, %arg6: memref<32x64xf32, #tpu.memory_space<vmem>>, %arg7: memref<1x64xf32, #tpu.memory_space<vmem>>, %arg8: memref<1x1x64xf32, #tpu.memory_space<vmem>>, %arg9: memref<1x24x32xf32, #tpu.memory_space<vmem>>) attributes {dimension_semantics = [#tpu.dimension_semantics<parallel>], iteration_bounds = array<i64: 2>, scalar_prefetch = 0 : i64, scratch_operands = 0 : i64, tpu.core_type = #tpu.core_type<tc>, window_params = [{transform_indices = @transform_0, window_bounds = array<i64: 1, 24, 8>}, {pipeline_mode = #tpu.pipeline_mode<synchronous>, transform_indices = @transform_1, window_bounds = array<i64: 8, 32>}, {pipeline_mode = #tpu.pipeline_mode<synchronous>, transform_indices = @transform_2, window_bounds = array<i64: 24, 32>}, {pipeline_mode = #tpu.pipeline_mode<synchronous>, transform_indices = @transform_3, window_bounds = array<i64: 2, 6, 32, 32>}, {pipeline_mode = #tpu.pipeline_mode<synchronous>, transform_indices = @transform_4, window_bounds = array<i64: 2, 10, 32>}, {pipeline_mode = #tpu.pipeline_mode<synchronous>, transform_indices = @transform_5, window_bounds = array<i64: 32, 64>}, {pipeline_mode = #tpu.pipeline_mode<synchronous>, transform_indices = @transform_6, window_bounds = array<i64: 1, 64>}, {transform_indices = @transform_7, window_bounds = array<i64: 1, 1, 64>}, {transform_indices = @transform_8, window_bounds = array<i64: 1, 24, 32>}]} {
    %c0 = arith.constant 0 : index
    %c0_0 = arith.constant 0 : index
    %c0_1 = arith.constant 0 : index
    %0 = vector.load %arg1[%c0, %c0_0, %c0_1] : memref<1x24x8xf32, #tpu.memory_space<vmem>>, vector<1x24x8xf32>
    %1 = vector.shape_cast %0 : vector<1x24x8xf32> to vector<24x8xf32>
    %c0_2 = arith.constant 0 : index
    %c0_3 = arith.constant 0 : index
    %2 = vector.load %arg2[%c0_2, %c0_3] : memref<8x32xf32, #tpu.memory_space<vmem>>, vector<8x32xf32>
    %cst = arith.constant dense<0.000000e+00> : vector<24x32xf32>
    %3 = tpu.matmul %1, %2, %cst {dimension_numbers = #tpu.dot_dimension_numbers<[1], [0], [0], [1], [0, 0, 1, 1], [], []>} : vector<24x8xf32>, vector<8x32xf32>, vector<24x32xf32> -> vector<24x32xf32>
    %c0_4 = arith.constant 0 : index
    %c0_5 = arith.constant 0 : index
    %4 = vector.load %arg3[%c0_4, %c0_5] : memref<24x32xf32, #tpu.memory_space<vmem>>, vector<24x32xf32>
    %5 = arith.addf %3, %4 : vector<24x32xf32>
    %6 = tpu.iota {dimensions = array<i32: 1>} : vector<1x24xi32>
    %c17_i32 = arith.constant 17 : i32
    %7 = vector.broadcast %c17_i32 : i32 to vector<1x24xi32>
    %8 = arith.cmpi slt, %6, %7 : vector<1x24xi32>
    %cst_6 = arith.constant 0.000000e+00 : f32
    %cst_7 = arith.constant -1.000000e+30 : f32
    %9 = vector.broadcast %cst_6 : f32 to vector<1x24xf32>
    %10 = vector.broadcast %cst_7 : f32 to vector<1x24xf32>
    %11 = arith.select %8, %9, %10 : vector<1x24xi1>, vector<1x24xf32>
    %c0_8 = arith.constant 0 : index
    %c0_9 = arith.constant 0 : index
    %c0_10 = arith.constant 0 : index
    %c0_11 = arith.constant 0 : index
    %12 = vector.load %arg4[%c0_8, %c0_9, %c0_10, %c0_11] : memref<2x6x32x32xf32, #tpu.memory_space<vmem>>, vector<1x6x32x32xf32>
    %13 = vector.shape_cast %12 : vector<1x6x32x32xf32> to vector<6x32x32xf32>
    %c0_12 = arith.constant 0 : index
    %c0_13 = arith.constant 0 : index
    %c0_14 = arith.constant 0 : index
    %14 = vector.load %arg5[%c0_12, %c0_13, %c0_14] : memref<2x10x32xf32, #tpu.memory_space<vmem>>, vector<1x10x32xf32>
    %15 = vector.shape_cast %14 : vector<1x10x32xf32> to vector<10x32xf32>
    %16 = vector.extract_strided_slice %13 {offsets = [0, 0, 0], sizes = [1, 32, 32], strides = [1, 1, 1]} : vector<6x32x32xf32> to vector<1x32x32xf32>
    %17 = vector.shape_cast %16 : vector<1x32x32xf32> to vector<32x32xf32>
    %cst_15 = arith.constant dense<0.000000e+00> : vector<24x32xf32>
    %18 = tpu.matmul %5, %17, %cst_15 {dimension_numbers = #tpu.dot_dimension_numbers<[1], [0], [0], [1], [0, 0, 1, 1], [], []>} : vector<24x32xf32>, vector<32x32xf32>, vector<24x32xf32> -> vector<24x32xf32>
    %19 = vector.extract_strided_slice %15 {offsets = [0, 0], sizes = [1, 32], strides = [1, 1]} : vector<10x32xf32> to vector<1x32xf32>
    %20 = vector.broadcast %19 : vector<1x32xf32> to vector<24x32xf32>
    %21 = arith.addf %18, %20 : vector<24x32xf32>
    %22 = vector.extract_strided_slice %13 {offsets = [1, 0, 0], sizes = [1, 32, 32], strides = [1, 1, 1]} : vector<6x32x32xf32> to vector<1x32x32xf32>
    %23 = vector.shape_cast %22 : vector<1x32x32xf32> to vector<32x32xf32>
    %cst_16 = arith.constant dense<0.000000e+00> : vector<24x32xf32>
    %24 = tpu.matmul %5, %23, %cst_16 {dimension_numbers = #tpu.dot_dimension_numbers<[1], [0], [0], [1], [0, 0, 1, 1], [], []>} : vector<24x32xf32>, vector<32x32xf32>, vector<24x32xf32> -> vector<24x32xf32>
    %25 = vector.extract_strided_slice %15 {offsets = [1, 0], sizes = [1, 32], strides = [1, 1]} : vector<10x32xf32> to vector<1x32xf32>
    %26 = vector.broadcast %25 : vector<1x32xf32> to vector<24x32xf32>
    %27 = arith.addf %24, %26 : vector<24x32xf32>
    %28 = vector.extract_strided_slice %13 {offsets = [2, 0, 0], sizes = [1, 32, 32], strides = [1, 1, 1]} : vector<6x32x32xf32> to vector<1x32x32xf32>
    %29 = vector.shape_cast %28 : vector<1x32x32xf32> to vector<32x32xf32>
    %cst_17 = arith.constant dense<0.000000e+00> : vector<24x32xf32>
    %30 = tpu.matmul %5, %29, %cst_17 {dimension_numbers = #tpu.dot_dimension_numbers<[1], [0], [0], [1], [0, 0, 1, 1], [], []>} : vector<24x32xf32>, vector<32x32xf32>, vector<24x32xf32> -> vector<24x32xf32>
    %31 = vector.extract_strided_slice %15 {offsets = [2, 0], sizes = [1, 32], strides = [1, 1]} : vector<10x32xf32> to vector<1x32xf32>
    %32 = vector.broadcast %31 : vector<1x32xf32> to vector<24x32xf32>
    %33 = arith.addf %30, %32 : vector<24x32xf32>
    %cst_18 = arith.constant 0.000000e+00 : f32
    %34 = vector.broadcast %cst_18 : f32 to vector<24x32xf32>
    %35 = vector.extract_strided_slice %21 {offsets = [0, 0], sizes = [24, 8], strides = [1, 1]} : vector<24x32xf32> to vector<24x8xf32>
    %36 = vector.extract_strided_slice %27 {offsets = [0, 0], sizes = [24, 8], strides = [1, 1]} : vector<24x32xf32> to vector<24x8xf32>
    %cst_19 = arith.constant dense<0.000000e+00> : vector<24x24xf32>
    %37 = tpu.matmul %35, %36, %cst_19 {dimension_numbers = #tpu.dot_dimension_numbers<[1], [1], [0], [0], [0, 0, 1, 0], [], []>} : vector<24x8xf32>, vector<24x8xf32>, vector<24x24xf32> -> vector<24x24xf32>
    %cst_20 = arith.constant 0.353553385 : f32
    %38 = vector.broadcast %cst_20 : f32 to vector<24x24xf32>
    %39 = arith.mulf %37, %38 : vector<24x24xf32>
    %40 = vector.broadcast %11 : vector<1x24xf32> to vector<24x24xf32>
    %41 = arith.addf %39, %40 : vector<24x24xf32>
    %cst_21 = arith.constant dense<0xFF800000> : vector<24xf32>
    %42 = vector.multi_reduction <maximumf>, %41, %cst_21 [1] : vector<24x24xf32> to vector<24xf32>
    %43 = vector.shape_cast %42 : vector<24xf32> to vector<24x1xf32>
    %44 = vector.broadcast %43 : vector<24x1xf32> to vector<24x24xf32>
    %45 = arith.subf %41, %44 : vector<24x24xf32>
    %46 = math.exp %45 : vector<24x24xf32>
    %cst_22 = arith.constant dense<0.000000e+00> : vector<24xf32>
    %47 = vector.multi_reduction <add>, %46, %cst_22 [1] : vector<24x24xf32> to vector<24xf32>
    %48 = vector.shape_cast %47 : vector<24xf32> to vector<24x1xf32>
    %49 = vector.broadcast %48 : vector<24x1xf32> to vector<24x24xf32>
    %50 = arith.divf %46, %49 : vector<24x24xf32>
    %51 = vector.extract_strided_slice %33 {offsets = [0, 0], sizes = [24, 8], strides = [1, 1]} : vector<24x32xf32> to vector<24x8xf32>
    %cst_23 = arith.constant dense<0.000000e+00> : vector<24x8xf32>
    %52 = tpu.matmul %50, %51, %cst_23 {dimension_numbers = #tpu.dot_dimension_numbers<[1], [0], [0], [1], [0, 0, 1, 1], [], []>} : vector<24x24xf32>, vector<24x8xf32>, vector<24x8xf32> -> vector<24x8xf32>
    %53 = vector.extract_strided_slice %13 {offsets = [3, 0, 0], sizes = [1, 32, 32], strides = [1, 1, 1]} : vector<6x32x32xf32> to vector<1x32x32xf32>
    %54 = vector.shape_cast %53 : vector<1x32x32xf32> to vector<32x32xf32>
    %55 = vector.extract_strided_slice %54 {offsets = [0, 0], sizes = [8, 32], strides = [1, 1]} : vector<32x32xf32> to vector<8x32xf32>
    %cst_24 = arith.constant dense<0.000000e+00> : vector<24x32xf32>
    %56 = tpu.matmul %52, %55, %cst_24 {dimension_numbers = #tpu.dot_dimension_numbers<[1], [0], [0], [1], [0, 0, 1, 1], [], []>} : vector<24x8xf32>, vector<8x32xf32>, vector<24x32xf32> -> vector<24x32xf32>
    %57 = arith.addf %34, %56 : vector<24x32xf32>
    %58 = vector.extract_strided_slice %21 {offsets = [0, 8], sizes = [24, 8], strides = [1, 1]} : vector<24x32xf32> to vector<24x8xf32>
    %59 = vector.extract_strided_slice %27 {offsets = [0, 8], sizes = [24, 8], strides = [1, 1]} : vector<24x32xf32> to vector<24x8xf32>
    %cst_25 = arith.constant dense<0.000000e+00> : vector<24x24xf32>
    %60 = tpu.matmul %58, %59, %cst_25 {dimension_numbers = #tpu.dot_dimension_numbers<[1], [1], [0], [0], [0, 0, 1, 0], [], []>} : vector<24x8xf32>, vector<24x8xf32>, vector<24x24xf32> -> vector<24x24xf32>
    %cst_26 = arith.constant 0.353553385 : f32
    %61 = vector.broadcast %cst_26 : f32 to vector<24x24xf32>
    %62 = arith.mulf %60, %61 : vector<24x24xf32>
    %63 = vector.broadcast %11 : vector<1x24xf32> to vector<24x24xf32>
    %64 = arith.addf %62, %63 : vector<24x24xf32>
    %cst_27 = arith.constant dense<0xFF800000> : vector<24xf32>
    %65 = vector.multi_reduction <maximumf>, %64, %cst_27 [1] : vector<24x24xf32> to vector<24xf32>
    %66 = vector.shape_cast %65 : vector<24xf32> to vector<24x1xf32>
    %67 = vector.broadcast %66 : vector<24x1xf32> to vector<24x24xf32>
    %68 = arith.subf %64, %67 : vector<24x24xf32>
    %69 = math.exp %68 : vector<24x24xf32>
    %cst_28 = arith.constant dense<0.000000e+00> : vector<24xf32>
    %70 = vector.multi_reduction <add>, %69, %cst_28 [1] : vector<24x24xf32> to vector<24xf32>
    %71 = vector.shape_cast %70 : vector<24xf32> to vector<24x1xf32>
    %72 = vector.broadcast %71 : vector<24x1xf32> to vector<24x24xf32>
    %73 = arith.divf %69, %72 : vector<24x24xf32>
    %74 = vector.extract_strided_slice %33 {offsets = [0, 8], sizes = [24, 8], strides = [1, 1]} : vector<24x32xf32> to vector<24x8xf32>
    %cst_29 = arith.constant dense<0.000000e+00> : vector<24x8xf32>
    %75 = tpu.matmul %73, %74, %cst_29 {dimension_numbers = #tpu.dot_dimension_numbers<[1], [0], [0], [1], [0, 0, 1, 1], [], []>} : vector<24x24xf32>, vector<24x8xf32>, vector<24x8xf32> -> vector<24x8xf32>
    %76 = vector.extract_strided_slice %13 {offsets = [3, 0, 0], sizes = [1, 32, 32], strides = [1, 1, 1]} : vector<6x32x32xf32> to vector<1x32x32xf32>
    %77 = vector.shape_cast %76 : vector<1x32x32xf32> to vector<32x32xf32>
    %78 = vector.extract_strided_slice %77 {offsets = [8, 0], sizes = [8, 32], strides = [1, 1]} : vector<32x32xf32> to vector<8x32xf32>
    %cst_30 = arith.constant dense<0.000000e+00> : vector<24x32xf32>
    %79 = tpu.matmul %75, %78, %cst_30 {dimension_numbers = #tpu.dot_dimension_numbers<[1], [0], [0], [1], [0, 0, 1, 1], [], []>} : vector<24x8xf32>, vector<8x32xf32>, vector<24x32xf32> -> vector<24x32xf32>
    %80 = arith.addf %57, %79 : vector<24x32xf32>
    %81 = vector.extract_strided_slice %21 {offsets = [0, 16], sizes = [24, 8], strides = [1, 1]} : vector<24x32xf32> to vector<24x8xf32>
    %82 = vector.extract_strided_slice %27 {offsets = [0, 16], sizes = [24, 8], strides = [1, 1]} : vector<24x32xf32> to vector<24x8xf32>
    %cst_31 = arith.constant dense<0.000000e+00> : vector<24x24xf32>
    %83 = tpu.matmul %81, %82, %cst_31 {dimension_numbers = #tpu.dot_dimension_numbers<[1], [1], [0], [0], [0, 0, 1, 0], [], []>} : vector<24x8xf32>, vector<24x8xf32>, vector<24x24xf32> -> vector<24x24xf32>
    %cst_32 = arith.constant 0.353553385 : f32
    %84 = vector.broadcast %cst_32 : f32 to vector<24x24xf32>
    %85 = arith.mulf %83, %84 : vector<24x24xf32>
    %86 = vector.broadcast %11 : vector<1x24xf32> to vector<24x24xf32>
    %87 = arith.addf %85, %86 : vector<24x24xf32>
    %cst_33 = arith.constant dense<0xFF800000> : vector<24xf32>
    %88 = vector.multi_reduction <maximumf>, %87, %cst_33 [1] : vector<24x24xf32> to vector<24xf32>
    %89 = vector.shape_cast %88 : vector<24xf32> to vector<24x1xf32>
    %90 = vector.broadcast %89 : vector<24x1xf32> to vector<24x24xf32>
    %91 = arith.subf %87, %90 : vector<24x24xf32>
    %92 = math.exp %91 : vector<24x24xf32>
    %cst_34 = arith.constant dense<0.000000e+00> : vector<24xf32>
    %93 = vector.multi_reduction <add>, %92, %cst_34 [1] : vector<24x24xf32> to vector<24xf32>
    %94 = vector.shape_cast %93 : vector<24xf32> to vector<24x1xf32>
    %95 = vector.broadcast %94 : vector<24x1xf32> to vector<24x24xf32>
    %96 = arith.divf %92, %95 : vector<24x24xf32>
    %97 = vector.extract_strided_slice %33 {offsets = [0, 16], sizes = [24, 8], strides = [1, 1]} : vector<24x32xf32> to vector<24x8xf32>
    %cst_35 = arith.constant dense<0.000000e+00> : vector<24x8xf32>
    %98 = tpu.matmul %96, %97, %cst_35 {dimension_numbers = #tpu.dot_dimension_numbers<[1], [0], [0], [1], [0, 0, 1, 1], [], []>} : vector<24x24xf32>, vector<24x8xf32>, vector<24x8xf32> -> vector<24x8xf32>
    %99 = vector.extract_strided_slice %13 {offsets = [3, 0, 0], sizes = [1, 32, 32], strides = [1, 1, 1]} : vector<6x32x32xf32> to vector<1x32x32xf32>
    %100 = vector.shape_cast %99 : vector<1x32x32xf32> to vector<32x32xf32>
    %101 = vector.extract_strided_slice %100 {offsets = [16, 0], sizes = [8, 32], strides = [1, 1]} : vector<32x32xf32> to vector<8x32xf32>
    %cst_36 = arith.constant dense<0.000000e+00> : vector<24x32xf32>
    %102 = tpu.matmul %98, %101, %cst_36 {dimension_numbers = #tpu.dot_dimension_numbers<[1], [0], [0], [1], [0, 0, 1, 1], [], []>} : vector<24x8xf32>, vector<8x32xf32>, vector<24x32xf32> -> vector<24x32xf32>
    %103 = arith.addf %80, %102 : vector<24x32xf32>
    %104 = vector.extract_strided_slice %21 {offsets = [0, 24], sizes = [24, 8], strides = [1, 1]} : vector<24x32xf32> to vector<24x8xf32>
    %105 = vector.extract_strided_slice %27 {offsets = [0, 24], sizes = [24, 8], strides = [1, 1]} : vector<24x32xf32> to vector<24x8xf32>
    %cst_37 = arith.constant dense<0.000000e+00> : vector<24x24xf32>
    %106 = tpu.matmul %104, %105, %cst_37 {dimension_numbers = #tpu.dot_dimension_numbers<[1], [1], [0], [0], [0, 0, 1, 0], [], []>} : vector<24x8xf32>, vector<24x8xf32>, vector<24x24xf32> -> vector<24x24xf32>
    %cst_38 = arith.constant 0.353553385 : f32
    %107 = vector.broadcast %cst_38 : f32 to vector<24x24xf32>
    %108 = arith.mulf %106, %107 : vector<24x24xf32>
    %109 = vector.broadcast %11 : vector<1x24xf32> to vector<24x24xf32>
    %110 = arith.addf %108, %109 : vector<24x24xf32>
    %cst_39 = arith.constant dense<0xFF800000> : vector<24xf32>
    %111 = vector.multi_reduction <maximumf>, %110, %cst_39 [1] : vector<24x24xf32> to vector<24xf32>
    %112 = vector.shape_cast %111 : vector<24xf32> to vector<24x1xf32>
    %113 = vector.broadcast %112 : vector<24x1xf32> to vector<24x24xf32>
    %114 = arith.subf %110, %113 : vector<24x24xf32>
    %115 = math.exp %114 : vector<24x24xf32>
    %cst_40 = arith.constant dense<0.000000e+00> : vector<24xf32>
    %116 = vector.multi_reduction <add>, %115, %cst_40 [1] : vector<24x24xf32> to vector<24xf32>
    %117 = vector.shape_cast %116 : vector<24xf32> to vector<24x1xf32>
    %118 = vector.broadcast %117 : vector<24x1xf32> to vector<24x24xf32>
    %119 = arith.divf %115, %118 : vector<24x24xf32>
    %120 = vector.extract_strided_slice %33 {offsets = [0, 24], sizes = [24, 8], strides = [1, 1]} : vector<24x32xf32> to vector<24x8xf32>
    %cst_41 = arith.constant dense<0.000000e+00> : vector<24x8xf32>
    %121 = tpu.matmul %119, %120, %cst_41 {dimension_numbers = #tpu.dot_dimension_numbers<[1], [0], [0], [1], [0, 0, 1, 1], [], []>} : vector<24x24xf32>, vector<24x8xf32>, vector<24x8xf32> -> vector<24x8xf32>
    %122 = vector.extract_strided_slice %13 {offsets = [3, 0, 0], sizes = [1, 32, 32], strides = [1, 1, 1]} : vector<6x32x32xf32> to vector<1x32x32xf32>
    %123 = vector.shape_cast %122 : vector<1x32x32xf32> to vector<32x32xf32>
    %124 = vector.extract_strided_slice %123 {offsets = [24, 0], sizes = [8, 32], strides = [1, 1]} : vector<32x32xf32> to vector<8x32xf32>
    %cst_42 = arith.constant dense<0.000000e+00> : vector<24x32xf32>
    %125 = tpu.matmul %121, %124, %cst_42 {dimension_numbers = #tpu.dot_dimension_numbers<[1], [0], [0], [1], [0, 0, 1, 1], [], []>} : vector<24x8xf32>, vector<8x32xf32>, vector<24x32xf32> -> vector<24x32xf32>
    %126 = arith.addf %103, %125 : vector<24x32xf32>
    %127 = vector.extract_strided_slice %15 {offsets = [3, 0], sizes = [1, 32], strides = [1, 1]} : vector<10x32xf32> to vector<1x32xf32>
    %128 = vector.broadcast %127 : vector<1x32xf32> to vector<24x32xf32>
    %129 = arith.addf %126, %128 : vector<24x32xf32>
    %130 = arith.addf %5, %129 : vector<24x32xf32>
    %cst_43 = arith.constant dense<0.000000e+00> : vector<24xf32>
    %131 = vector.multi_reduction <add>, %130, %cst_43 [1] : vector<24x32xf32> to vector<24xf32>
    %132 = vector.shape_cast %131 : vector<24xf32> to vector<24x1xf32>
    %cst_44 = arith.constant 3.200000e+01 : f32
    %133 = vector.broadcast %cst_44 : f32 to vector<24x1xf32>
    %134 = arith.divf %132, %133 : vector<24x1xf32>
    %135 = vector.broadcast %134 : vector<24x1xf32> to vector<24x32xf32>
    %136 = arith.subf %130, %135 : vector<24x32xf32>
    %137 = arith.mulf %136, %136 : vector<24x32xf32>
    %cst_45 = arith.constant dense<0.000000e+00> : vector<24xf32>
    %138 = vector.multi_reduction <add>, %137, %cst_45 [1] : vector<24x32xf32> to vector<24xf32>
    %139 = vector.shape_cast %138 : vector<24xf32> to vector<24x1xf32>
    %cst_46 = arith.constant 3.200000e+01 : f32
    %140 = vector.broadcast %cst_46 : f32 to vector<24x1xf32>
    %141 = arith.divf %139, %140 : vector<24x1xf32>
    %142 = vector.broadcast %134 : vector<24x1xf32> to vector<24x32xf32>
    %143 = arith.subf %130, %142 : vector<24x32xf32>
    %cst_47 = arith.constant 9.99999974E-6 : f32
    %144 = vector.broadcast %cst_47 : f32 to vector<24x1xf32>
    %145 = arith.addf %141, %144 : vector<24x1xf32>
    %146 = math.rsqrt %145 : vector<24x1xf32>
    %147 = vector.broadcast %146 : vector<24x1xf32> to vector<24x32xf32>
    %148 = arith.mulf %143, %147 : vector<24x32xf32>
    %149 = vector.extract_strided_slice %15 {offsets = [6, 0], sizes = [1, 32], strides = [1, 1]} : vector<10x32xf32> to vector<1x32xf32>
    %150 = vector.broadcast %149 : vector<1x32xf32> to vector<24x32xf32>
    %151 = arith.mulf %148, %150 : vector<24x32xf32>
    %152 = vector.extract_strided_slice %15 {offsets = [7, 0], sizes = [1, 32], strides = [1, 1]} : vector<10x32xf32> to vector<1x32xf32>
    %153 = vector.broadcast %152 : vector<1x32xf32> to vector<24x32xf32>
    %154 = arith.addf %151, %153 : vector<24x32xf32>
    %155 = vector.extract_strided_slice %13 {offsets = [4, 0, 0], sizes = [1, 32, 32], strides = [1, 1, 1]} : vector<6x32x32xf32> to vector<1x32x32xf32>
    %156 = vector.shape_cast %155 : vector<1x32x32xf32> to vector<32x32xf32>
    %cst_48 = arith.constant dense<0.000000e+00> : vector<24x32xf32>
    %157 = tpu.matmul %154, %156, %cst_48 {dimension_numbers = #tpu.dot_dimension_numbers<[1], [0], [0], [1], [0, 0, 1, 1], [], []>} : vector<24x32xf32>, vector<32x32xf32>, vector<24x32xf32> -> vector<24x32xf32>
    %158 = vector.extract_strided_slice %15 {offsets = [4, 0], sizes = [1, 32], strides = [1, 1]} : vector<10x32xf32> to vector<1x32xf32>
    %159 = vector.broadcast %158 : vector<1x32xf32> to vector<24x32xf32>
    %160 = arith.addf %157, %159 : vector<24x32xf32>
    %cst_49 = arith.constant 0.000000e+00 : f32
    %161 = vector.broadcast %cst_49 : f32 to vector<24x32xf32>
    %162 = arith.maximumf %160, %161 : vector<24x32xf32>
    %163 = vector.extract_strided_slice %13 {offsets = [5, 0, 0], sizes = [1, 32, 32], strides = [1, 1, 1]} : vector<6x32x32xf32> to vector<1x32x32xf32>
    %164 = vector.shape_cast %163 : vector<1x32x32xf32> to vector<32x32xf32>
    %cst_50 = arith.constant dense<0.000000e+00> : vector<24x32xf32>
    %165 = tpu.matmul %162, %164, %cst_50 {dimension_numbers = #tpu.dot_dimension_numbers<[1], [0], [0], [1], [0, 0, 1, 1], [], []>} : vector<24x32xf32>, vector<32x32xf32>, vector<24x32xf32> -> vector<24x32xf32>
    %166 = vector.extract_strided_slice %15 {offsets = [5, 0], sizes = [1, 32], strides = [1, 1]} : vector<10x32xf32> to vector<1x32xf32>
    %167 = vector.broadcast %166 : vector<1x32xf32> to vector<24x32xf32>
    %168 = arith.addf %165, %167 : vector<24x32xf32>
    %169 = arith.addf %154, %168 : vector<24x32xf32>
    %cst_51 = arith.constant dense<0.000000e+00> : vector<24xf32>
    %170 = vector.multi_reduction <add>, %169, %cst_51 [1] : vector<24x32xf32> to vector<24xf32>
    %171 = vector.shape_cast %170 : vector<24xf32> to vector<24x1xf32>
    %cst_52 = arith.constant 3.200000e+01 : f32
    %172 = vector.broadcast %cst_52 : f32 to vector<24x1xf32>
    %173 = arith.divf %171, %172 : vector<24x1xf32>
    %174 = vector.broadcast %173 : vector<24x1xf32> to vector<24x32xf32>
    %175 = arith.subf %169, %174 : vector<24x32xf32>
    %176 = arith.mulf %175, %175 : vector<24x32xf32>
    %cst_53 = arith.constant dense<0.000000e+00> : vector<24xf32>
    %177 = vector.multi_reduction <add>, %176, %cst_53 [1] : vector<24x32xf32> to vector<24xf32>
    %178 = vector.shape_cast %177 : vector<24xf32> to vector<24x1xf32>
    %cst_54 = arith.constant 3.200000e+01 : f32
    %179 = vector.broadcast %cst_54 : f32 to vector<24x1xf32>
    %180 = arith.divf %178, %179 : vector<24x1xf32>
    %181 = vector.broadcast %173 : vector<24x1xf32> to vector<24x32xf32>
    %182 = arith.subf %169, %181 : vector<24x32xf32>
    %cst_55 = arith.constant 9.99999974E-6 : f32
    %183 = vector.broadcast %cst_55 : f32 to vector<24x1xf32>
    %184 = arith.addf %180, %183 : vector<24x1xf32>
    %185 = math.rsqrt %184 : vector<24x1xf32>
    %186 = vector.broadcast %185 : vector<24x1xf32> to vector<24x32xf32>
    %187 = arith.mulf %182, %186 : vector<24x32xf32>
    %188 = vector.extract_strided_slice %15 {offsets = [8, 0], sizes = [1, 32], strides = [1, 1]} : vector<10x32xf32> to vector<1x32xf32>
    %189 = vector.broadcast %188 : vector<1x32xf32> to vector<24x32xf32>
    %190 = arith.mulf %187, %189 : vector<24x32xf32>
    %191 = vector.extract_strided_slice %15 {offsets = [9, 0], sizes = [1, 32], strides = [1, 1]} : vector<10x32xf32> to vector<1x32xf32>
    %192 = vector.broadcast %191 : vector<1x32xf32> to vector<24x32xf32>
    %193 = arith.addf %190, %192 : vector<24x32xf32>
    %c1 = arith.constant 1 : index
    %c0_56 = arith.constant 0 : index
    %c0_57 = arith.constant 0 : index
    %c0_58 = arith.constant 0 : index
    %194 = vector.load %arg4[%c1, %c0_56, %c0_57, %c0_58] : memref<2x6x32x32xf32, #tpu.memory_space<vmem>>, vector<1x6x32x32xf32>
    %195 = vector.shape_cast %194 : vector<1x6x32x32xf32> to vector<6x32x32xf32>
    %c1_59 = arith.constant 1 : index
    %c0_60 = arith.constant 0 : index
    %c0_61 = arith.constant 0 : index
    %196 = vector.load %arg5[%c1_59, %c0_60, %c0_61] : memref<2x10x32xf32, #tpu.memory_space<vmem>>, vector<1x10x32xf32>
    %197 = vector.shape_cast %196 : vector<1x10x32xf32> to vector<10x32xf32>
    %198 = vector.extract_strided_slice %195 {offsets = [0, 0, 0], sizes = [1, 32, 32], strides = [1, 1, 1]} : vector<6x32x32xf32> to vector<1x32x32xf32>
    %199 = vector.shape_cast %198 : vector<1x32x32xf32> to vector<32x32xf32>
    %cst_62 = arith.constant dense<0.000000e+00> : vector<24x32xf32>
    %200 = tpu.matmul %193, %199, %cst_62 {dimension_numbers = #tpu.dot_dimension_numbers<[1], [0], [0], [1], [0, 0, 1, 1], [], []>} : vector<24x32xf32>, vector<32x32xf32>, vector<24x32xf32> -> vector<24x32xf32>
    %201 = vector.extract_strided_slice %197 {offsets = [0, 0], sizes = [1, 32], strides = [1, 1]} : vector<10x32xf32> to vector<1x32xf32>
    %202 = vector.broadcast %201 : vector<1x32xf32> to vector<24x32xf32>
    %203 = arith.addf %200, %202 : vector<24x32xf32>
    %204 = vector.extract_strided_slice %195 {offsets = [1, 0, 0], sizes = [1, 32, 32], strides = [1, 1, 1]} : vector<6x32x32xf32> to vector<1x32x32xf32>
    %205 = vector.shape_cast %204 : vector<1x32x32xf32> to vector<32x32xf32>
    %cst_63 = arith.constant dense<0.000000e+00> : vector<24x32xf32>
    %206 = tpu.matmul %193, %205, %cst_63 {dimension_numbers = #tpu.dot_dimension_numbers<[1], [0], [0], [1], [0, 0, 1, 1], [], []>} : vector<24x32xf32>, vector<32x32xf32>, vector<24x32xf32> -> vector<24x32xf32>
    %207 = vector.extract_strided_slice %197 {offsets = [1, 0], sizes = [1, 32], strides = [1, 1]} : vector<10x32xf32> to vector<1x32xf32>
    %208 = vector.broadcast %207 : vector<1x32xf32> to vector<24x32xf32>
    %209 = arith.addf %206, %208 : vector<24x32xf32>
    %210 = vector.extract_strided_slice %195 {offsets = [2, 0, 0], sizes = [1, 32, 32], strides = [1, 1, 1]} : vector<6x32x32xf32> to vector<1x32x32xf32>
    %211 = vector.shape_cast %210 : vector<1x32x32xf32> to vector<32x32xf32>
    %cst_64 = arith.constant dense<0.000000e+00> : vector<24x32xf32>
    %212 = tpu.matmul %193, %211, %cst_64 {dimension_numbers = #tpu.dot_dimension_numbers<[1], [0], [0], [1], [0, 0, 1, 1], [], []>} : vector<24x32xf32>, vector<32x32xf32>, vector<24x32xf32> -> vector<24x32xf32>
    %213 = vector.extract_strided_slice %197 {offsets = [2, 0], sizes = [1, 32], strides = [1, 1]} : vector<10x32xf32> to vector<1x32xf32>
    %214 = vector.broadcast %213 : vector<1x32xf32> to vector<24x32xf32>
    %215 = arith.addf %212, %214 : vector<24x32xf32>
    %cst_65 = arith.constant 0.000000e+00 : f32
    %216 = vector.broadcast %cst_65 : f32 to vector<24x32xf32>
    %217 = vector.extract_strided_slice %203 {offsets = [0, 0], sizes = [24, 8], strides = [1, 1]} : vector<24x32xf32> to vector<24x8xf32>
    %218 = vector.extract_strided_slice %209 {offsets = [0, 0], sizes = [24, 8], strides = [1, 1]} : vector<24x32xf32> to vector<24x8xf32>
    %cst_66 = arith.constant dense<0.000000e+00> : vector<24x24xf32>
    %219 = tpu.matmul %217, %218, %cst_66 {dimension_numbers = #tpu.dot_dimension_numbers<[1], [1], [0], [0], [0, 0, 1, 0], [], []>} : vector<24x8xf32>, vector<24x8xf32>, vector<24x24xf32> -> vector<24x24xf32>
    %cst_67 = arith.constant 0.353553385 : f32
    %220 = vector.broadcast %cst_67 : f32 to vector<24x24xf32>
    %221 = arith.mulf %219, %220 : vector<24x24xf32>
    %222 = vector.broadcast %11 : vector<1x24xf32> to vector<24x24xf32>
    %223 = arith.addf %221, %222 : vector<24x24xf32>
    %cst_68 = arith.constant dense<0xFF800000> : vector<24xf32>
    %224 = vector.multi_reduction <maximumf>, %223, %cst_68 [1] : vector<24x24xf32> to vector<24xf32>
    %225 = vector.shape_cast %224 : vector<24xf32> to vector<24x1xf32>
    %226 = vector.broadcast %225 : vector<24x1xf32> to vector<24x24xf32>
    %227 = arith.subf %223, %226 : vector<24x24xf32>
    %228 = math.exp %227 : vector<24x24xf32>
    %cst_69 = arith.constant dense<0.000000e+00> : vector<24xf32>
    %229 = vector.multi_reduction <add>, %228, %cst_69 [1] : vector<24x24xf32> to vector<24xf32>
    %230 = vector.shape_cast %229 : vector<24xf32> to vector<24x1xf32>
    %231 = vector.broadcast %230 : vector<24x1xf32> to vector<24x24xf32>
    %232 = arith.divf %228, %231 : vector<24x24xf32>
    %233 = vector.extract_strided_slice %215 {offsets = [0, 0], sizes = [24, 8], strides = [1, 1]} : vector<24x32xf32> to vector<24x8xf32>
    %cst_70 = arith.constant dense<0.000000e+00> : vector<24x8xf32>
    %234 = tpu.matmul %232, %233, %cst_70 {dimension_numbers = #tpu.dot_dimension_numbers<[1], [0], [0], [1], [0, 0, 1, 1], [], []>} : vector<24x24xf32>, vector<24x8xf32>, vector<24x8xf32> -> vector<24x8xf32>
    %235 = vector.extract_strided_slice %195 {offsets = [3, 0, 0], sizes = [1, 32, 32], strides = [1, 1, 1]} : vector<6x32x32xf32> to vector<1x32x32xf32>
    %236 = vector.shape_cast %235 : vector<1x32x32xf32> to vector<32x32xf32>
    %237 = vector.extract_strided_slice %236 {offsets = [0, 0], sizes = [8, 32], strides = [1, 1]} : vector<32x32xf32> to vector<8x32xf32>
    %cst_71 = arith.constant dense<0.000000e+00> : vector<24x32xf32>
    %238 = tpu.matmul %234, %237, %cst_71 {dimension_numbers = #tpu.dot_dimension_numbers<[1], [0], [0], [1], [0, 0, 1, 1], [], []>} : vector<24x8xf32>, vector<8x32xf32>, vector<24x32xf32> -> vector<24x32xf32>
    %239 = arith.addf %216, %238 : vector<24x32xf32>
    %240 = vector.extract_strided_slice %203 {offsets = [0, 8], sizes = [24, 8], strides = [1, 1]} : vector<24x32xf32> to vector<24x8xf32>
    %241 = vector.extract_strided_slice %209 {offsets = [0, 8], sizes = [24, 8], strides = [1, 1]} : vector<24x32xf32> to vector<24x8xf32>
    %cst_72 = arith.constant dense<0.000000e+00> : vector<24x24xf32>
    %242 = tpu.matmul %240, %241, %cst_72 {dimension_numbers = #tpu.dot_dimension_numbers<[1], [1], [0], [0], [0, 0, 1, 0], [], []>} : vector<24x8xf32>, vector<24x8xf32>, vector<24x24xf32> -> vector<24x24xf32>
    %cst_73 = arith.constant 0.353553385 : f32
    %243 = vector.broadcast %cst_73 : f32 to vector<24x24xf32>
    %244 = arith.mulf %242, %243 : vector<24x24xf32>
    %245 = vector.broadcast %11 : vector<1x24xf32> to vector<24x24xf32>
    %246 = arith.addf %244, %245 : vector<24x24xf32>
    %cst_74 = arith.constant dense<0xFF800000> : vector<24xf32>
    %247 = vector.multi_reduction <maximumf>, %246, %cst_74 [1] : vector<24x24xf32> to vector<24xf32>
    %248 = vector.shape_cast %247 : vector<24xf32> to vector<24x1xf32>
    %249 = vector.broadcast %248 : vector<24x1xf32> to vector<24x24xf32>
    %250 = arith.subf %246, %249 : vector<24x24xf32>
    %251 = math.exp %250 : vector<24x24xf32>
    %cst_75 = arith.constant dense<0.000000e+00> : vector<24xf32>
    %252 = vector.multi_reduction <add>, %251, %cst_75 [1] : vector<24x24xf32> to vector<24xf32>
    %253 = vector.shape_cast %252 : vector<24xf32> to vector<24x1xf32>
    %254 = vector.broadcast %253 : vector<24x1xf32> to vector<24x24xf32>
    %255 = arith.divf %251, %254 : vector<24x24xf32>
    %256 = vector.extract_strided_slice %215 {offsets = [0, 8], sizes = [24, 8], strides = [1, 1]} : vector<24x32xf32> to vector<24x8xf32>
    %cst_76 = arith.constant dense<0.000000e+00> : vector<24x8xf32>
    %257 = tpu.matmul %255, %256, %cst_76 {dimension_numbers = #tpu.dot_dimension_numbers<[1], [0], [0], [1], [0, 0, 1, 1], [], []>} : vector<24x24xf32>, vector<24x8xf32>, vector<24x8xf32> -> vector<24x8xf32>
    %258 = vector.extract_strided_slice %195 {offsets = [3, 0, 0], sizes = [1, 32, 32], strides = [1, 1, 1]} : vector<6x32x32xf32> to vector<1x32x32xf32>
    %259 = vector.shape_cast %258 : vector<1x32x32xf32> to vector<32x32xf32>
    %260 = vector.extract_strided_slice %259 {offsets = [8, 0], sizes = [8, 32], strides = [1, 1]} : vector<32x32xf32> to vector<8x32xf32>
    %cst_77 = arith.constant dense<0.000000e+00> : vector<24x32xf32>
    %261 = tpu.matmul %257, %260, %cst_77 {dimension_numbers = #tpu.dot_dimension_numbers<[1], [0], [0], [1], [0, 0, 1, 1], [], []>} : vector<24x8xf32>, vector<8x32xf32>, vector<24x32xf32> -> vector<24x32xf32>
    %262 = arith.addf %239, %261 : vector<24x32xf32>
    %263 = vector.extract_strided_slice %203 {offsets = [0, 16], sizes = [24, 8], strides = [1, 1]} : vector<24x32xf32> to vector<24x8xf32>
    %264 = vector.extract_strided_slice %209 {offsets = [0, 16], sizes = [24, 8], strides = [1, 1]} : vector<24x32xf32> to vector<24x8xf32>
    %cst_78 = arith.constant dense<0.000000e+00> : vector<24x24xf32>
    %265 = tpu.matmul %263, %264, %cst_78 {dimension_numbers = #tpu.dot_dimension_numbers<[1], [1], [0], [0], [0, 0, 1, 0], [], []>} : vector<24x8xf32>, vector<24x8xf32>, vector<24x24xf32> -> vector<24x24xf32>
    %cst_79 = arith.constant 0.353553385 : f32
    %266 = vector.broadcast %cst_79 : f32 to vector<24x24xf32>
    %267 = arith.mulf %265, %266 : vector<24x24xf32>
    %268 = vector.broadcast %11 : vector<1x24xf32> to vector<24x24xf32>
    %269 = arith.addf %267, %268 : vector<24x24xf32>
    %cst_80 = arith.constant dense<0xFF800000> : vector<24xf32>
    %270 = vector.multi_reduction <maximumf>, %269, %cst_80 [1] : vector<24x24xf32> to vector<24xf32>
    %271 = vector.shape_cast %270 : vector<24xf32> to vector<24x1xf32>
    %272 = vector.broadcast %271 : vector<24x1xf32> to vector<24x24xf32>
    %273 = arith.subf %269, %272 : vector<24x24xf32>
    %274 = math.exp %273 : vector<24x24xf32>
    %cst_81 = arith.constant dense<0.000000e+00> : vector<24xf32>
    %275 = vector.multi_reduction <add>, %274, %cst_81 [1] : vector<24x24xf32> to vector<24xf32>
    %276 = vector.shape_cast %275 : vector<24xf32> to vector<24x1xf32>
    %277 = vector.broadcast %276 : vector<24x1xf32> to vector<24x24xf32>
    %278 = arith.divf %274, %277 : vector<24x24xf32>
    %279 = vector.extract_strided_slice %215 {offsets = [0, 16], sizes = [24, 8], strides = [1, 1]} : vector<24x32xf32> to vector<24x8xf32>
    %cst_82 = arith.constant dense<0.000000e+00> : vector<24x8xf32>
    %280 = tpu.matmul %278, %279, %cst_82 {dimension_numbers = #tpu.dot_dimension_numbers<[1], [0], [0], [1], [0, 0, 1, 1], [], []>} : vector<24x24xf32>, vector<24x8xf32>, vector<24x8xf32> -> vector<24x8xf32>
    %281 = vector.extract_strided_slice %195 {offsets = [3, 0, 0], sizes = [1, 32, 32], strides = [1, 1, 1]} : vector<6x32x32xf32> to vector<1x32x32xf32>
    %282 = vector.shape_cast %281 : vector<1x32x32xf32> to vector<32x32xf32>
    %283 = vector.extract_strided_slice %282 {offsets = [16, 0], sizes = [8, 32], strides = [1, 1]} : vector<32x32xf32> to vector<8x32xf32>
    %cst_83 = arith.constant dense<0.000000e+00> : vector<24x32xf32>
    %284 = tpu.matmul %280, %283, %cst_83 {dimension_numbers = #tpu.dot_dimension_numbers<[1], [0], [0], [1], [0, 0, 1, 1], [], []>} : vector<24x8xf32>, vector<8x32xf32>, vector<24x32xf32> -> vector<24x32xf32>
    %285 = arith.addf %262, %284 : vector<24x32xf32>
    %286 = vector.extract_strided_slice %203 {offsets = [0, 24], sizes = [24, 8], strides = [1, 1]} : vector<24x32xf32> to vector<24x8xf32>
    %287 = vector.extract_strided_slice %209 {offsets = [0, 24], sizes = [24, 8], strides = [1, 1]} : vector<24x32xf32> to vector<24x8xf32>
    %cst_84 = arith.constant dense<0.000000e+00> : vector<24x24xf32>
    %288 = tpu.matmul %286, %287, %cst_84 {dimension_numbers = #tpu.dot_dimension_numbers<[1], [1], [0], [0], [0, 0, 1, 0], [], []>} : vector<24x8xf32>, vector<24x8xf32>, vector<24x24xf32> -> vector<24x24xf32>
    %cst_85 = arith.constant 0.353553385 : f32
    %289 = vector.broadcast %cst_85 : f32 to vector<24x24xf32>
    %290 = arith.mulf %288, %289 : vector<24x24xf32>
    %291 = vector.broadcast %11 : vector<1x24xf32> to vector<24x24xf32>
    %292 = arith.addf %290, %291 : vector<24x24xf32>
    %cst_86 = arith.constant dense<0xFF800000> : vector<24xf32>
    %293 = vector.multi_reduction <maximumf>, %292, %cst_86 [1] : vector<24x24xf32> to vector<24xf32>
    %294 = vector.shape_cast %293 : vector<24xf32> to vector<24x1xf32>
    %295 = vector.broadcast %294 : vector<24x1xf32> to vector<24x24xf32>
    %296 = arith.subf %292, %295 : vector<24x24xf32>
    %297 = math.exp %296 : vector<24x24xf32>
    %cst_87 = arith.constant dense<0.000000e+00> : vector<24xf32>
    %298 = vector.multi_reduction <add>, %297, %cst_87 [1] : vector<24x24xf32> to vector<24xf32>
    %299 = vector.shape_cast %298 : vector<24xf32> to vector<24x1xf32>
    %300 = vector.broadcast %299 : vector<24x1xf32> to vector<24x24xf32>
    %301 = arith.divf %297, %300 : vector<24x24xf32>
    %302 = vector.extract_strided_slice %215 {offsets = [0, 24], sizes = [24, 8], strides = [1, 1]} : vector<24x32xf32> to vector<24x8xf32>
    %cst_88 = arith.constant dense<0.000000e+00> : vector<24x8xf32>
    %303 = tpu.matmul %301, %302, %cst_88 {dimension_numbers = #tpu.dot_dimension_numbers<[1], [0], [0], [1], [0, 0, 1, 1], [], []>} : vector<24x24xf32>, vector<24x8xf32>, vector<24x8xf32> -> vector<24x8xf32>
    %304 = vector.extract_strided_slice %195 {offsets = [3, 0, 0], sizes = [1, 32, 32], strides = [1, 1, 1]} : vector<6x32x32xf32> to vector<1x32x32xf32>
    %305 = vector.shape_cast %304 : vector<1x32x32xf32> to vector<32x32xf32>
    %306 = vector.extract_strided_slice %305 {offsets = [24, 0], sizes = [8, 32], strides = [1, 1]} : vector<32x32xf32> to vector<8x32xf32>
    %cst_89 = arith.constant dense<0.000000e+00> : vector<24x32xf32>
    %307 = tpu.matmul %303, %306, %cst_89 {dimension_numbers = #tpu.dot_dimension_numbers<[1], [0], [0], [1], [0, 0, 1, 1], [], []>} : vector<24x8xf32>, vector<8x32xf32>, vector<24x32xf32> -> vector<24x32xf32>
    %308 = arith.addf %285, %307 : vector<24x32xf32>
    %309 = vector.extract_strided_slice %197 {offsets = [3, 0], sizes = [1, 32], strides = [1, 1]} : vector<10x32xf32> to vector<1x32xf32>
    %310 = vector.broadcast %309 : vector<1x32xf32> to vector<24x32xf32>
    %311 = arith.addf %308, %310 : vector<24x32xf32>
    %312 = arith.addf %193, %311 : vector<24x32xf32>
    %cst_90 = arith.constant dense<0.000000e+00> : vector<24xf32>
    %313 = vector.multi_reduction <add>, %312, %cst_90 [1] : vector<24x32xf32> to vector<24xf32>
    %314 = vector.shape_cast %313 : vector<24xf32> to vector<24x1xf32>
    %cst_91 = arith.constant 3.200000e+01 : f32
    %315 = vector.broadcast %cst_91 : f32 to vector<24x1xf32>
    %316 = arith.divf %314, %315 : vector<24x1xf32>
    %317 = vector.broadcast %316 : vector<24x1xf32> to vector<24x32xf32>
    %318 = arith.subf %312, %317 : vector<24x32xf32>
    %319 = arith.mulf %318, %318 : vector<24x32xf32>
    %cst_92 = arith.constant dense<0.000000e+00> : vector<24xf32>
    %320 = vector.multi_reduction <add>, %319, %cst_92 [1] : vector<24x32xf32> to vector<24xf32>
    %321 = vector.shape_cast %320 : vector<24xf32> to vector<24x1xf32>
    %cst_93 = arith.constant 3.200000e+01 : f32
    %322 = vector.broadcast %cst_93 : f32 to vector<24x1xf32>
    %323 = arith.divf %321, %322 : vector<24x1xf32>
    %324 = vector.broadcast %316 : vector<24x1xf32> to vector<24x32xf32>
    %325 = arith.subf %312, %324 : vector<24x32xf32>
    %cst_94 = arith.constant 9.99999974E-6 : f32
    %326 = vector.broadcast %cst_94 : f32 to vector<24x1xf32>
    %327 = arith.addf %323, %326 : vector<24x1xf32>
    %328 = math.rsqrt %327 : vector<24x1xf32>
    %329 = vector.broadcast %328 : vector<24x1xf32> to vector<24x32xf32>
    %330 = arith.mulf %325, %329 : vector<24x32xf32>
    %331 = vector.extract_strided_slice %197 {offsets = [6, 0], sizes = [1, 32], strides = [1, 1]} : vector<10x32xf32> to vector<1x32xf32>
    %332 = vector.broadcast %331 : vector<1x32xf32> to vector<24x32xf32>
    %333 = arith.mulf %330, %332 : vector<24x32xf32>
    %334 = vector.extract_strided_slice %197 {offsets = [7, 0], sizes = [1, 32], strides = [1, 1]} : vector<10x32xf32> to vector<1x32xf32>
    %335 = vector.broadcast %334 : vector<1x32xf32> to vector<24x32xf32>
    %336 = arith.addf %333, %335 : vector<24x32xf32>
    %337 = vector.extract_strided_slice %195 {offsets = [4, 0, 0], sizes = [1, 32, 32], strides = [1, 1, 1]} : vector<6x32x32xf32> to vector<1x32x32xf32>
    %338 = vector.shape_cast %337 : vector<1x32x32xf32> to vector<32x32xf32>
    %cst_95 = arith.constant dense<0.000000e+00> : vector<24x32xf32>
    %339 = tpu.matmul %336, %338, %cst_95 {dimension_numbers = #tpu.dot_dimension_numbers<[1], [0], [0], [1], [0, 0, 1, 1], [], []>} : vector<24x32xf32>, vector<32x32xf32>, vector<24x32xf32> -> vector<24x32xf32>
    %340 = vector.extract_strided_slice %197 {offsets = [4, 0], sizes = [1, 32], strides = [1, 1]} : vector<10x32xf32> to vector<1x32xf32>
    %341 = vector.broadcast %340 : vector<1x32xf32> to vector<24x32xf32>
    %342 = arith.addf %339, %341 : vector<24x32xf32>
    %cst_96 = arith.constant 0.000000e+00 : f32
    %343 = vector.broadcast %cst_96 : f32 to vector<24x32xf32>
    %344 = arith.maximumf %342, %343 : vector<24x32xf32>
    %345 = vector.extract_strided_slice %195 {offsets = [5, 0, 0], sizes = [1, 32, 32], strides = [1, 1, 1]} : vector<6x32x32xf32> to vector<1x32x32xf32>
    %346 = vector.shape_cast %345 : vector<1x32x32xf32> to vector<32x32xf32>
    %cst_97 = arith.constant dense<0.000000e+00> : vector<24x32xf32>
    %347 = tpu.matmul %344, %346, %cst_97 {dimension_numbers = #tpu.dot_dimension_numbers<[1], [0], [0], [1], [0, 0, 1, 1], [], []>} : vector<24x32xf32>, vector<32x32xf32>, vector<24x32xf32> -> vector<24x32xf32>
    %348 = vector.extract_strided_slice %197 {offsets = [5, 0], sizes = [1, 32], strides = [1, 1]} : vector<10x32xf32> to vector<1x32xf32>
    %349 = vector.broadcast %348 : vector<1x32xf32> to vector<24x32xf32>
    %350 = arith.addf %347, %349 : vector<24x32xf32>
    %351 = arith.addf %336, %350 : vector<24x32xf32>
    %cst_98 = arith.constant dense<0.000000e+00> : vector<24xf32>
    %352 = vector.multi_reduction <add>, %351, %cst_98 [1] : vector<24x32xf32> to vector<24xf32>
    %353 = vector.shape_cast %352 : vector<24xf32> to vector<24x1xf32>
    %cst_99 = arith.constant 3.200000e+01 : f32
    %354 = vector.broadcast %cst_99 : f32 to vector<24x1xf32>
    %355 = arith.divf %353, %354 : vector<24x1xf32>
    %356 = vector.broadcast %355 : vector<24x1xf32> to vector<24x32xf32>
    %357 = arith.subf %351, %356 : vector<24x32xf32>
    %358 = arith.mulf %357, %357 : vector<24x32xf32>
    %cst_100 = arith.constant dense<0.000000e+00> : vector<24xf32>
    %359 = vector.multi_reduction <add>, %358, %cst_100 [1] : vector<24x32xf32> to vector<24xf32>
    %360 = vector.shape_cast %359 : vector<24xf32> to vector<24x1xf32>
    %cst_101 = arith.constant 3.200000e+01 : f32
    %361 = vector.broadcast %cst_101 : f32 to vector<24x1xf32>
    %362 = arith.divf %360, %361 : vector<24x1xf32>
    %363 = vector.broadcast %355 : vector<24x1xf32> to vector<24x32xf32>
    %364 = arith.subf %351, %363 : vector<24x32xf32>
    %cst_102 = arith.constant 9.99999974E-6 : f32
    %365 = vector.broadcast %cst_102 : f32 to vector<24x1xf32>
    %366 = arith.addf %362, %365 : vector<24x1xf32>
    %367 = math.rsqrt %366 : vector<24x1xf32>
    %368 = vector.broadcast %367 : vector<24x1xf32> to vector<24x32xf32>
    %369 = arith.mulf %364, %368 : vector<24x32xf32>
    %370 = vector.extract_strided_slice %197 {offsets = [8, 0], sizes = [1, 32], strides = [1, 1]} : vector<10x32xf32> to vector<1x32xf32>
    %371 = vector.broadcast %370 : vector<1x32xf32> to vector<24x32xf32>
    %372 = arith.mulf %369, %371 : vector<24x32xf32>
    %373 = vector.extract_strided_slice %197 {offsets = [9, 0], sizes = [1, 32], strides = [1, 1]} : vector<10x32xf32> to vector<1x32xf32>
    %374 = vector.broadcast %373 : vector<1x32xf32> to vector<24x32xf32>
    %375 = arith.addf %372, %374 : vector<24x32xf32>
    %c0_103 = arith.constant 0 : index
    %c0_104 = arith.constant 0 : index
    %c0_105 = arith.constant 0 : index
    %376 = vector.load %arg9[%c0_103, %c0_104, %c0_105] : memref<1x24x32xf32, #tpu.memory_space<vmem>>, vector<1x24x32xf32>
    %377 = vector.shape_cast %376 : vector<1x24x32xf32> to vector<24x32xf32>
    %378 = vector.shape_cast %375 : vector<24x32xf32> to vector<1x24x32xf32>
    tpu.vector_store %arg9[%c0_103, %c0_104, %c0_105], %378 {strides = array<i32>} : memref<1x24x32xf32, #tpu.memory_space<vmem>>, vector<1x24x32xf32>,
    %379 = vector.extract_strided_slice %375 {offsets = [0, 0], sizes = [1, 32], strides = [1, 1]} : vector<24x32xf32> to vector<1x32xf32>
    %c0_106 = arith.constant 0 : index
    %c0_107 = arith.constant 0 : index
    %380 = vector.load %arg6[%c0_106, %c0_107] : memref<32x64xf32, #tpu.memory_space<vmem>>, vector<32x64xf32>
    %cst_108 = arith.constant dense<0.000000e+00> : vector<1x64xf32>
    %381 = tpu.matmul %379, %380, %cst_108 {dimension_numbers = #tpu.dot_dimension_numbers<[1], [0], [0], [1], [0, 0, 1, 1], [], []>} : vector<1x32xf32>, vector<32x64xf32>, vector<1x64xf32> -> vector<1x64xf32>
    %c0_109 = arith.constant 0 : index
    %c0_110 = arith.constant 0 : index
    %382 = vector.load %arg7[%c0_109, %c0_110] : memref<1x64xf32, #tpu.memory_space<vmem>>, vector<1x64xf32>
    %383 = arith.addf %381, %382 : vector<1x64xf32>
    %c0_111 = arith.constant 0 : index
    %c0_112 = arith.constant 0 : index
    %c0_113 = arith.constant 0 : index
    %384 = vector.load %arg8[%c0_111, %c0_112, %c0_113] : memref<1x1x64xf32, #tpu.memory_space<vmem>>, vector<1x1x64xf32>
    %385 = vector.shape_cast %384 : vector<1x1x64xf32> to vector<1x64xf32>
    %386 = vector.shape_cast %383 : vector<1x64xf32> to vector<1x1x64xf32>
    tpu.vector_store %arg8[%c0_111, %c0_112, %c0_113], %386 {strides = array<i32>} : memref<1x1x64xf32, #tpu.memory_space<vmem>>, vector<1x1x64xf32>,
    return
  }
  func.func @transform_0(%arg0: i32) -> (i32, i32, i32) {
    %c0_i32 = arith.constant 0 : i32
    %c0_i32_0 = arith.constant 0 : i32
    %c0_i32_1 = arith.constant 0 : i32
    return %arg0, %c0_i32, %c0_i32_0 : i32, i32, i32
  }
  func.func @transform_1(%arg0: i32) -> (i32, i32) {
    %c0_i32 = arith.constant 0 : i32
    %c0_i32_0 = arith.constant 0 : i32
    %c0_i32_1 = arith.constant 0 : i32
    return %c0_i32, %c0_i32_0 : i32, i32
  }
  func.func @transform_2(%arg0: i32) -> (i32, i32) {
    %c0_i32 = arith.constant 0 : i32
    %c0_i32_0 = arith.constant 0 : i32
    %c0_i32_1 = arith.constant 0 : i32
    return %c0_i32, %c0_i32_0 : i32, i32
  }
  func.func @transform_3(%arg0: i32) -> (i32, i32, i32, i32) {
    %c0_i32 = arith.constant 0 : i32
    %c0_i32_0 = arith.constant 0 : i32
    %c0_i32_1 = arith.constant 0 : i32
    %c0_i32_2 = arith.constant 0 : i32
    %c0_i32_3 = arith.constant 0 : i32
    return %c0_i32, %c0_i32_0, %c0_i32_1, %c0_i32_2 : i32, i32, i32, i32
  }
  func.func @transform_4(%arg0: i32) -> (i32, i32, i32) {
    %c0_i32 = arith.constant 0 : i32
    %c0_i32_0 = arith.constant 0 : i32
    %c0_i32_1 = arith.constant 0 : i32
    %c0_i32_2 = arith.constant 0 : i32
    return %c0_i32, %c0_i32_0, %c0_i32_1 : i32, i32, i32
  }
  func.func @transform_5(%arg0: i32) -> (i32, i32) {
    %c0_i32 = arith.constant 0 : i32
    %c0_i32_0 = arith.constant 0 : i32
    %c0_i32_1 = arith.constant 0 : i32
    return %c0_i32, %c0_i32_0 : i32, i32
  }
  func.func @transform_6(%arg0: i32) -> (i32, i32) {
    %c0_i32 = arith.constant 0 : i32
    %c0_i32_0 = arith.constant 0 : i32
    %c0_i32_1 = arith.constant 0 : i32
    return %c0_i32, %c0_i32_0 : i32, i32
  }
  func.func @transform_7(%arg0: i32) -> (i32, i32, i32) {
    %c0_i32 = arith.constant 0 : i32
    %c0_i32_0 = arith.constant 0 : i32
    %c0_i32_1 = arith.constant 0 : i32
    return %arg0, %c0_i32, %c0_i32_0 : i32, i32, i32
  }
  func.func @transform_8(%arg0: i32) -> (i32, i32, i32) {
    %c0_i32 = arith.constant 0 : i32
    %c0_i32_0 = arith.constant 0 : i32
    %c0_i32_1 = arith.constant 0 : i32
    return %arg0, %c0_i32, %c0_i32_0 : i32, i32, i32
  }
}

</mosaic_0001>

<llo_original>
// kernel: transformer_forward.1
$region0: #{transformer_forward.1}
  #allocation0 [shape = 'u32[]', space=smem, size = 0x4, offset = 0x4, fixed_abs, tag = 'smem constant byte address 0x4 - core index']
  #allocation1 [shape = 'u32[144,128]{1,0:T(1,128)}', space=vmem, size = 0x12000, scoped, tag = 'internal scratch']
  %s0 = inlined_call_operand.vmem [shape: f32[2,24,8], index: 0, kind: input, shape index: {}]
  %s1 = inlined_call_operand.vmem [shape: f32[8,32], index: 1, kind: input, shape index: {}]
  %s2 = inlined_call_operand.vmem [shape: f32[24,32], index: 2, kind: input, shape index: {}]
  %s3 = inlined_call_operand.vmem [shape: f32[2,6,32,32], index: 3, kind: input, shape index: {}]
  %s4 = inlined_call_operand.vmem [shape: f32[2,10,32], index: 4, kind: input, shape index: {}]
  %s5 = inlined_call_operand.vmem [shape: f32[32,64], index: 5, kind: input, shape index: {}]
  %s6 = inlined_call_operand.vmem [shape: f32[1,64], index: 6, kind: input, shape index: {}]
  %s7 = inlined_call_operand.hbm [shape: f32[2,1,64], index: 7, kind: output, shape index: {0}]
  %s8 = inlined_call_operand.vmem [shape: f32[2,24,32], index: 8, kind: output, shape index: {1}]
  %9 = xla_tuple %s7, %s8
  %s10 = sld [smem:[#allocation0]]
  $region69: #{transformer_forward.1} parent=0
    _
  %s12 = ssub.s32 1, %s10
  %s13 = scalar_select 0, %s12, %s10
  $region1: #{transformer_forward.1} parent=0
    #allocation2 [shape = 'u8[1024]{0}', space=vmem, size = 0x400, scoped, tag = 'output window, operand 0']
    #allocation3 [shape = 's32[2]{0}', space=sflag, size = 0x8, scoped, tag = 'scoped memory for transformer_forward.1']
    %14 = vsyncpa [#allocation3], 0
    %s15 = scalar_lea.sflag [#allocation3], 1
    %16 = vsyncpa %s15, 0
    loop: start=0, step=1, limit=4
    $region2: #{transformer_forward.1} parent=1 // loop_pre_header
      _
    $region3: #{transformer_forward.1} parent=1 // loop_header
      %s18 = sphi 0, %s22
      %p19 = scmp.ge.s32.totalorder %s18, 4
      %s28 = sphi 0, %s30
      %s31 = sphi 0, %s28
      %s32 = sphi 0, %s31
      %s48 = sphi 0, %s32
      %s52 = sphi 0, %s52
      %s54 = sphi 0, %s52
      %s55 = sphi 0, %s54
      %s69 = sphi 0, %s55
      %s73 = sphi 0, %s73
      %s75 = sphi 0, %s73
      %s76 = sphi 0, %s75
      %s90 = sphi 0, %s76
      %s94 = sphi 0, %s94
      %s96 = sphi 0, %s94
      %s97 = sphi 0, %s96
      %s111 = sphi 0, %s97
      %s115 = sphi 0, %s115
      %s117 = sphi 0, %s115
      %s118 = sphi 0, %s117
      %s132 = sphi 0, %s118
      %s136 = sphi 0, %s136
      %s138 = sphi 0, %s136
      %s139 = sphi 0, %s138
      %s153 = sphi 0, %s139
      %s157 = sphi 0, %s157
      %s159 = sphi 0, %s157
      %s160 = sphi 0, %s159
      %s174 = sphi 0, %s160
      %s180 = sphi 0, %s182
      %s183 = sphi 0, %s180
      %s184 = sphi 0, %s183
      %s200 = sphi 0, %s184
      %s206 = sphi 0, %s208
      %s209 = sphi 0, %s206
      %s210 = sphi 0, %s209
      %s226 = sphi 0, %s210
    $region4: #{transformer_forward.1} parent=1 // loop_header_branch
      %21 = sbr.rel (%p19) target = $region8
    $region5: #{transformer_forward.1} parent=1 // loop_body
      %s23 = ssub.s32 %s18, 1
      %s24 = ssub.s32 %s18, 2
      %s25 = sadd.s32 %s18, 1
      %s26 = ssub.s32 %s18, %s25
      %p27 = scmp.eq.s32.totalorder %s26, 0
      %s29 = sadd.s32 %s28, 1
      %s30 = scalar_select %p27, %s28, %s29
      %p33 = pneg %p27
      %p34 = scmp.eq.s32.totalorder %s18, 1
      %p35 = por %p33, %p34
      %p36 = scmp.ne.s32.totalorder %s28, %s31
      %p37 = scmp.eq.s32.totalorder %s18, 0
      %p38 = por %p36, %p37
      %p39 = scmp.ne.s32.totalorder %s28, %s31
      %p40 = scmp.eq.s32.totalorder %s23, 1
      %p41 = por %p39, %p40
      %p42 = scmp.ne.s32.totalorder %s31, %s32
      %p43 = scmp.eq.s32.totalorder %s23, 0
      %p44 = por %p42, %p43
      %p45 = scmp.ne.s32.totalorder %s31, %s32
      %p46 = scmp.eq.s32.totalorder %s24, 1
      %p47 = por %p45, %p46
      %p49 = scmp.ne.s32.totalorder %s32, %s48
      %p50 = scmp.eq.s32.totalorder %s24, 0
      %p51 = por %p49, %p50
      %s53 = sadd.s32 %s52, 1
      %p56 = scmp.eq.s32.totalorder %s18, 1
      %p57 = scmp.ne.s32.totalorder %s52, %s54
      %p58 = scmp.eq.s32.totalorder %s18, 0
      %p59 = por %p57, %p58
      %p60 = scmp.ne.s32.totalorder %s52, %s54
      %p61 = scmp.eq.s32.totalorder %s23, 1
      %p62 = por %p60, %p61
      %p63 = scmp.ne.s32.totalorder %s54, %s55
      %p64 = scmp.eq.s32.totalorder %s23, 0
      %p65 = por %p63, %p64
      %p66 = scmp.ne.s32.totalorder %s54, %s55
      %p67 = scmp.eq.s32.totalorder %s24, 1
      %p68 = por %p66, %p67
      %p70 = scmp.ne.s32.totalorder %s55, %s69
      %p71 = scmp.eq.s32.totalorder %s24, 0
      %p72 = por %p70, %p71
      %s74 = sadd.s32 %s73, 1
      %p77 = scmp.eq.s32.totalorder %s18, 1
      %p78 = scmp.ne.s32.totalorder %s73, %s75
      %p79 = scmp.eq.s32.totalorder %s18, 0
      %p80 = por %p78, %p79
      %p81 = scmp.ne.s32.totalorder %s73, %s75
      %p82 = scmp.eq.s32.totalorder %s23, 1
      %p83 = por %p81, %p82
      %p84 = scmp.ne.s32.totalorder %s75, %s76
      %p85 = scmp.eq.s32.totalorder %s23, 0
      %p86 = por %p84, %p85
      %p87 = scmp.ne.s32.totalorder %s75, %s76
      %p88 = scmp.eq.s32.totalorder %s24, 1
      %p89 = por %p87, %p88
      %p91 = scmp.ne.s32.totalorder %s76, %s90
      %p92 = scmp.eq.s32.totalorder %s24, 0
      %p93 = por %p91, %p92
      %s95 = sadd.s32 %s94, 1
      %p98 = scmp.eq.s32.totalorder %s18, 1
      %p99 = scmp.ne.s32.totalorder %s94, %s96
      %p100 = scmp.eq.s32.totalorder %s18, 0
      %p101 = por %p99, %p100
      %p102 = scmp.ne.s32.totalorder %s94, %s96
      %p103 = scmp.eq.s32.totalorder %s23, 1
      %p104 = por %p102, %p103
      %p105 = scmp.ne.s32.totalorder %s96, %s97
      %p106 = scmp.eq.s32.totalorder %s23, 0
      %p107 = por %p105, %p106
      %p108 = scmp.ne.s32.totalorder %s96, %s97
      %p109 = scmp.eq.s32.totalorder %s24, 1
      %p110 = por %p108, %p109
      %p112 = scmp.ne.s32.totalorder %s97, %s111
      %p113 = scmp.eq.s32.totalorder %s24, 0
      %p114 = por %p112, %p113
      %s116 = sadd.s32 %s115, 1
      %p119 = scmp.eq.s32.totalorder %s18, 1
      %p120 = scmp.ne.s32.totalorder %s115, %s117
      %p121 = scmp.eq.s32.totalorder %s18, 0
      %p122 = por %p120, %p121
      %p123 = scmp.ne.s32.totalorder %s115, %s117
      %p124 = scmp.eq.s32.totalorder %s23, 1
      %p125 = por %p123, %p124
      %p126 = scmp.ne.s32.totalorder %s117, %s118
      %p127 = scmp.eq.s32.totalorder %s23, 0
      %p128 = por %p126, %p127
      %p129 = scmp.ne.s32.totalorder %s117, %s118
      %p130 = scmp.eq.s32.totalorder %s24, 1
      %p131 = por %p129, %p130
      %p133 = scmp.ne.s32.totalorder %s118, %s132
      %p134 = scmp.eq.s32.totalorder %s24, 0
      %p135 = por %p133, %p134
      %s137 = sadd.s32 %s136, 1
      %p140 = scmp.eq.s32.totalorder %s18, 1
      %p141 = scmp.ne.s32.totalorder %s136, %s138
      %p142 = scmp.eq.s32.totalorder %s18, 0
      %p143 = por %p141, %p142
      %p144 = scmp.ne.s32.totalorder %s136, %s138
      %p145 = scmp.eq.s32.totalorder %s23, 1
      %p146 = por %p144, %p145
      %p147 = scmp.ne.s32.totalorder %s138, %s139
      %p148 = scmp.eq.s32.totalorder %s23, 0
      %p149 = por %p147, %p148
      %p150 = scmp.ne.s32.totalorder %s138, %s139
      %p151 = scmp.eq.s32.totalorder %s24, 1
      %p152 = por %p150, %p151
      %p154 = scmp.ne.s32.totalorder %s139, %s153
      %p155 = scmp.eq.s32.totalorder %s24, 0
      %p156 = por %p154, %p155
      %s158 = sadd.s32 %s157, 1
      %p161 = scmp.eq.s32.totalorder %s18, 1
      %p162 = scmp.ne.s32.totalorder %s157, %s159
      %p163 = scmp.eq.s32.totalorder %s18, 0
      %p164 = por %p162, %p163
      %p165 = scmp.ne.s32.totalorder %s157, %s159
      %p166 = scmp.eq.s32.totalorder %s23, 1
      %p167 = por %p165, %p166
      %p168 = scmp.ne.s32.totalorder %s159, %s160
      %p169 = scmp.eq.s32.totalorder %s23, 0
      %p170 = por %p168, %p169
      %p171 = scmp.ne.s32.totalorder %s159, %s160
      %p172 = scmp.eq.s32.totalorder %s24, 1
      %p173 = por %p171, %p172
      %p175 = scmp.ne.s32.totalorder %s160, %s174
      %p176 = scmp.eq.s32.totalorder %s24, 0
      %p177 = por %p175, %p176
      %s178 = ssub.s32 %s18, %s25
      %p179 = scmp.eq.s32.totalorder %s178, 0
      %s181 = sadd.s32 %s180, 1
      %s182 = scalar_select %p179, %s180, %s181
      %p185 = pneg %p179
      %p186 = scmp.eq.s32.totalorder %s18, 1
      %p187 = por %p185, %p186
      %p188 = scmp.ne.s32.totalorder %s180, %s183
      %p189 = scmp.eq.s32.totalorder %s18, 0
      %p190 = por %p188, %p189
      %p191 = scmp.ne.s32.totalorder %s180, %s183
      %p192 = scmp.eq.s32.totalorder %s23, 1
      %p193 = por %p191, %p192
      %p194 = scmp.ne.s32.totalorder %s183, %s184
      %p195 = scmp.eq.s32.totalorder %s23, 0
      %p196 = por %p194, %p195
      %p197 = scmp.ne.s32.totalorder %s183, %s184
      %p198 = scmp.eq.s32.totalorder %s24, 1
      %p199 = por %p197, %p198
      %p201 = scmp.ne.s32.totalorder %s184, %s200
      %p202 = scmp.eq.s32.totalorder %s24, 0
      %p203 = por %p201, %p202
      %s204 = ssub.s32 %s18, %s25
      %p205 = scmp.eq.s32.totalorder %s204, 0
      %s207 = sadd.s32 %s206, 1
      %s208 = scalar_select %p205, %s206, %s207
      %p211 = pneg %p205
      %p212 = scmp.eq.s32.totalorder %s18, 1
      %p213 = por %p211, %p212
      %p214 = scmp.ne.s32.totalorder %s206, %s209
      %p215 = scmp.eq.s32.totalorder %s18, 0
      %p216 = por %p214, %p215
      %p217 = scmp.ne.s32.totalorder %s206, %s209
      %p218 = scmp.eq.s32.totalorder %s23, 1
      %p219 = por %p217, %p218
      %p220 = scmp.ne.s32.totalorder %s209, %s210
      %p221 = scmp.eq.s32.totalorder %s23, 0
      %p222 = por %p220, %p221
      %p223 = scmp.ne.s32.totalorder %s209, %s210
      %p224 = scmp.eq.s32.totalorder %s24, 1
      %p225 = por %p223, %p224
      %p227 = scmp.ne.s32.totalorder %s210, %s226
      %p228 = scmp.eq.s32.totalorder %s24, 0
      %p229 = por %p227, %p228
      %p230 = scmp.le.s32.totalorder 1, %s18
      %p231 = scmp.lt.s32.totalorder %s18, 3
      %p232 = pnand %p230, %p231
      %p233 = pneg %p232
      // Predicated region
      $region9: #{transformer_forward.1} parent=5 // pred_check
        _
      $region10: #{transformer_forward.1} parent=5 // pred_check_branch
        %235 = sbr.rel (%p232) target = $region12
      $region11: #{transformer_forward.1} parent=5 // pred_region
        %s236 = ssub.s32 %s18, 1
        // Predicated region
        $region13: #{transformer_forward.1} parent=11 // pred_check
          %p237 = pneg %p65
        $region14: #{transformer_forward.1} parent=11 // pred_check_branch
          %239 = sbr.rel (%p237) target = $region16
        $region15: #{transformer_forward.1} parent=11 // pred_region
          _
        $region16: #{transformer_forward.1} parent=11 // pred_fallthru
          _
        // Predicated region
        $region17: #{transformer_forward.1} parent=11 // pred_check
          %p240 = pneg %p86
        $region18: #{transformer_forward.1} parent=11 // pred_check_branch
          %242 = sbr.rel (%p240) target = $region20
        $region19: #{transformer_forward.1} parent=11 // pred_region
          _
        $region20: #{transformer_forward.1} parent=11 // pred_fallthru
          _
        // Predicated region
        $region21: #{transformer_forward.1} parent=11 // pred_check
          %p243 = pneg %p107
        $region22: #{transformer_forward.1} parent=11 // pred_check_branch
          %245 = sbr.rel (%p243) target = $region24
        $region23: #{transformer_forward.1} parent=11 // pred_region
          _
        $region24: #{transformer_forward.1} parent=11 // pred_fallthru
          _
        // Predicated region
        $region25: #{transformer_forward.1} parent=11 // pred_check
          %p246 = pneg %p128
        $region26: #{transformer_forward.1} parent=11 // pred_check_branch
          %248 = sbr.rel (%p246) target = $region28
        $region27: #{transformer_forward.1} parent=11 // pred_region
          _
        $region28: #{transformer_forward.1} parent=11 // pred_fallthru
          _
        // Predicated region
        $region29: #{transformer_forward.1} parent=11 // pred_check
          %p249 = pneg %p149
        $region30: #{transformer_forward.1} parent=11 // pred_check_branch
          %251 = sbr.rel (%p249) target = $region32
        $region31: #{transformer_forward.1} parent=11 // pred_region
          _
        $region32: #{transformer_forward.1} parent=11 // pred_fallthru
          _
        // Predicated region
        $region33: #{transformer_forward.1} parent=11 // pred_check
          %p252 = pneg %p170
        $region34: #{transformer_forward.1} parent=11 // pred_check_branch
          %254 = sbr.rel (%p252) target = $region36
        $region35: #{transformer_forward.1} parent=11 // pred_region
          _
        $region36: #{transformer_forward.1} parent=11 // pred_fallthru
          _
      $region12: #{transformer_forward.1} parent=5 // pred_fallthru
        _
      %p255 = scmp.lt.s32.totalorder %s18, 2
      // Predicated region
      $region37: #{transformer_forward.1} parent=5 // pred_check
        %p256 = pneg %p255
      $region38: #{transformer_forward.1} parent=5 // pred_check_branch
        %258 = sbr.rel (%p256) target = $region40
      $region39: #{transformer_forward.1} parent=5 // pred_region
        // Predicated region
        $region41: #{transformer_forward.1} parent=39 // pred_check
          %p259 = pneg %p38
        $region42: #{transformer_forward.1} parent=39 // pred_check_branch
          %261 = sbr.rel (%p259) target = $region44
        $region43: #{transformer_forward.1} parent=39 // pred_region
          %p262 = scmp.lt.s32.totalorder %s18, 1
          %s263 = scalar_select %p262, %s18, 1
          %s264 = smul.addr %s263, 3
          %s265 = smul.addr %s264, 8
          %s266 = scalar_lea.vmem %s0, %s265
        $region44: #{transformer_forward.1} parent=39 // pred_fallthru
          _
      $region40: #{transformer_forward.1} parent=5 // pred_fallthru
        _
      %p267 = scmp.le.s32.totalorder 1, %s18
      %p268 = scmp.lt.s32.totalorder %s18, 3
      %p269 = pnand %p267, %p268
      %p270 = pneg %p269
      // Predicated region
      $region45: #{transformer_forward.1} parent=5 // pred_check
        _
      $region46: #{transformer_forward.1} parent=5 // pred_check_branch
        %272 = sbr.rel (%p269) target = $region48
      $region47: #{transformer_forward.1} parent=5 // pred_region
        %s273 = ssub.s32 %s18, 1
        %p274 = scmp.lt.s32.totalorder %s23, 1
        %s275 = scalar_select %p274, %s23, 1
        %s276 = smul.addr %s275, 3
        %s277 = smul.addr %s276, 8
        %s278 = scalar_lea.vmem %s0, %s277
        %p279 = pneg %p44
        %p280 = pneg %p41
        %p281 = pneg %p65
        %p282 = pneg %p62
        %p283 = pneg %p86
        %p284 = pneg %p83
        %p285 = pneg %p107
        %p286 = pneg %p104
        %p287 = pneg %p128
        %p288 = pneg %p125
        %p289 = pneg %p149
        %p290 = pneg %p146
        %p291 = pneg %p170
        %p292 = pneg %p167
        %p293 = pneg %p196
        %p294 = pneg %p193
        %s295 = sand.u32 %s183, 1
        %s296 = scalar_lea.sflag [#allocation3], %s295
        %s297 = sand.u32 %s183, 1
        %s298 = scalar_lea.vmem [#allocation2], %s297
        %p299 = pneg %p222
        %p300 = pneg %p219
        %p301 = scmp.lt.s32.totalorder %s23, 1
        %s302 = scalar_select %p301, %s23, 1
        %s303 = smul.addr %s302, 3
        %s304 = smul.addr %s303, 8
        %s305 = scalar_lea.vmem %s8, %s304
        %p306 = scmp.lt.s32.totalorder %s23, 1
        %s307 = scalar_select %p306, %s23, 1
        %s308 = smul.addr %s307, 3
        %s309 = smul.addr %s308, 8
        %s310 = scalar_lea.vmem %s0, %s309
        %p311 = scmp.lt.s32.totalorder %s23, 1
        %s312 = scalar_select %p311, %s23, 1
        %s313 = smul.addr %s312, 3
        %s314 = smul.addr %s313, 8
        %s315 = scalar_lea.vmem %s8, %s314
        %v316 = vld [vmem:[%s310] sm:$0xff]
        %v317 = vld [vmem:[%s310 + $0x8] sm:$0xff]
        %v318 = vld [vmem:[%s310 + $0x10] sm:$0xff]
        %v319 = vld [vmem:[%s1] sm:$0xff]
        %v320 = vld [vmem:[%s2] sm:$0xff]
        %v321 = vld [vmem:[%s2 + $0x8] sm:$0xff]
        %v322 = vld [vmem:[%s2 + $0x10] sm:$0xff]
        %vm323 = vcmask 64512
        %v325 = vsel %vm323, %v316, 0
        %v328 = vsel %vm323, %v317, 0
        %v331 = vsel %vm323, %v318, 0
        %333 = vmatprep.subr.mxu0 0.0
        %334 = vmatpush1.msra.mxu0 %v319
        %335 = vmatprep.subr.mxu0 0.0
        %336 = vmatpush1.msra.mxu0 0.0
        %337 = vmatprep.subr.mxu0 0.0
        %338 = vmatpush1.msra.mxu0 0.0
        %339 = vmatprep.subr.mxu0 0.0
        %340 = vmatpush1.msra.mxu0 0.0
        %341 = vmatprep.subr.mxu0 0.0
        %342 = vmatpush1.msra.mxu0 0.0
        %343 = vmatprep.subr.mxu0 0.0
        %344 = vmatpush1.msra.mxu0 0.0
        %345 = vmatprep.subr.mxu0 0.0
        %346 = vmatpush1.msra.mxu0 0.0
        %347 = vmatprep.subr.mxu0 0.0
        %348 = vmatpush1.msra.mxu0 0.0
        %349 = vmatprep.subr.mxu0 0.0
        %350 = vmatpush1.msra.mxu0 0.0
        %351 = vmatprep.subr.mxu0 0.0
        %352 = vmatpush1.msra.mxu0 0.0
        %353 = vmatprep.subr.mxu0 0.0
        %354 = vmatpush1.msra.mxu0 0.0
        %355 = vmatprep.subr.mxu0 0.0
        %356 = vmatpush1.msra.mxu0 0.0
        %357 = vmatprep.subr.mxu0 0.0
        %358 = vmatpush1.msra.mxu0 0.0
        %359 = vmatprep.subr.mxu0 0.0
        %360 = vmatpush1.msra.mxu0 0.0
        %361 = vmatprep.subr.mxu0 0.0
        %362 = vmatpush1.msra.mxu0 0.0
        %363 = vmatprep.subr.mxu0 0.0
        %364 = vmatpush1.msra.mxu0 0.0
        %365 = vmatprep.subr.mxu0 0.0
        %366 = vmatpush1.msra.mxu0 0.0
        %367 = vmatprep.subr.mxu0 0.0
        %368 = vmatpush1.msra.mxu0 0.0
        %369 = vmatprep.subr.mxu0 0.0
        %370 = vmatpush1.msra.mxu0 0.0
        %371 = vmatprep.subr.mxu0 0.0
        %372 = vmatpush1.msra.mxu0 0.0
        %373 = vmatprep.subr.mxu0 0.0
        %374 = vmatpush1.msra.mxu0 0.0
        %375 = vmatprep.subr.mxu0 0.0
        %376 = vmatpush1.msra.mxu0 0.0
        %377 = vmatprep.subr.mxu0 0.0
        %378 = vmatpush1.msra.mxu0 0.0
        %379 = vmatprep.subr.mxu0 0.0
        %380 = vmatpush1.msra.mxu0 0.0
        %381 = vmatprep.subr.mxu0 0.0
        %382 = vmatpush1.msra.mxu0 0.0
        %383 = vmatprep.subr.mxu0 0.0
        %384 = vmatpush1.msra.mxu0 0.0
        %385 = vmatprep.subr.mxu0 0.0
        %386 = vmatpush1.msra.mxu0 0.0
        %387 = vmatprep.subr.mxu0 0.0
        %388 = vmatpush1.msra.mxu0 0.0
        %389 = vmatprep.subr.mxu0 0.0
        %390 = vmatpush1.msra.mxu0 0.0
        %391 = vmatprep.subr.mxu0 0.0
        %392 = vmatpush1.msra.mxu0 0.0
        %393 = vmatprep.subr.mxu0 0.0
        %394 = vmatpush1.msra.mxu0 0.0
        %395 = vmatprep.subr.mxu0 0.0
        %396 = vmatpush1.msra.mxu0 0.0
        %397 = vmatprep.mubr.f32.mxu0 0.0
        %398 = vmatmul.mubr.f32.gmra.mrb[0].mxu0 %v325
        %v399 = vpop.f32.mrb[0].mxu0
        %v400 = vadd.f32 %v320, %v399
        %v401 = vpop.f32.mrb[0].mxu0
        %402 = vmatprep.mubr.f32.mxu0 0.0
        %403 = vmatmul.mubr.f32.gmra.mrb[0].mxu0 %v328
        %v404 = vpop.f32.mrb[0].mxu0
        %v405 = vadd.f32 %v321, %v404
        %v406 = vpop.f32.mrb[0].mxu0
        %407 = vmatprep.mubr.f32.mxu0 0.0
        %408 = vmatmul.mubr.f32.gmra.mrb[0].mxu0 %v331
        %v409 = vpop.f32.mrb[0].mxu0
        %v410 = vadd.f32 %v322, %v409
        %v411 = vpop.f32.mrb[0].mxu0
        %412 = vdwg.mxu0
        %v413 = vlaneseq
        %v414 = vand.u32 %v413, 127
        %vm415 = vcmp.lt.s32.totalorder %v414, 17
        %v416 = vsel %vm415, 0.0, -1e+30
        %v417 = vld [vmem:[%s3] sm:$0xff]
        %v418 = vld [vmem:[%s3 + $0x8] sm:$0xff]
        %v419 = vld [vmem:[%s3 + $0x10] sm:$0xff]
        %v420 = vld [vmem:[%s3 + $0x18] sm:$0xff]
        %v421 = vld [vmem:[%s3 + $0x20] sm:$0xff]
        %v422 = vld [vmem:[%s3 + $0x28] sm:$0xff]
        %v423 = vld [vmem:[%s3 + $0x30] sm:$0xff]
        %v424 = vld [vmem:[%s3 + $0x38] sm:$0xff]
        %v425 = vld [vmem:[%s3 + $0x40] sm:$0xff]
        %v426 = vld [vmem:[%s3 + $0x48] sm:$0xff]
        %v427 = vld [vmem:[%s3 + $0x50] sm:$0xff]
        %v428 = vld [vmem:[%s3 + $0x58] sm:$0xff]
        %v429 = vld [vmem:[%s3 + $0x60] sm:$0xff]
        %v430 = vld [vmem:[%s3 + $0x68] sm:$0xff]
        %v431 = vld [vmem:[%s3 + $0x70] sm:$0xff]
        %v432 = vld [vmem:[%s3 + $0x78] sm:$0xff]
        %v433 = vld [vmem:[%s3 + $0x80] sm:$0xff]
        %v434 = vld [vmem:[%s3 + $0x88] sm:$0xff]
        %v435 = vld [vmem:[%s3 + $0x90] sm:$0xff]
        %v436 = vld [vmem:[%s3 + $0x98] sm:$0xff]
        %v437 = vld [vmem:[%s3 + $0xa0] sm:$0xff]
        %v438 = vld [vmem:[%s3 + $0xa8] sm:$0xff]
        %v439 = vld [vmem:[%s3 + $0xb0] sm:$0xff]
        %v440 = vld [vmem:[%s3 + $0xb8] sm:$0xff]
        %v441 = vld [vmem:[%s4] sm:$0xff]
        %v442 = vld [vmem:[%s4 + $0x8] sm:$0x3]
        %v443 = vlaneseq
        %v444 = vshrl.u32 %v443, 7
        %v445 = vsub.s32 0, %v444
        %v446 = vrot.slane %v441, %v445
        %vm447 = vcmask 261120
        %v449 = vsel %vm447, %v400, 0
        %v452 = vsel %vm447, %v405, 0
        %v455 = vsel %vm447, %v410, 0
        %457 = vmatprep.subr.mxu0 0.0
        %458 = vmatpush1.msra.mxu0 %v417
        %459 = vmatprep.subr.mxu0 0.0
        %460 = vmatpush1.msra.mxu0 %v418
        %461 = vmatprep.subr.mxu0 0.0
        %462 = vmatpush1.msra.mxu0 %v419
        %463 = vmatprep.subr.mxu0 0.0
        %464 = vmatpush1.msra.mxu0 %v420
        %465 = vmatprep.subr.mxu0 0.0
        %466 = vmatpush1.msra.mxu0 0.0
        %467 = vmatprep.subr.mxu0 0.0
        %468 = vmatpush1.msra.mxu0 0.0
        %469 = vmatprep.subr.mxu0 0.0
        %470 = vmatpush1.msra.mxu0 0.0
        %471 = vmatprep.subr.mxu0 0.0
        %472 = vmatpush1.msra.mxu0 0.0
        %473 = vmatprep.subr.mxu0 0.0
        %474 = vmatpush1.msra.mxu0 0.0
        %475 = vmatprep.subr.mxu0 0.0
        %476 = vmatpush1.msra.mxu0 0.0
        %477 = vmatprep.subr.mxu0 0.0
        %478 = vmatpush1.msra.mxu0 0.0
        %479 = vmatprep.subr.mxu0 0.0
        %480 = vmatpush1.msra.mxu0 0.0
        %481 = vmatprep.subr.mxu0 0.0
        %482 = vmatpush1.msra.mxu0 0.0
        %483 = vmatprep.subr.mxu0 0.0
        %484 = vmatpush1.msra.mxu0 0.0
        %485 = vmatprep.subr.mxu0 0.0
        %486 = vmatpush1.msra.mxu0 0.0
        %487 = vmatprep.subr.mxu0 0.0
        %488 = vmatpush1.msra.mxu0 0.0
        %489 = vmatprep.subr.mxu0 0.0
        %490 = vmatpush1.msra.mxu0 0.0
        %491 = vmatprep.subr.mxu0 0.0
        %492 = vmatpush1.msra.mxu0 0.0
        %493 = vmatprep.subr.mxu0 0.0
        %494 = vmatpush1.msra.mxu0 0.0
        %495 = vmatprep.subr.mxu0 0.0
        %496 = vmatpush1.msra.mxu0 0.0
        %497 = vmatprep.subr.mxu0 0.0
        %498 = vmatpush1.msra.mxu0 0.0
        %499 = vmatprep.subr.mxu0 0.0
        %500 = vmatpush1.msra.mxu0 0.0
        %501 = vmatprep.subr.mxu0 0.0
        %502 = vmatpush1.msra.mxu0 0.0
        %503 = vmatprep.subr.mxu0 0.0
        %504 = vmatpush1.msra.mxu0 0.0
        %505 = vmatprep.subr.mxu0 0.0
        %506 = vmatpush1.msra.mxu0 0.0
        %507 = vmatprep.subr.mxu0 0.0
        %508 = vmatpush1.msra.mxu0 0.0
        %509 = vmatprep.subr.mxu0 0.0
        %510 = vmatpush1.msra.mxu0 0.0
        %511 = vmatprep.subr.mxu0 0.0
        %512 = vmatpush1.msra.mxu0 0.0
        %513 = vmatprep.subr.mxu0 0.0
        %514 = vmatpush1.msra.mxu0 0.0
        %515 = vmatprep.subr.mxu0 0.0
        %516 = vmatpush1.msra.mxu0 0.0
        %517 = vmatprep.subr.mxu0 0.0
        %518 = vmatpush1.msra.mxu0 0.0
        %519 = vmatprep.subr.mxu0 0.0
        %520 = vmatpush1.msra.mxu0 0.0
        %521 = vmatprep.mubr.f32.mxu0 0.0
        %522 = vmatmul.mubr.f32.gmra.mrb[0].mxu0 %v449
        %v523 = vpop.f32.mrb[0].mxu0
        %v524 = vadd.f32 %v446, %v523
        %v525 = vpop.f32.mrb[0].mxu0
        %526 = vmatprep.mubr.f32.mxu0 0.0
        %527 = vmatmul.mubr.f32.gmra.mrb[0].mxu0 %v452
        %v528 = vpop.f32.mrb[0].mxu0
        %v529 = vadd.f32 %v446, %v528
        %v530 = vpop.f32.mrb[0].mxu0
        %531 = vmatprep.mubr.f32.mxu0 0.0
        %532 = vmatmul.mubr.f32.gmra.mrb[0].mxu0 %v455
        %v533 = vpop.f32.mrb[0].mxu0
        %v534 = vadd.f32 %v446, %v533
        %v535 = vpop.f32.mrb[0].mxu0
        %536 = vdwg.mxu0
        %v537 = vlaneseq
        %v538 = vshrl.u32 %v537, 7
        %v539 = vsub.s32 1, %v538
        %v540 = vrot.slane %v441, %v539
        %541 = vmatprep.subr.mxu0 0.0
        %542 = vmatpush1.msra.mxu0 %v421
        %543 = vmatprep.subr.mxu0 0.0
        %544 = vmatpush1.msra.mxu0 %v422
        %545 = vmatprep.subr.mxu0 0.0
        %546 = vmatpush1.msra.mxu0 %v423
        %547 = vmatprep.subr.mxu0 0.0
        %548 = vmatpush1.msra.mxu0 %v424
        %549 = vmatprep.subr.mxu0 0.0
        %550 = vmatpush1.msra.mxu0 0.0
        %551 = vmatprep.subr.mxu0 0.0
        %552 = vmatpush1.msra.mxu0 0.0
        %553 = vmatprep.subr.mxu0 0.0
        %554 = vmatpush1.msra.mxu0 0.0
        %555 = vmatprep.subr.mxu0 0.0
        %556 = vmatpush1.msra.mxu0 0.0
        %557 = vmatprep.subr.mxu0 0.0
        %558 = vmatpush1.msra.mxu0 0.0
        %559 = vmatprep.subr.mxu0 0.0
        %560 = vmatpush1.msra.mxu0 0.0
        %561 = vmatprep.subr.mxu0 0.0
        %562 = vmatpush1.msra.mxu0 0.0
        %563 = vmatprep.subr.mxu0 0.0
        %564 = vmatpush1.msra.mxu0 0.0
        %565 = vmatprep.subr.mxu0 0.0
        %566 = vmatpush1.msra.mxu0 0.0
        %567 = vmatprep.subr.mxu0 0.0
        %568 = vmatpush1.msra.mxu0 0.0
        %569 = vmatprep.subr.mxu0 0.0
        %570 = vmatpush1.msra.mxu0 0.0
        %571 = vmatprep.subr.mxu0 0.0
        %572 = vmatpush1.msra.mxu0 0.0
        %573 = vmatprep.subr.mxu0 0.0
        %574 = vmatpush1.msra.mxu0 0.0
        %575 = vmatprep.subr.mxu0 0.0
        %576 = vmatpush1.msra.mxu0 0.0
        %577 = vmatprep.subr.mxu0 0.0
        %578 = vmatpush1.msra.mxu0 0.0
        %579 = vmatprep.subr.mxu0 0.0
        %580 = vmatpush1.msra.mxu0 0.0
        %581 = vmatprep.subr.mxu0 0.0
        %582 = vmatpush1.msra.mxu0 0.0
        %583 = vmatprep.subr.mxu0 0.0
        %584 = vmatpush1.msra.mxu0 0.0
        %585 = vmatprep.subr.mxu0 0.0
        %586 = vmatpush1.msra.mxu0 0.0
        %587 = vmatprep.subr.mxu0 0.0
        %588 = vmatpush1.msra.mxu0 0.0
        %589 = vmatprep.subr.mxu0 0.0
        %590 = vmatpush1.msra.mxu0 0.0
        %591 = vmatprep.subr.mxu0 0.0
        %592 = vmatpush1.msra.mxu0 0.0
        %593 = vmatprep.subr.mxu0 0.0
        %594 = vmatpush1.msra.mxu0 0.0
        %595 = vmatprep.subr.mxu0 0.0
        %596 = vmatpush1.msra.mxu0 0.0
        %597 = vmatprep.subr.mxu0 0.0
        %598 = vmatpush1.msra.mxu0 0.0
        %599 = vmatprep.subr.mxu0 0.0
        %600 = vmatpush1.msra.mxu0 0.0
        %601 = vmatprep.subr.mxu0 0.0
        %602 = vmatpush1.msra.mxu0 0.0
        %603 = vmatprep.subr.mxu0 0.0
        %604 = vmatpush1.msra.mxu0 0.0
        %605 = vmatprep.mubr.f32.mxu0 0.0
        %606 = vmatmul.mubr.f32.gmra.mrb[0].mxu0 %v449
        %v607 = vpop.f32.mrb[0].mxu0
        %v608 = vadd.f32 %v540, %v607
        %v609 = vpop.f32.mrb[0].mxu0
        %610 = vmatprep.mubr.f32.mxu0 0.0
        %611 = vmatmul.mubr.f32.gmra.mrb[0].mxu0 %v452
        %v612 = vpop.f32.mrb[0].mxu0
        %v613 = vadd.f32 %v540, %v612
        %v614 = vpop.f32.mrb[0].mxu0
        %615 = vmatprep.mubr.f32.mxu0 0.0
        %616 = vmatmul.mubr.f32.gmra.mrb[0].mxu0 %v455
        %v617 = vpop.f32.mrb[0].mxu0
        %v618 = vadd.f32 %v540, %v617
        %v619 = vpop.f32.mrb[0].mxu0
        %620 = vdwg.mxu0
        %v621 = vlaneseq
        %v622 = vshrl.u32 %v621, 7
        %v623 = vsub.s32 2, %v622
        %v624 = vrot.slane %v441, %v623
        %625 = vmatprep.subr.mxu0 0.0
        %626 = vmatpush1.msra.mxu0 %v425
        %627 = vmatprep.subr.mxu0 0.0
        %628 = vmatpush1.msra.mxu0 %v426
        %629 = vmatprep.subr.mxu0 0.0
        %630 = vmatpush1.msra.mxu0 %v427
        %631 = vmatprep.subr.mxu0 0.0
        %632 = vmatpush1.msra.mxu0 %v428
        %633 = vmatprep.subr.mxu0 0.0
        %634 = vmatpush1.msra.mxu0 0.0
        %635 = vmatprep.subr.mxu0 0.0
        %636 = vmatpush1.msra.mxu0 0.0
        %637 = vmatprep.subr.mxu0 0.0
        %638 = vmatpush1.msra.mxu0 0.0
        %639 = vmatprep.subr.mxu0 0.0
        %640 = vmatpush1.msra.mxu0 0.0
        %641 = vmatprep.subr.mxu0 0.0
        %642 = vmatpush1.msra.mxu0 0.0
        %643 = vmatprep.subr.mxu0 0.0
        %644 = vmatpush1.msra.mxu0 0.0
        %645 = vmatprep.subr.mxu0 0.0
        %646 = vmatpush1.msra.mxu0 0.0
        %647 = vmatprep.subr.mxu0 0.0
        %648 = vmatpush1.msra.mxu0 0.0
        %649 = vmatprep.subr.mxu0 0.0
        %650 = vmatpush1.msra.mxu0 0.0
        %651 = vmatprep.subr.mxu0 0.0
        %652 = vmatpush1.msra.mxu0 0.0
        %653 = vmatprep.subr.mxu0 0.0
        %654 = vmatpush1.msra.mxu0 0.0
        %655 = vmatprep.subr.mxu0 0.0
        %656 = vmatpush1.msra.mxu0 0.0
        %657 = vmatprep.subr.mxu0 0.0
        %658 = vmatpush1.msra.mxu0 0.0
        %659 = vmatprep.subr.mxu0 0.0
        %660 = vmatpush1.msra.mxu0 0.0
        %661 = vmatprep.subr.mxu0 0.0
        %662 = vmatpush1.msra.mxu0 0.0
        %663 = vmatprep.subr.mxu0 0.0
        %664 = vmatpush1.msra.mxu0 0.0
        %665 = vmatprep.subr.mxu0 0.0
        %666 = vmatpush1.msra.mxu0 0.0
        %667 = vmatprep.subr.mxu0 0.0
        %668 = vmatpush1.msra.mxu0 0.0
        %669 = vmatprep.subr.mxu0 0.0
        %670 = vmatpush1.msra.mxu0 0.0
        %671 = vmatprep.subr.mxu0 0.0
        %672 = vmatpush1.msra.mxu0 0.0
        %673 = vmatprep.subr.mxu0 0.0
        %674 = vmatpush1.msra.mxu0 0.0
        %675 = vmatprep.subr.mxu0 0.0
        %676 = vmatpush1.msra.mxu0 0.0
        %677 = vmatprep.subr.mxu0 0.0
        %678 = vmatpush1.msra.mxu0 0.0
        %679 = vmatprep.subr.mxu0 0.0
        %680 = vmatpush1.msra.mxu0 0.0
        %681 = vmatprep.subr.mxu0 0.0
        %682 = vmatpush1.msra.mxu0 0.0
        %683 = vmatprep.subr.mxu0 0.0
        %684 = vmatpush1.msra.mxu0 0.0
        %685 = vmatprep.subr.mxu0 0.0
        %686 = vmatpush1.msra.mxu0 0.0
        %687 = vmatprep.subr.mxu0 0.0
        %688 = vmatpush1.msra.mxu0 0.0
        %689 = vmatprep.mubr.f32.mxu0 0.0
        %690 = vmatmul.mubr.f32.gmra.mrb[0].mxu0 %v449
        %v691 = vpop.f32.mrb[0].mxu0
        %v692 = vadd.f32 %v624, %v691
        %v693 = vpop.f32.mrb[0].mxu0
        %694 = vmatprep.mubr.f32.mxu0 0.0
        %695 = vmatmul.mubr.f32.gmra.mrb[0].mxu0 %v452
        %v696 = vpop.f32.mrb[0].mxu0
        %v697 = vadd.f32 %v624, %v696
        %v698 = vpop.f32.mrb[0].mxu0
        %699 = vmatprep.mubr.f32.mxu0 0.0
        %700 = vmatmul.mubr.f32.gmra.mrb[0].mxu0 %v455
        %v701 = vpop.f32.mrb[0].mxu0
        %v702 = vadd.f32 %v624, %v701
        %v703 = vpop.f32.mrb[0].mxu0
        %704 = vdwg.mxu0
        %v706 = vsel %vm323, %v524, 0
        %v709 = vsel %vm323, %v529, 0
        %v712 = vsel %vm323, %v534, 0
        %v715 = vsel %vm323, %v608, 0
        %v718 = vsel %vm323, %v613, 0
        %v721 = vsel %vm323, %v618, 0
        %723 = vmatprep.subr.mxu0 0.0
        %724 = vmatpush1.xpose.msra.mxu0 %v715
        %725 = vmatprep.subr.mxu0 0.0
        %726 = vmatpush1.xpose.msra.mxu0 %v718
        %727 = vmatprep.subr.mxu0 0.0
        %728 = vmatpush1.xpose.msra.mxu0 %v721
        %729 = vmatprep.subr.mxu0 0.0
        %730 = vmatpush1.xpose.msra.mxu0 0.0
        %731 = vmatprep.subr.mxu0 0.0
        %732 = vmatpush1.xpose.msra.mxu0 0.0
        %733 = vmatprep.subr.mxu0 0.0
        %734 = vmatpush1.xpose.msra.mxu0 0.0
        %735 = vmatprep.subr.mxu0 0.0
        %736 = vmatpush1.xpose.msra.mxu0 0.0
        %737 = vmatprep.subr.mxu0 0.0
        %738 = vmatpush1.xpose.msra.mxu0 0.0
        %739 = vmatprep.subr.mxu0 0.0
        %740 = vmatpush1.xpose.msra.mxu0 0.0
        %741 = vmatprep.subr.mxu0 0.0
        %742 = vmatpush1.xpose.msra.mxu0 0.0
        %743 = vmatprep.subr.mxu0 0.0
        %744 = vmatpush1.xpose.msra.mxu0 0.0
        %745 = vmatprep.subr.mxu0 0.0
        %746 = vmatpush1.xpose.msra.mxu0 0.0
        %747 = vmatprep.subr.mxu0 0.0
        %748 = vmatpush1.xpose.msra.mxu0 0.0
        %749 = vmatprep.subr.mxu0 0.0
        %750 = vmatpush1.xpose.msra.mxu0 0.0
        %751 = vmatprep.subr.mxu0 0.0
        %752 = vmatpush1.xpose.msra.mxu0 0.0
        %753 = vmatprep.subr.mxu0 0.0
        %754 = vmatpush1.xpose.msra.mxu0 0.0
        %755 = vmatprep.subr.mxu0 0.0
        %756 = vmatpush1.xpose.msra.mxu0 0.0
        %757 = vmatprep.subr.mxu0 0.0
        %758 = vmatpush1.xpose.msra.mxu0 0.0
        %759 = vmatprep.subr.mxu0 0.0
        %760 = vmatpush1.xpose.msra.mxu0 0.0
        %761 = vmatprep.subr.mxu0 0.0
        %762 = vmatpush1.xpose.msra.mxu0 0.0
        %763 = vmatprep.subr.mxu0 0.0
        %764 = vmatpush1.xpose.msra.mxu0 0.0
        %765 = vmatprep.subr.mxu0 0.0
        %766 = vmatpush1.xpose.msra.mxu0 0.0
        %767 = vmatprep.subr.mxu0 0.0
        %768 = vmatpush1.xpose.msra.mxu0 0.0
        %769 = vmatprep.subr.mxu0 0.0
        %770 = vmatpush1.xpose.msra.mxu0 0.0
        %771 = vmatprep.subr.mxu0 0.0
        %772 = vmatpush1.xpose.msra.mxu0 0.0
        %773 = vmatprep.subr.mxu0 0.0
        %774 = vmatpush1.xpose.msra.mxu0 0.0
        %775 = vmatprep.subr.mxu0 0.0
        %776 = vmatpush1.xpose.msra.mxu0 0.0
        %777 = vmatprep.subr.mxu0 0.0
        %778 = vmatpush1.xpose.msra.mxu0 0.0
        %779 = vmatprep.subr.mxu0 0.0
        %780 = vmatpush1.xpose.msra.mxu0 0.0
        %781 = vmatprep.subr.mxu0 0.0
        %782 = vmatpush1.xpose.msra.mxu0 0.0
        %783 = vmatprep.subr.mxu0 0.0
        %784 = vmatpush1.xpose.msra.mxu0 0.0
        %785 = vmatprep.subr.mxu0 0.0
        %786 = vmatpush1.xpose.msra.mxu0 0.0
        %787 = vmatprep.mubr.f32.mxu0 0.0
        %788 = vmatmul.mubr.f32.gmra.mrb[0].mxu0 %v706
        %v789 = vpop.f32.mrb[0].mxu0
        %v790 = vadd.f32 0.0, %v789
        %v791 = vpop.f32.mrb[0].mxu0
        %792 = vmatprep.mubr.f32.mxu0 0.0
        %793 = vmatmul.mubr.f32.gmra.mrb[0].mxu0 %v709
        %v794 = vpop.f32.mrb[0].mxu0
        %v795 = vadd.f32 0.0, %v794
        %v796 = vpop.f32.mrb[0].mxu0
        %797 = vmatprep.mubr.f32.mxu0 0.0
        %798 = vmatmul.mubr.f32.gmra.mrb[0].mxu0 %v712
        %v799 = vpop.f32.mrb[0].mxu0
        %v800 = vadd.f32 0.0, %v799
        %v801 = vpop.f32.mrb[0].mxu0
        %802 = vdwg.mxu0
        %v803 = vmul.f32 %v790, 0.35355338
        %v804 = vmul.f32 %v795, 0.35355338
        %v805 = vmul.f32 %v800, 0.35355338
        %v806 = vadd.f32 %v803, %v416
        %v807 = vadd.f32 %v804, %v416
        %v808 = vadd.f32 %v805, %v416
        %vm809 = vcmask 195584
        %v810 = vsel %vm809, %v806, -inf
        %811 = vmax.xlane.f32.xlu0 %v810
        %v812 = vpop.xlane.xlu0 %811
        %v813 = vsel %vm809, %v807, -inf
        %814 = vmax.xlane.f32.xlu0 %v813
        %v815 = vpop.xlane.xlu0 %814
        %v816 = vsel %vm809, %v808, -inf
        %817 = vmax.xlane.f32.xlu0 %v816
        %v818 = vpop.xlane.xlu0 %817
        %v819 = vsub.f32 %v806, %v812
        %v820 = vsub.f32 %v807, %v815
        %v821 = vsub.f32 %v808, %v818
        %v822 = vmul.f32 %v819, 1.442695
        %v823 = vpow.pop %v822
        %v824 = vmul.f32 %v820, 1.442695
        %v825 = vpow.pop %v824
        %v826 = vmul.f32 %v821, 1.442695
        %v827 = vpow.pop %v826
        %v828 = vsel %vm809, %v823, 0.0
        %829 = vadd.xlane.f32.xlu0 %v828
        %v830 = vpop.xlane.xlu0 %829
        %v831 = vsel %vm809, %v825, 0.0
        %832 = vadd.xlane.f32.xlu0 %v831
        %v833 = vpop.xlane.xlu0 %832
        %v834 = vsel %vm809, %v827, 0.0
        %835 = vadd.xlane.f32.xlu0 %v834
        %v836 = vpop.xlane.xlu0 %835
        %v837 = vrcp.pop %v830
        %v838 = vmul.f32 %v823, %v837
        %v839 = vrcp.pop %v833
        %v840 = vmul.f32 %v825, %v839
        %v841 = vrcp.pop %v836
        %v842 = vmul.f32 %v827, %v841
        %v844 = vsel %vm809, %v838, 0
        %v847 = vsel %vm809, %v840, 0
        %v850 = vsel %vm809, %v842, 0
        %852 = vmatprep.subr.mxu0 0.0
        %853 = vmatpush1.msra.mxu0 %v692
        %854 = vmatprep.subr.mxu0 0.0
        %855 = vmatpush1.msra.mxu0 %v697
        %856 = vmatprep.subr.mxu0 0.0
        %857 = vmatpush1.msra.mxu0 %v702
        %858 = vmatprep.subr.mxu0 0.0
        %859 = vmatpush1.msra.mxu0 0.0
        %860 = vmatprep.subr.mxu0 0.0
        %861 = vmatpush1.msra.mxu0 0.0
        %862 = vmatprep.subr.mxu0 0.0
        %863 = vmatpush1.msra.mxu0 0.0
        %864 = vmatprep.subr.mxu0 0.0
        %865 = vmatpush1.msra.mxu0 0.0
        %866 = vmatprep.subr.mxu0 0.0
        %867 = vmatpush1.msra.mxu0 0.0
        %868 = vmatprep.subr.mxu0 0.0
        %869 = vmatpush1.msra.mxu0 0.0
        %870 = vmatprep.subr.mxu0 0.0
        %871 = vmatpush1.msra.mxu0 0.0
        %872 = vmatprep.subr.mxu0 0.0
        %873 = vmatpush1.msra.mxu0 0.0
        %874 = vmatprep.subr.mxu0 0.0
        %875 = vmatpush1.msra.mxu0 0.0
        %876 = vmatprep.subr.mxu0 0.0
        %877 = vmatpush1.msra.mxu0 0.0
        %878 = vmatprep.subr.mxu0 0.0
        %879 = vmatpush1.msra.mxu0 0.0
        %880 = vmatprep.subr.mxu0 0.0
        %881 = vmatpush1.msra.mxu0 0.0
        %882 = vmatprep.subr.mxu0 0.0
        %883 = vmatpush1.msra.mxu0 0.0
        %884 = vmatprep.subr.mxu0 0.0
        %885 = vmatpush1.msra.mxu0 0.0
        %886 = vmatprep.subr.mxu0 0.0
        %887 = vmatpush1.msra.mxu0 0.0
        %888 = vmatprep.subr.mxu0 0.0
        %889 = vmatpush1.msra.mxu0 0.0
        %890 = vmatprep.subr.mxu0 0.0
        %891 = vmatpush1.msra.mxu0 0.0
        %892 = vmatprep.subr.mxu0 0.0
        %893 = vmatpush1.msra.mxu0 0.0
        %894 = vmatprep.subr.mxu0 0.0
        %895 = vmatpush1.msra.mxu0 0.0
        %896 = vmatprep.subr.mxu0 0.0
        %897 = vmatpush1.msra.mxu0 0.0
        %898 = vmatprep.subr.mxu0 0.0
        %899 = vmatpush1.msra.mxu0 0.0
        %900 = vmatprep.subr.mxu0 0.0
        %901 = vmatpush1.msra.mxu0 0.0
        %902 = vmatprep.subr.mxu0 0.0
        %903 = vmatpush1.msra.mxu0 0.0
        %904 = vmatprep.subr.mxu0 0.0
        %905 = vmatpush1.msra.mxu0 0.0
        %906 = vmatprep.subr.mxu0 0.0
        %907 = vmatpush1.msra.mxu0 0.0
        %908 = vmatprep.subr.mxu0 0.0
        %909 = vmatpush1.msra.mxu0 0.0
        %910 = vmatprep.subr.mxu0 0.0
        %911 = vmatpush1.msra.mxu0 0.0
        %912 = vmatprep.subr.mxu0 0.0
        %913 = vmatpush1.msra.mxu0 0.0
        %914 = vmatprep.subr.mxu0 0.0
        %915 = vmatpush1.msra.mxu0 0.0
        %916 = vmatprep.mubr.f32.mxu0 0.0
        %917 = vmatmul.mubr.f32.gmra.mrb[0].mxu0 %v844
        %v918 = vpop.f32.mrb[0].mxu0
        %v919 = vadd.f32 0.0, %v918
        %v920 = vpop.f32.mrb[0].mxu0
        %921 = vmatprep.mubr.f32.mxu0 0.0
        %922 = vmatmul.mubr.f32.gmra.mrb[0].mxu0 %v847
        %v923 = vpop.f32.mrb[0].mxu0
        %v924 = vadd.f32 0.0, %v923
        %v925 = vpop.f32.mrb[0].mxu0
        %926 = vmatprep.mubr.f32.mxu0 0.0
        %927 = vmatmul.mubr.f32.gmra.mrb[0].mxu0 %v850
        %v928 = vpop.f32.mrb[0].mxu0
        %v929 = vadd.f32 0.0, %v928
        %v930 = vpop.f32.mrb[0].mxu0
        %931 = vdwg.mxu0
        %932 = vrot.lane.b32.xlu0 %v524, 120
        %v933 = vpop.permute.xlu0 %932
        %934 = vrot.lane.b32.xlu0 %v529, 120
        %v935 = vpop.permute.xlu0 %934
        %936 = vrot.lane.b32.xlu0 %v534, 120
        %v937 = vpop.permute.xlu0 %936
        %938 = vrot.lane.b32.xlu0 %v608, 120
        %v939 = vpop.permute.xlu0 %938
        %940 = vrot.lane.b32.xlu0 %v613, 120
        %v941 = vpop.permute.xlu0 %940
        %942 = vrot.lane.b32.xlu0 %v618, 120
        %v943 = vpop.permute.xlu0 %942
        %v944 = vsel %vm323, %v933, 0
        %v946 = vsel %vm323, %v935, 0
        %v948 = vsel %vm323, %v937, 0
        %v950 = vsel %vm323, %v939, 0
        %v952 = vsel %vm323, %v941, 0
        %v954 = vsel %vm323, %v943, 0
        %956 = vmatprep.subr.mxu0 0.0
        %957 = vmatpush1.xpose.msra.mxu0 %v950
        %958 = vmatprep.subr.mxu0 0.0
        %959 = vmatpush1.xpose.msra.mxu0 %v952
        %960 = vmatprep.subr.mxu0 0.0
        %961 = vmatpush1.xpose.msra.mxu0 %v954
        %962 = vmatprep.subr.mxu0 0.0
        %963 = vmatpush1.xpose.msra.mxu0 0.0
        %964 = vmatprep.subr.mxu0 0.0
        %965 = vmatpush1.xpose.msra.mxu0 0.0
        %966 = vmatprep.subr.mxu0 0.0
        %967 = vmatpush1.xpose.msra.mxu0 0.0
        %968 = vmatprep.subr.mxu0 0.0
        %969 = vmatpush1.xpose.msra.mxu0 0.0
        %970 = vmatprep.subr.mxu0 0.0
        %971 = vmatpush1.xpose.msra.mxu0 0.0
        %972 = vmatprep.subr.mxu0 0.0
        %973 = vmatpush1.xpose.msra.mxu0 0.0
        %974 = vmatprep.subr.mxu0 0.0
        %975 = vmatpush1.xpose.msra.mxu0 0.0
        %976 = vmatprep.subr.mxu0 0.0
        %977 = vmatpush1.xpose.msra.mxu0 0.0
        %978 = vmatprep.subr.mxu0 0.0
        %979 = vmatpush1.xpose.msra.mxu0 0.0
        %980 = vmatprep.subr.mxu0 0.0
        %981 = vmatpush1.xpose.msra.mxu0 0.0
        %982 = vmatprep.subr.mxu0 0.0
        %983 = vmatpush1.xpose.msra.mxu0 0.0
        %984 = vmatprep.subr.mxu0 0.0
        %985 = vmatpush1.xpose.msra.mxu0 0.0
        %986 = vmatprep.subr.mxu0 0.0
        %987 = vmatpush1.xpose.msra.mxu0 0.0
        %988 = vmatprep.subr.mxu0 0.0
        %989 = vmatpush1.xpose.msra.mxu0 0.0
        %990 = vmatprep.subr.mxu0 0.0
        %991 = vmatpush1.xpose.msra.mxu0 0.0
        %992 = vmatprep.subr.mxu0 0.0
        %993 = vmatpush1.xpose.msra.mxu0 0.0
        %994 = vmatprep.subr.mxu0 0.0
        %995 = vmatpush1.xpose.msra.mxu0 0.0
        %996 = vmatprep.subr.mxu0 0.0
        %997 = vmatpush1.xpose.msra.mxu0 0.0
        %998 = vmatprep.subr.mxu0 0.0
        %999 = vmatpush1.xpose.msra.mxu0 0.0
        %1000 = vmatprep.subr.mxu0 0.0
        %1001 = vmatpush1.xpose.msra.mxu0 0.0
        %1002 = vmatprep.subr.mxu0 0.0
        %1003 = vmatpush1.xpose.msra.mxu0 0.0
        %1004 = vmatprep.subr.mxu0 0.0
        %1005 = vmatpush1.xpose.msra.mxu0 0.0
        %1006 = vmatprep.subr.mxu0 0.0
        %1007 = vmatpush1.xpose.msra.mxu0 0.0
        %1008 = vmatprep.subr.mxu0 0.0
        %1009 = vmatpush1.xpose.msra.mxu0 0.0
        %1010 = vmatprep.subr.mxu0 0.0
        %1011 = vmatpush1.xpose.msra.mxu0 0.0
        %1012 = vmatprep.subr.mxu0 0.0
        %1013 = vmatpush1.xpose.msra.mxu0 0.0
        %1014 = vmatprep.subr.mxu0 0.0
        %1015 = vmatpush1.xpose.msra.mxu0 0.0
        %1016 = vmatprep.subr.mxu0 0.0
        %1017 = vmatpush1.xpose.msra.mxu0 0.0
        %1018 = vmatprep.subr.mxu0 0.0
        %1019 = vmatpush1.xpose.msra.mxu0 0.0
        %1020 = vmatprep.mubr.f32.mxu0 0.0
        %1021 = vmatmul.mubr.f32.gmra.mrb[0].mxu0 %v944
        %v1022 = vpop.f32.mrb[0].mxu0
        %v1023 = vadd.f32 0.0, %v1022
        %v1024 = vpop.f32.mrb[0].mxu0
        %1025 = vmatprep.mubr.f32.mxu0 0.0
        %1026 = vmatmul.mubr.f32.gmra.mrb[0].mxu0 %v946
        %v1027 = vpop.f32.mrb[0].mxu0
        %v1028 = vadd.f32 0.0, %v1027
        %v1029 = vpop.f32.mrb[0].mxu0
        %1030 = vmatprep.mubr.f32.mxu0 0.0
        %1031 = vmatmul.mubr.f32.gmra.mrb[0].mxu0 %v948
        %v1032 = vpop.f32.mrb[0].mxu0
        %v1033 = vadd.f32 0.0, %v1032
        %v1034 = vpop.f32.mrb[0].mxu0
        %1035 = vdwg.mxu0
        %v1036 = vmul.f32 %v1023, 0.35355338
        %v1037 = vmul.f32 %v1028, 0.35355338
        %v1038 = vmul.f32 %v1033, 0.35355338
        %v1039 = vadd.f32 %v1036, %v416
        %v1040 = vadd.f32 %v1037, %v416
        %v1041 = vadd.f32 %v1038, %v416
        %v1042 = vsel %vm809, %v1039, -inf
        %1043 = vmax.xlane.f32.xlu0 %v1042
        %v1044 = vpop.xlane.xlu0 %1043
        %v1045 = vsel %vm809, %v1040, -inf
        %1046 = vmax.xlane.f32.xlu0 %v1045
        %v1047 = vpop.xlane.xlu0 %1046
        %v1048 = vsel %vm809, %v1041, -inf
        %1049 = vmax.xlane.f32.xlu0 %v1048
        %v1050 = vpop.xlane.xlu0 %1049
        %v1051 = vsub.f32 %v1039, %v1044
        %v1052 = vsub.f32 %v1040, %v1047
        %v1053 = vsub.f32 %v1041, %v1050
        %v1054 = vmul.f32 %v1051, 1.442695
        %v1055 = vpow.pop %v1054
        %v1056 = vmul.f32 %v1052, 1.442695
        %v1057 = vpow.pop %v1056
        %v1058 = vmul.f32 %v1053, 1.442695
        %v1059 = vpow.pop %v1058
        %v1060 = vsel %vm809, %v1055, 0.0
        %1061 = vadd.xlane.f32.xlu0 %v1060
        %v1062 = vpop.xlane.xlu0 %1061
        %v1063 = vsel %vm809, %v1057, 0.0
        %1064 = vadd.xlane.f32.xlu0 %v1063
        %v1065 = vpop.xlane.xlu0 %1064
        %v1066 = vsel %vm809, %v1059, 0.0
        %1067 = vadd.xlane.f32.xlu0 %v1066
        %v1068 = vpop.xlane.xlu0 %1067
        %v1069 = vrcp.pop %v1062
        %v1070 = vmul.f32 %v1055, %v1069
        %v1071 = vrcp.pop %v1065
        %v1072 = vmul.f32 %v1057, %v1071
        %v1073 = vrcp.pop %v1068
        %v1074 = vmul.f32 %v1059, %v1073
        %1078 = vrot.lane.b32.xlu0 %v692, 120
        %v1079 = vpop.permute.xlu0 %1078
        %1080 = vrot.lane.b32.xlu0 %v697, 120
        %v1081 = vpop.permute.xlu0 %1080
        %1082 = vrot.lane.b32.xlu0 %v702, 120
        %v1083 = vpop.permute.xlu0 %1082
        %v1088 = vsel %vm809, %v1070, 0
        %v1091 = vsel %vm809, %v1072, 0
        %v1094 = vsel %vm809, %v1074, 0
        %1096 = vmatprep.subr.mxu0 0.0
        %1097 = vmatpush1.msra.mxu0 %v1079
        %1098 = vmatprep.subr.mxu0 0.0
        %1099 = vmatpush1.msra.mxu0 %v1081
        %1100 = vmatprep.subr.mxu0 0.0
        %1101 = vmatpush1.msra.mxu0 %v1083
        %1102 = vmatprep.subr.mxu0 0.0
        %1103 = vmatpush1.msra.mxu0 0.0
        %1104 = vmatprep.subr.mxu0 0.0
        %1105 = vmatpush1.msra.mxu0 0.0
        %1106 = vmatprep.subr.mxu0 0.0
        %1107 = vmatpush1.msra.mxu0 0.0
        %1108 = vmatprep.subr.mxu0 0.0
        %1109 = vmatpush1.msra.mxu0 0.0
        %1110 = vmatprep.subr.mxu0 0.0
        %1111 = vmatpush1.msra.mxu0 0.0
        %1112 = vmatprep.subr.mxu0 0.0
        %1113 = vmatpush1.msra.mxu0 0.0
        %1114 = vmatprep.subr.mxu0 0.0
        %1115 = vmatpush1.msra.mxu0 0.0
        %1116 = vmatprep.subr.mxu0 0.0
        %1117 = vmatpush1.msra.mxu0 0.0
        %1118 = vmatprep.subr.mxu0 0.0
        %1119 = vmatpush1.msra.mxu0 0.0
        %1120 = vmatprep.subr.mxu0 0.0
        %1121 = vmatpush1.msra.mxu0 0.0
        %1122 = vmatprep.subr.mxu0 0.0
        %1123 = vmatpush1.msra.mxu0 0.0
        %1124 = vmatprep.subr.mxu0 0.0
        %1125 = vmatpush1.msra.mxu0 0.0
        %1126 = vmatprep.subr.mxu0 0.0
        %1127 = vmatpush1.msra.mxu0 0.0
        %1128 = vmatprep.subr.mxu0 0.0
        %1129 = vmatpush1.msra.mxu0 0.0
        %1130 = vmatprep.subr.mxu0 0.0
        %1131 = vmatpush1.msra.mxu0 0.0
        %1132 = vmatprep.subr.mxu0 0.0
        %1133 = vmatpush1.msra.mxu0 0.0
        %1134 = vmatprep.subr.mxu0 0.0
        %1135 = vmatpush1.msra.mxu0 0.0
        %1136 = vmatprep.subr.mxu0 0.0
        %1137 = vmatpush1.msra.mxu0 0.0
        %1138 = vmatprep.subr.mxu0 0.0
        %1139 = vmatpush1.msra.mxu0 0.0
        %1140 = vmatprep.subr.mxu0 0.0
        %1141 = vmatpush1.msra.mxu0 0.0
        %1142 = vmatprep.subr.mxu0 0.0
        %1143 = vmatpush1.msra.mxu0 0.0
        %1144 = vmatprep.subr.mxu0 0.0
        %1145 = vmatpush1.msra.mxu0 0.0
        %1146 = vmatprep.subr.mxu0 0.0
        %1147 = vmatpush1.msra.mxu0 0.0
        %1148 = vmatprep.subr.mxu0 0.0
        %1149 = vmatpush1.msra.mxu0 0.0
        %1150 = vmatprep.subr.mxu0 0.0
        %1151 = vmatpush1.msra.mxu0 0.0
        %1152 = vmatprep.subr.mxu0 0.0
        %1153 = vmatpush1.msra.mxu0 0.0
        %1154 = vmatprep.subr.mxu0 0.0
        %1155 = vmatpush1.msra.mxu0 0.0
        %1156 = vmatprep.subr.mxu0 0.0
        %1157 = vmatpush1.msra.mxu0 0.0
        %1158 = vmatprep.subr.mxu0 0.0
        %1159 = vmatpush1.msra.mxu0 0.0
        %1160 = vmatprep.mubr.f32.mxu0 0.0
        %1161 = vmatmul.mubr.f32.gmra.mrb[0].mxu0 %v1088
        %v1162 = vpop.f32.mrb[0].mxu0
        %v1163 = vadd.f32 0.0, %v1162
        %v1164 = vpop.f32.mrb[0].mxu0
        %1165 = vmatprep.mubr.f32.mxu0 0.0
        %1166 = vmatmul.mubr.f32.gmra.mrb[0].mxu0 %v1091
        %v1167 = vpop.f32.mrb[0].mxu0
        %v1168 = vadd.f32 0.0, %v1167
        %v1169 = vpop.f32.mrb[0].mxu0
        %1170 = vmatprep.mubr.f32.mxu0 0.0
        %1171 = vmatmul.mubr.f32.gmra.mrb[0].mxu0 %v1094
        %v1172 = vpop.f32.mrb[0].mxu0
        %v1173 = vadd.f32 0.0, %v1172
        %v1174 = vpop.f32.mrb[0].mxu0
        %1175 = vdwg.mxu0
        %v1177 = vsel %vm323, %v1163, 0
        %v1180 = vsel %vm323, %v1168, 0
        %v1183 = vsel %vm323, %v1173, 0
        %1185 = vmatprep.subr.mxu0 0.0
        %1186 = vmatpush1.msra.mxu0 %v430
        %1187 = vmatprep.subr.mxu0 0.0
        %1188 = vmatpush1.msra.mxu0 0.0
        %1189 = vmatprep.subr.mxu0 0.0
        %1190 = vmatpush1.msra.mxu0 0.0
        %1191 = vmatprep.subr.mxu0 0.0
        %1192 = vmatpush1.msra.mxu0 0.0
        %1193 = vmatprep.subr.mxu0 0.0
        %1194 = vmatpush1.msra.mxu0 0.0
        %1195 = vmatprep.subr.mxu0 0.0
        %1196 = vmatpush1.msra.mxu0 0.0
        %1197 = vmatprep.subr.mxu0 0.0
        %1198 = vmatpush1.msra.mxu0 0.0
        %1199 = vmatprep.subr.mxu0 0.0
        %1200 = vmatpush1.msra.mxu0 0.0
        %1201 = vmatprep.subr.mxu0 0.0
        %1202 = vmatpush1.msra.mxu0 0.0
        %1203 = vmatprep.subr.mxu0 0.0
        %1204 = vmatpush1.msra.mxu0 0.0
        %1205 = vmatprep.subr.mxu0 0.0
        %1206 = vmatpush1.msra.mxu0 0.0
        %1207 = vmatprep.subr.mxu0 0.0
        %1208 = vmatpush1.msra.mxu0 0.0
        %1209 = vmatprep.subr.mxu0 0.0
        %1210 = vmatpush1.msra.mxu0 0.0
        %1211 = vmatprep.subr.mxu0 0.0
        %1212 = vmatpush1.msra.mxu0 0.0
        %1213 = vmatprep.subr.mxu0 0.0
        %1214 = vmatpush1.msra.mxu0 0.0
        %1215 = vmatprep.subr.mxu0 0.0
        %1216 = vmatpush1.msra.mxu0 0.0
        %1217 = vmatprep.subr.mxu0 0.0
        %1218 = vmatpush1.msra.mxu0 0.0
        %1219 = vmatprep.subr.mxu0 0.0
        %1220 = vmatpush1.msra.mxu0 0.0
        %1221 = vmatprep.subr.mxu0 0.0
        %1222 = vmatpush1.msra.mxu0 0.0
        %1223 = vmatprep.subr.mxu0 0.0
        %1224 = vmatpush1.msra.mxu0 0.0
        %1225 = vmatprep.subr.mxu0 0.0
        %1226 = vmatpush1.msra.mxu0 0.0
        %1227 = vmatprep.subr.mxu0 0.0
        %1228 = vmatpush1.msra.mxu0 0.0
        %1229 = vmatprep.subr.mxu0 0.0
        %1230 = vmatpush1.msra.mxu0 0.0
        %1231 = vmatprep.subr.mxu0 0.0
        %1232 = vmatpush1.msra.mxu0 0.0
        %1233 = vmatprep.subr.mxu0 0.0
        %1234 = vmatpush1.msra.mxu0 0.0
        %1235 = vmatprep.subr.mxu0 0.0
        %1236 = vmatpush1.msra.mxu0 0.0
        %1237 = vmatprep.subr.mxu0 0.0
        %1238 = vmatpush1.msra.mxu0 0.0
        %1239 = vmatprep.subr.mxu0 0.0
        %1240 = vmatpush1.msra.mxu0 0.0
        %1241 = vmatprep.subr.mxu0 0.0
        %1242 = vmatpush1.msra.mxu0 0.0
        %1243 = vmatprep.subr.mxu0 0.0
        %1244 = vmatpush1.msra.mxu0 0.0
        %1245 = vmatprep.subr.mxu0 0.0
        %1246 = vmatpush1.msra.mxu0 0.0
        %1247 = vmatprep.subr.mxu0 0.0
        %1248 = vmatpush1.msra.mxu0 0.0
        %1249 = vmatprep.mubr.f32.mxu0 0.0
        %1250 = vmatmul.mubr.f32.gmra.mrb[0].mxu0 %v1177
        %v1251 = vpop.f32.mrb[0].mxu0
        %v1252 = vadd.f32 0.0, %v1251
        %v1253 = vpop.f32.mrb[0].mxu0
        %1254 = vmatprep.mubr.f32.mxu0 0.0
        %1255 = vmatmul.mubr.f32.gmra.mrb[0].mxu0 %v1180
        %v1256 = vpop.f32.mrb[0].mxu0
        %v1257 = vadd.f32 0.0, %v1256
        %v1258 = vpop.f32.mrb[0].mxu0
        %1259 = vmatprep.mubr.f32.mxu0 0.0
        %1260 = vmatmul.mubr.f32.gmra.mrb[0].mxu0 %v1183
        %v1261 = vpop.f32.mrb[0].mxu0
        %v1262 = vadd.f32 0.0, %v1261
        %v1263 = vpop.f32.mrb[0].mxu0
        %1264 = vdwg.mxu0
        %v1266 = vsel %vm323, %v919, 0
        %v1269 = vsel %vm323, %v924, 0
        %v1272 = vsel %vm323, %v929, 0
        %1274 = vmatprep.subr.mxu0 0.0
        %1275 = vmatpush1.msra.mxu0 %v429
        %1276 = vmatprep.subr.mxu0 0.0
        %1277 = vmatpush1.msra.mxu0 0.0
        %1278 = vmatprep.subr.mxu0 0.0
        %1279 = vmatpush1.msra.mxu0 0.0
        %1280 = vmatprep.subr.mxu0 0.0
        %1281 = vmatpush1.msra.mxu0 0.0
        %1282 = vmatprep.subr.mxu0 0.0
        %1283 = vmatpush1.msra.mxu0 0.0
        %1284 = vmatprep.subr.mxu0 0.0
        %1285 = vmatpush1.msra.mxu0 0.0
        %1286 = vmatprep.subr.mxu0 0.0
        %1287 = vmatpush1.msra.mxu0 0.0
        %1288 = vmatprep.subr.mxu0 0.0
        %1289 = vmatpush1.msra.mxu0 0.0
        %1290 = vmatprep.subr.mxu0 0.0
        %1291 = vmatpush1.msra.mxu0 0.0
        %1292 = vmatprep.subr.mxu0 0.0
        %1293 = vmatpush1.msra.mxu0 0.0
        %1294 = vmatprep.subr.mxu0 0.0
        %1295 = vmatpush1.msra.mxu0 0.0
        %1296 = vmatprep.subr.mxu0 0.0
        %1297 = vmatpush1.msra.mxu0 0.0
        %1298 = vmatprep.subr.mxu0 0.0
        %1299 = vmatpush1.msra.mxu0 0.0
        %1300 = vmatprep.subr.mxu0 0.0
        %1301 = vmatpush1.msra.mxu0 0.0
        %1302 = vmatprep.subr.mxu0 0.0
        %1303 = vmatpush1.msra.mxu0 0.0
        %1304 = vmatprep.subr.mxu0 0.0
        %1305 = vmatpush1.msra.mxu0 0.0
        %1306 = vmatprep.subr.mxu0 0.0
        %1307 = vmatpush1.msra.mxu0 0.0
        %1308 = vmatprep.subr.mxu0 0.0
        %1309 = vmatpush1.msra.mxu0 0.0
        %1310 = vmatprep.subr.mxu0 0.0
        %1311 = vmatpush1.msra.mxu0 0.0
        %1312 = vmatprep.subr.mxu0 0.0
        %1313 = vmatpush1.msra.mxu0 0.0
        %1314 = vmatprep.subr.mxu0 0.0
        %1315 = vmatpush1.msra.mxu0 0.0
        %1316 = vmatprep.subr.mxu0 0.0
        %1317 = vmatpush1.msra.mxu0 0.0
        %1318 = vmatprep.subr.mxu0 0.0
        %1319 = vmatpush1.msra.mxu0 0.0
        %1320 = vmatprep.subr.mxu0 0.0
        %1321 = vmatpush1.msra.mxu0 0.0
        %1322 = vmatprep.subr.mxu0 0.0
        %1323 = vmatpush1.msra.mxu0 0.0
        %1324 = vmatprep.subr.mxu0 0.0
        %1325 = vmatpush1.msra.mxu0 0.0
        %1326 = vmatprep.subr.mxu0 0.0
        %1327 = vmatpush1.msra.mxu0 0.0
        %1328 = vmatprep.subr.mxu0 0.0
        %1329 = vmatpush1.msra.mxu0 0.0
        %1330 = vmatprep.subr.mxu0 0.0
        %1331 = vmatpush1.msra.mxu0 0.0
        %1332 = vmatprep.subr.mxu0 0.0
        %1333 = vmatpush1.msra.mxu0 0.0
        %1334 = vmatprep.subr.mxu0 0.0
        %1335 = vmatpush1.msra.mxu0 0.0
        %1336 = vmatprep.subr.mxu0 0.0
        %1337 = vmatpush1.msra.mxu0 0.0
        %1338 = vmatprep.mubr.f32.mxu0 0.0
        %1339 = vmatmul.mubr.f32.gmra.mrb[0].mxu0 %v1266
        %v1340 = vpop.f32.mrb[0].mxu0
        %v1341 = vadd.f32 %v1252, %v1340
        %v1342 = vpop.f32.mrb[0].mxu0
        %1343 = vmatprep.mubr.f32.mxu0 0.0
        %1344 = vmatmul.mubr.f32.gmra.mrb[0].mxu0 %v1269
        %v1345 = vpop.f32.mrb[0].mxu0
        %v1346 = vadd.f32 %v1257, %v1345
        %v1347 = vpop.f32.mrb[0].mxu0
        %1348 = vmatprep.mubr.f32.mxu0 0.0
        %1349 = vmatmul.mubr.f32.gmra.mrb[0].mxu0 %v1272
        %v1350 = vpop.f32.mrb[0].mxu0
        %v1351 = vadd.f32 %v1262, %v1350
        %v1352 = vpop.f32.mrb[0].mxu0
        %1353 = vdwg.mxu0
        %1354 = vrot.lane.b32.xlu0 %v524, 112
        %v1355 = vpop.permute.xlu0 %1354
        %1356 = vrot.lane.b32.xlu0 %v529, 112
        %v1357 = vpop.permute.xlu0 %1356
        %1358 = vrot.lane.b32.xlu0 %v534, 112
        %v1359 = vpop.permute.xlu0 %1358
        %1360 = vrot.lane.b32.xlu0 %v608, 112
        %v1361 = vpop.permute.xlu0 %1360
        %1362 = vrot.lane.b32.xlu0 %v613, 112
        %v1363 = vpop.permute.xlu0 %1362
        %1364 = vrot.lane.b32.xlu0 %v618, 112
        %v1365 = vpop.permute.xlu0 %1364
        %v1366 = vsel %vm323, %v1355, 0
        %v1368 = vsel %vm323, %v1357, 0
        %v1370 = vsel %vm323, %v1359, 0
        %v1372 = vsel %vm323, %v1361, 0
        %v1374 = vsel %vm323, %v1363, 0
        %v1376 = vsel %vm323, %v1365, 0
        %1378 = vmatprep.subr.mxu0 0.0
        %1379 = vmatpush1.xpose.msra.mxu0 %v1372
        %1380 = vmatprep.subr.mxu0 0.0
        %1381 = vmatpush1.xpose.msra.mxu0 %v1374
        %1382 = vmatprep.subr.mxu0 0.0
        %1383 = vmatpush1.xpose.msra.mxu0 %v1376
        %1384 = vmatprep.subr.mxu0 0.0
        %1385 = vmatpush1.xpose.msra.mxu0 0.0
        %1386 = vmatprep.subr.mxu0 0.0
        %1387 = vmatpush1.xpose.msra.mxu0 0.0
        %1388 = vmatprep.subr.mxu0 0.0
        %1389 = vmatpush1.xpose.msra.mxu0 0.0
        %1390 = vmatprep.subr.mxu0 0.0
        %1391 = vmatpush1.xpose.msra.mxu0 0.0
        %1392 = vmatprep.subr.mxu0 0.0
        %1393 = vmatpush1.xpose.msra.mxu0 0.0
        %1394 = vmatprep.subr.mxu0 0.0
        %1395 = vmatpush1.xpose.msra.mxu0 0.0
        %1396 = vmatprep.subr.mxu0 0.0
        %1397 = vmatpush1.xpose.msra.mxu0 0.0
        %1398 = vmatprep.subr.mxu0 0.0
        %1399 = vmatpush1.xpose.msra.mxu0 0.0
        %1400 = vmatprep.subr.mxu0 0.0
        %1401 = vmatpush1.xpose.msra.mxu0 0.0
        %1402 = vmatprep.subr.mxu0 0.0
        %1403 = vmatpush1.xpose.msra.mxu0 0.0
        %1404 = vmatprep.subr.mxu0 0.0
        %1405 = vmatpush1.xpose.msra.mxu0 0.0
        %1406 = vmatprep.subr.mxu0 0.0
        %1407 = vmatpush1.xpose.msra.mxu0 0.0
        %1408 = vmatprep.subr.mxu0 0.0
        %1409 = vmatpush1.xpose.msra.mxu0 0.0
        %1410 = vmatprep.subr.mxu0 0.0
        %1411 = vmatpush1.xpose.msra.mxu0 0.0
        %1412 = vmatprep.subr.mxu0 0.0
        %1413 = vmatpush1.xpose.msra.mxu0 0.0
        %1414 = vmatprep.subr.mxu0 0.0
        %1415 = vmatpush1.xpose.msra.mxu0 0.0
        %1416 = vmatprep.subr.mxu0 0.0
        %1417 = vmatpush1.xpose.msra.mxu0 0.0
        %1418 = vmatprep.subr.mxu0 0.0
        %1419 = vmatpush1.xpose.msra.mxu0 0.0
        %1420 = vmatprep.subr.mxu0 0.0
        %1421 = vmatpush1.xpose.msra.mxu0 0.0
        %1422 = vmatprep.subr.mxu0 0.0
        %1423 = vmatpush1.xpose.msra.mxu0 0.0
        %1424 = vmatprep.subr.mxu0 0.0
        %1425 = vmatpush1.xpose.msra.mxu0 0.0
        %1426 = vmatprep.subr.mxu0 0.0
        %1427 = vmatpush1.xpose.msra.mxu0 0.0
        %1428 = vmatprep.subr.mxu0 0.0
        %1429 = vmatpush1.xpose.msra.mxu0 0.0
        %1430 = vmatprep.subr.mxu0 0.0
        %1431 = vmatpush1.xpose.msra.mxu0 0.0
        %1432 = vmatprep.subr.mxu0 0.0
        %1433 = vmatpush1.xpose.msra.mxu0 0.0
        %1434 = vmatprep.subr.mxu0 0.0
        %1435 = vmatpush1.xpose.msra.mxu0 0.0
        %1436 = vmatprep.subr.mxu0 0.0
        %1437 = vmatpush1.xpose.msra.mxu0 0.0
        %1438 = vmatprep.subr.mxu0 0.0
        %1439 = vmatpush1.xpose.msra.mxu0 0.0
        %1440 = vmatprep.subr.mxu0 0.0
        %1441 = vmatpush1.xpose.msra.mxu0 0.0
        %1442 = vmatprep.mubr.f32.mxu0 0.0
        %1443 = vmatmul.mubr.f32.gmra.mrb[0].mxu0 %v1366
        %v1444 = vpop.f32.mrb[0].mxu0
        %v1445 = vadd.f32 0.0, %v1444
        %v1446 = vpop.f32.mrb[0].mxu0
        %1447 = vmatprep.mubr.f32.mxu0 0.0
        %1448 = vmatmul.mubr.f32.gmra.mrb[0].mxu0 %v1368
        %v1449 = vpop.f32.mrb[0].mxu0
        %v1450 = vadd.f32 0.0, %v1449
        %v1451 = vpop.f32.mrb[0].mxu0
        %1452 = vmatprep.mubr.f32.mxu0 0.0
        %1453 = vmatmul.mubr.f32.gmra.mrb[0].mxu0 %v1370
        %v1454 = vpop.f32.mrb[0].mxu0
        %v1455 = vadd.f32 0.0, %v1454
        %v1456 = vpop.f32.mrb[0].mxu0
        %1457 = vdwg.mxu0
        %v1458 = vmul.f32 %v1445, 0.35355338
        %v1459 = vmul.f32 %v1450, 0.35355338
        %v1460 = vmul.f32 %v1455, 0.35355338
        %v1461 = vadd.f32 %v1458, %v416
        %v1462 = vadd.f32 %v1459, %v416
        %v1463 = vadd.f32 %v1460, %v416
        %v1464 = vsel %vm809, %v1461, -inf
        %1465 = vmax.xlane.f32.xlu0 %v1464
        %v1466 = vpop.xlane.xlu0 %1465
        %v1467 = vsel %vm809, %v1462, -inf
        %1468 = vmax.xlane.f32.xlu0 %v1467
        %v1469 = vpop.xlane.xlu0 %1468
        %v1470 = vsel %vm809, %v1463, -inf
        %1471 = vmax.xlane.f32.xlu0 %v1470
        %v1472 = vpop.xlane.xlu0 %1471
        %v1473 = vsub.f32 %v1461, %v1466
        %v1474 = vsub.f32 %v1462, %v1469
        %v1475 = vsub.f32 %v1463, %v1472
        %v1476 = vmul.f32 %v1473, 1.442695
        %v1477 = vpow.pop %v1476
        %v1478 = vmul.f32 %v1474, 1.442695
        %v1479 = vpow.pop %v1478
        %v1480 = vmul.f32 %v1475, 1.442695
        %v1481 = vpow.pop %v1480
        %v1482 = vsel %vm809, %v1477, 0.0
        %1483 = vadd.xlane.f32.xlu0 %v1482
        %v1484 = vpop.xlane.xlu0 %1483
        %v1485 = vsel %vm809, %v1479, 0.0
        %1486 = vadd.xlane.f32.xlu0 %v1485
        %v1487 = vpop.xlane.xlu0 %1486
        %v1488 = vsel %vm809, %v1481, 0.0
        %1489 = vadd.xlane.f32.xlu0 %v1488
        %v1490 = vpop.xlane.xlu0 %1489
        %v1491 = vrcp.pop %v1484
        %v1492 = vmul.f32 %v1477, %v1491
        %v1493 = vrcp.pop %v1487
        %v1494 = vmul.f32 %v1479, %v1493
        %v1495 = vrcp.pop %v1490
        %v1496 = vmul.f32 %v1481, %v1495
        %1497 = vrot.lane.b32.xlu0 %v692, 112
        %v1498 = vpop.permute.xlu0 %1497
        %1499 = vrot.lane.b32.xlu0 %v697, 112
        %v1500 = vpop.permute.xlu0 %1499
        %1501 = vrot.lane.b32.xlu0 %v702, 112
        %v1502 = vpop.permute.xlu0 %1501
        %v1507 = vsel %vm809, %v1492, 0
        %v1510 = vsel %vm809, %v1494, 0
        %v1513 = vsel %vm809, %v1496, 0
        %1515 = vmatprep.subr.mxu0 0.0
        %1516 = vmatpush1.msra.mxu0 %v1498
        %1517 = vmatprep.subr.mxu0 0.0
        %1518 = vmatpush1.msra.mxu0 %v1500
        %1519 = vmatprep.subr.mxu0 0.0
        %1520 = vmatpush1.msra.mxu0 %v1502
        %1521 = vmatprep.subr.mxu0 0.0
        %1522 = vmatpush1.msra.mxu0 0.0
        %1523 = vmatprep.subr.mxu0 0.0
        %1524 = vmatpush1.msra.mxu0 0.0
        %1525 = vmatprep.subr.mxu0 0.0
        %1526 = vmatpush1.msra.mxu0 0.0
        %1527 = vmatprep.subr.mxu0 0.0
        %1528 = vmatpush1.msra.mxu0 0.0
        %1529 = vmatprep.subr.mxu0 0.0
        %1530 = vmatpush1.msra.mxu0 0.0
        %1531 = vmatprep.subr.mxu0 0.0
        %1532 = vmatpush1.msra.mxu0 0.0
        %1533 = vmatprep.subr.mxu0 0.0
        %1534 = vmatpush1.msra.mxu0 0.0
        %1535 = vmatprep.subr.mxu0 0.0
        %1536 = vmatpush1.msra.mxu0 0.0
        %1537 = vmatprep.subr.mxu0 0.0
        %1538 = vmatpush1.msra.mxu0 0.0
        %1539 = vmatprep.subr.mxu0 0.0
        %1540 = vmatpush1.msra.mxu0 0.0
        %1541 = vmatprep.subr.mxu0 0.0
        %1542 = vmatpush1.msra.mxu0 0.0
        %1543 = vmatprep.subr.mxu0 0.0
        %1544 = vmatpush1.msra.mxu0 0.0
        %1545 = vmatprep.subr.mxu0 0.0
        %1546 = vmatpush1.msra.mxu0 0.0
        %1547 = vmatprep.subr.mxu0 0.0
        %1548 = vmatpush1.msra.mxu0 0.0
        %1549 = vmatprep.subr.mxu0 0.0
        %1550 = vmatpush1.msra.mxu0 0.0
        %1551 = vmatprep.subr.mxu0 0.0
        %1552 = vmatpush1.msra.mxu0 0.0
        %1553 = vmatprep.subr.mxu0 0.0
        %1554 = vmatpush1.msra.mxu0 0.0
        %1555 = vmatprep.subr.mxu0 0.0
        %1556 = vmatpush1.msra.mxu0 0.0
        %1557 = vmatprep.subr.mxu0 0.0
        %1558 = vmatpush1.msra.mxu0 0.0
        %1559 = vmatprep.subr.mxu0 0.0
        %1560 = vmatpush1.msra.mxu0 0.0
        %1561 = vmatprep.subr.mxu0 0.0
        %1562 = vmatpush1.msra.mxu0 0.0
        %1563 = vmatprep.subr.mxu0 0.0
        %1564 = vmatpush1.msra.mxu0 0.0
        %1565 = vmatprep.subr.mxu0 0.0
        %1566 = vmatpush1.msra.mxu0 0.0
        %1567 = vmatprep.subr.mxu0 0.0
        %1568 = vmatpush1.msra.mxu0 0.0
        %1569 = vmatprep.subr.mxu0 0.0
        %1570 = vmatpush1.msra.mxu0 0.0
        %1571 = vmatprep.subr.mxu0 0.0
        %1572 = vmatpush1.msra.mxu0 0.0
        %1573 = vmatprep.subr.mxu0 0.0
        %1574 = vmatpush1.msra.mxu0 0.0
        %1575 = vmatprep.subr.mxu0 0.0
        %1576 = vmatpush1.msra.mxu0 0.0
        %1577 = vmatprep.subr.mxu0 0.0
        %1578 = vmatpush1.msra.mxu0 0.0
        %1579 = vmatprep.mubr.f32.mxu0 0.0
        %1580 = vmatmul.mubr.f32.gmra.mrb[0].mxu0 %v1507
        %v1581 = vpop.f32.mrb[0].mxu0
        %v1582 = vadd.f32 0.0, %v1581
        %v1583 = vpop.f32.mrb[0].mxu0
        %1584 = vmatprep.mubr.f32.mxu0 0.0
        %1585 = vmatmul.mubr.f32.gmra.mrb[0].mxu0 %v1510
        %v1586 = vpop.f32.mrb[0].mxu0
        %v1587 = vadd.f32 0.0, %v1586
        %v1588 = vpop.f32.mrb[0].mxu0
        %1589 = vmatprep.mubr.f32.mxu0 0.0
        %1590 = vmatmul.mubr.f32.gmra.mrb[0].mxu0 %v1513
        %v1591 = vpop.f32.mrb[0].mxu0
        %v1592 = vadd.f32 0.0, %v1591
        %v1593 = vpop.f32.mrb[0].mxu0
        %1594 = vdwg.mxu0
        %v1596 = vsel %vm323, %v1582, 0
        %v1599 = vsel %vm323, %v1587, 0
        %v1602 = vsel %vm323, %v1592, 0
        %1604 = vmatprep.subr.mxu0 0.0
        %1605 = vmatpush1.msra.mxu0 %v431
        %1606 = vmatprep.subr.mxu0 0.0
        %1607 = vmatpush1.msra.mxu0 0.0
        %1608 = vmatprep.subr.mxu0 0.0
        %1609 = vmatpush1.msra.mxu0 0.0
        %1610 = vmatprep.subr.mxu0 0.0
        %1611 = vmatpush1.msra.mxu0 0.0
        %1612 = vmatprep.subr.mxu0 0.0
        %1613 = vmatpush1.msra.mxu0 0.0
        %1614 = vmatprep.subr.mxu0 0.0
        %1615 = vmatpush1.msra.mxu0 0.0
        %1616 = vmatprep.subr.mxu0 0.0
        %1617 = vmatpush1.msra.mxu0 0.0
        %1618 = vmatprep.subr.mxu0 0.0
        %1619 = vmatpush1.msra.mxu0 0.0
        %1620 = vmatprep.subr.mxu0 0.0
        %1621 = vmatpush1.msra.mxu0 0.0
        %1622 = vmatprep.subr.mxu0 0.0
        %1623 = vmatpush1.msra.mxu0 0.0
        %1624 = vmatprep.subr.mxu0 0.0
        %1625 = vmatpush1.msra.mxu0 0.0
        %1626 = vmatprep.subr.mxu0 0.0
        %1627 = vmatpush1.msra.mxu0 0.0
        %1628 = vmatprep.subr.mxu0 0.0
        %1629 = vmatpush1.msra.mxu0 0.0
        %1630 = vmatprep.subr.mxu0 0.0
        %1631 = vmatpush1.msra.mxu0 0.0
        %1632 = vmatprep.subr.mxu0 0.0
        %1633 = vmatpush1.msra.mxu0 0.0
        %1634 = vmatprep.subr.mxu0 0.0
        %1635 = vmatpush1.msra.mxu0 0.0
        %1636 = vmatprep.subr.mxu0 0.0
        %1637 = vmatpush1.msra.mxu0 0.0
        %1638 = vmatprep.subr.mxu0 0.0
        %1639 = vmatpush1.msra.mxu0 0.0
        %1640 = vmatprep.subr.mxu0 0.0
        %1641 = vmatpush1.msra.mxu0 0.0
        %1642 = vmatprep.subr.mxu0 0.0
        %1643 = vmatpush1.msra.mxu0 0.0
        %1644 = vmatprep.subr.mxu0 0.0
        %1645 = vmatpush1.msra.mxu0 0.0
        %1646 = vmatprep.subr.mxu0 0.0
        %1647 = vmatpush1.msra.mxu0 0.0
        %1648 = vmatprep.subr.mxu0 0.0
        %1649 = vmatpush1.msra.mxu0 0.0
        %1650 = vmatprep.subr.mxu0 0.0
        %1651 = vmatpush1.msra.mxu0 0.0
        %1652 = vmatprep.subr.mxu0 0.0
        %1653 = vmatpush1.msra.mxu0 0.0
        %1654 = vmatprep.subr.mxu0 0.0
        %1655 = vmatpush1.msra.mxu0 0.0
        %1656 = vmatprep.subr.mxu0 0.0
        %1657 = vmatpush1.msra.mxu0 0.0
        %1658 = vmatprep.subr.mxu0 0.0
        %1659 = vmatpush1.msra.mxu0 0.0
        %1660 = vmatprep.subr.mxu0 0.0
        %1661 = vmatpush1.msra.mxu0 0.0
        %1662 = vmatprep.subr.mxu0 0.0
        %1663 = vmatpush1.msra.mxu0 0.0
        %1664 = vmatprep.subr.mxu0 0.0
        %1665 = vmatpush1.msra.mxu0 0.0
        %1666 = vmatprep.subr.mxu0 0.0
        %1667 = vmatpush1.msra.mxu0 0.0
        %1668 = vmatprep.mubr.f32.mxu0 0.0
        %1669 = vmatmul.mubr.f32.gmra.mrb[0].mxu0 %v1596
        %v1670 = vpop.f32.mrb[0].mxu0
        %v1671 = vadd.f32 0.0, %v1670
        %v1672 = vpop.f32.mrb[0].mxu0
        %1673 = vmatprep.mubr.f32.mxu0 0.0
        %1674 = vmatmul.mubr.f32.gmra.mrb[0].mxu0 %v1599
        %v1675 = vpop.f32.mrb[0].mxu0
        %v1676 = vadd.f32 0.0, %v1675
        %v1677 = vpop.f32.mrb[0].mxu0
        %1678 = vmatprep.mubr.f32.mxu0 0.0
        %1679 = vmatmul.mubr.f32.gmra.mrb[0].mxu0 %v1602
        %v1680 = vpop.f32.mrb[0].mxu0
        %v1681 = vadd.f32 0.0, %v1680
        %v1682 = vpop.f32.mrb[0].mxu0
        %1683 = vdwg.mxu0
        %v1684 = vadd.f32 %v1341, %v1671
        %v1685 = vadd.f32 %v1346, %v1676
        %v1686 = vadd.f32 %v1351, %v1681
        %1687 = vrot.lane.b32.xlu0 %v524, 104
        %v1688 = vpop.permute.xlu0 %1687
        %1689 = vrot.lane.b32.xlu0 %v529, 104
        %v1690 = vpop.permute.xlu0 %1689
        %1691 = vrot.lane.b32.xlu0 %v534, 104
        %v1692 = vpop.permute.xlu0 %1691
        %1693 = vrot.lane.b32.xlu0 %v608, 104
        %v1694 = vpop.permute.xlu0 %1693
        %1695 = vrot.lane.b32.xlu0 %v613, 104
        %v1696 = vpop.permute.xlu0 %1695
        %1697 = vrot.lane.b32.xlu0 %v618, 104
        %v1698 = vpop.permute.xlu0 %1697
        %v1699 = vsel %vm323, %v1688, 0
        %v1701 = vsel %vm323, %v1690, 0
        %v1703 = vsel %vm323, %v1692, 0
        %v1705 = vsel %vm323, %v1694, 0
        %v1707 = vsel %vm323, %v1696, 0
        %v1709 = vsel %vm323, %v1698, 0
        %1711 = vmatprep.subr.mxu0 0.0
        %1712 = vmatpush1.xpose.msra.mxu0 %v1705
        %1713 = vmatprep.subr.mxu0 0.0
        %1714 = vmatpush1.xpose.msra.mxu0 %v1707
        %1715 = vmatprep.subr.mxu0 0.0
        %1716 = vmatpush1.xpose.msra.mxu0 %v1709
        %1717 = vmatprep.subr.mxu0 0.0
        %1718 = vmatpush1.xpose.msra.mxu0 0.0
        %1719 = vmatprep.subr.mxu0 0.0
        %1720 = vmatpush1.xpose.msra.mxu0 0.0
        %1721 = vmatprep.subr.mxu0 0.0
        %1722 = vmatpush1.xpose.msra.mxu0 0.0
        %1723 = vmatprep.subr.mxu0 0.0
        %1724 = vmatpush1.xpose.msra.mxu0 0.0
        %1725 = vmatprep.subr.mxu0 0.0
        %1726 = vmatpush1.xpose.msra.mxu0 0.0
        %1727 = vmatprep.subr.mxu0 0.0
        %1728 = vmatpush1.xpose.msra.mxu0 0.0
        %1729 = vmatprep.subr.mxu0 0.0
        %1730 = vmatpush1.xpose.msra.mxu0 0.0
        %1731 = vmatprep.subr.mxu0 0.0
        %1732 = vmatpush1.xpose.msra.mxu0 0.0
        %1733 = vmatprep.subr.mxu0 0.0
        %1734 = vmatpush1.xpose.msra.mxu0 0.0
        %1735 = vmatprep.subr.mxu0 0.0
        %1736 = vmatpush1.xpose.msra.mxu0 0.0
        %1737 = vmatprep.subr.mxu0 0.0
        %1738 = vmatpush1.xpose.msra.mxu0 0.0
        %1739 = vmatprep.subr.mxu0 0.0
        %1740 = vmatpush1.xpose.msra.mxu0 0.0
        %1741 = vmatprep.subr.mxu0 0.0
        %1742 = vmatpush1.xpose.msra.mxu0 0.0
        %1743 = vmatprep.subr.mxu0 0.0
        %1744 = vmatpush1.xpose.msra.mxu0 0.0
        %1745 = vmatprep.subr.mxu0 0.0
        %1746 = vmatpush1.xpose.msra.mxu0 0.0
        %1747 = vmatprep.subr.mxu0 0.0
        %1748 = vmatpush1.xpose.msra.mxu0 0.0
        %1749 = vmatprep.subr.mxu0 0.0
        %1750 = vmatpush1.xpose.msra.mxu0 0.0
        %1751 = vmatprep.subr.mxu0 0.0
        %1752 = vmatpush1.xpose.msra.mxu0 0.0
        %1753 = vmatprep.subr.mxu0 0.0
        %1754 = vmatpush1.xpose.msra.mxu0 0.0
        %1755 = vmatprep.subr.mxu0 0.0
        %1756 = vmatpush1.xpose.msra.mxu0 0.0
        %1757 = vmatprep.subr.mxu0 0.0
        %1758 = vmatpush1.xpose.msra.mxu0 0.0
        %1759 = vmatprep.subr.mxu0 0.0
        %1760 = vmatpush1.xpose.msra.mxu0 0.0
        %1761 = vmatprep.subr.mxu0 0.0
        %1762 = vmatpush1.xpose.msra.mxu0 0.0
        %1763 = vmatprep.subr.mxu0 0.0
        %1764 = vmatpush1.xpose.msra.mxu0 0.0
        %1765 = vmatprep.subr.mxu0 0.0
        %1766 = vmatpush1.xpose.msra.mxu0 0.0
        %1767 = vmatprep.subr.mxu0 0.0
        %1768 = vmatpush1.xpose.msra.mxu0 0.0
        %1769 = vmatprep.subr.mxu0 0.0
        %1770 = vmatpush1.xpose.msra.mxu0 0.0
        %1771 = vmatprep.subr.mxu0 0.0
        %1772 = vmatpush1.xpose.msra.mxu0 0.0
        %1773 = vmatprep.subr.mxu0 0.0
        %1774 = vmatpush1.xpose.msra.mxu0 0.0
        %1775 = vmatprep.mubr.f32.mxu0 0.0
        %1776 = vmatmul.mubr.f32.gmra.mrb[0].mxu0 %v1699
        %v1777 = vpop.f32.mrb[0].mxu0
        %v1778 = vadd.f32 0.0, %v1777
        %v1779 = vpop.f32.mrb[0].mxu0
        %1780 = vmatprep.mubr.f32.mxu0 0.0
        %1781 = vmatmul.mubr.f32.gmra.mrb[0].mxu0 %v1701
        %v1782 = vpop.f32.mrb[0].mxu0
        %v1783 = vadd.f32 0.0, %v1782
        %v1784 = vpop.f32.mrb[0].mxu0
        %1785 = vmatprep.mubr.f32.mxu0 0.0
        %1786 = vmatmul.mubr.f32.gmra.mrb[0].mxu0 %v1703
        %v1787 = vpop.f32.mrb[0].mxu0
        %v1788 = vadd.f32 0.0, %v1787
        %v1789 = vpop.f32.mrb[0].mxu0
        %1790 = vdwg.mxu0
        %v1791 = vmul.f32 %v1778, 0.35355338
        %v1792 = vmul.f32 %v1783, 0.35355338
        %v1793 = vmul.f32 %v1788, 0.35355338
        %v1794 = vadd.f32 %v1791, %v416
        %v1795 = vadd.f32 %v1792, %v416
        %v1796 = vadd.f32 %v1793, %v416
        %v1797 = vsel %vm809, %v1794, -inf
        %1798 = vmax.xlane.f32.xlu0 %v1797
        %v1799 = vpop.xlane.xlu0 %1798
        %v1800 = vsel %vm809, %v1795, -inf
        %1801 = vmax.xlane.f32.xlu0 %v1800
        %v1802 = vpop.xlane.xlu0 %1801
        %v1803 = vsel %vm809, %v1796, -inf
        %1804 = vmax.xlane.f32.xlu0 %v1803
        %v1805 = vpop.xlane.xlu0 %1804
        %v1806 = vsub.f32 %v1794, %v1799
        %v1807 = vsub.f32 %v1795, %v1802
        %v1808 = vsub.f32 %v1796, %v1805
        %v1809 = vmul.f32 %v1806, 1.442695
        %v1810 = vpow.pop %v1809
        %v1811 = vmul.f32 %v1807, 1.442695
        %v1812 = vpow.pop %v1811
        %v1813 = vmul.f32 %v1808, 1.442695
        %v1814 = vpow.pop %v1813
        %v1815 = vsel %vm809, %v1810, 0.0
        %1816 = vadd.xlane.f32.xlu0 %v1815
        %v1817 = vpop.xlane.xlu0 %1816
        %v1818 = vsel %vm809, %v1812, 0.0
        %1819 = vadd.xlane.f32.xlu0 %v1818
        %v1820 = vpop.xlane.xlu0 %1819
        %v1821 = vsel %vm809, %v1814, 0.0
        %1822 = vadd.xlane.f32.xlu0 %v1821
        %v1823 = vpop.xlane.xlu0 %1822
        %v1824 = vrcp.pop %v1817
        %v1825 = vmul.f32 %v1810, %v1824
        %v1826 = vrcp.pop %v1820
        %v1827 = vmul.f32 %v1812, %v1826
        %v1828 = vrcp.pop %v1823
        %v1829 = vmul.f32 %v1814, %v1828
        %1830 = vrot.lane.b32.xlu0 %v692, 104
        %v1831 = vpop.permute.xlu0 %1830
        %1832 = vrot.lane.b32.xlu0 %v697, 104
        %v1833 = vpop.permute.xlu0 %1832
        %1834 = vrot.lane.b32.xlu0 %v702, 104
        %v1835 = vpop.permute.xlu0 %1834
        %v1840 = vsel %vm809, %v1825, 0
        %v1843 = vsel %vm809, %v1827, 0
        %v1846 = vsel %vm809, %v1829, 0
        %1848 = vmatprep.subr.mxu0 0.0
        %1849 = vmatpush1.msra.mxu0 %v1831
        %1850 = vmatprep.subr.mxu0 0.0
        %1851 = vmatpush1.msra.mxu0 %v1833
        %1852 = vmatprep.subr.mxu0 0.0
        %1853 = vmatpush1.msra.mxu0 %v1835
        %1854 = vmatprep.subr.mxu0 0.0
        %1855 = vmatpush1.msra.mxu0 0.0
        %1856 = vmatprep.subr.mxu0 0.0
        %1857 = vmatpush1.msra.mxu0 0.0
        %1858 = vmatprep.subr.mxu0 0.0
        %1859 = vmatpush1.msra.mxu0 0.0
        %1860 = vmatprep.subr.mxu0 0.0
        %1861 = vmatpush1.msra.mxu0 0.0
        %1862 = vmatprep.subr.mxu0 0.0
        %1863 = vmatpush1.msra.mxu0 0.0
        %1864 = vmatprep.subr.mxu0 0.0
        %1865 = vmatpush1.msra.mxu0 0.0
        %1866 = vmatprep.subr.mxu0 0.0
        %1867 = vmatpush1.msra.mxu0 0.0
        %1868 = vmatprep.subr.mxu0 0.0
        %1869 = vmatpush1.msra.mxu0 0.0
        %1870 = vmatprep.subr.mxu0 0.0
        %1871 = vmatpush1.msra.mxu0 0.0
        %1872 = vmatprep.subr.mxu0 0.0
        %1873 = vmatpush1.msra.mxu0 0.0
        %1874 = vmatprep.subr.mxu0 0.0
        %1875 = vmatpush1.msra.mxu0 0.0
        %1876 = vmatprep.subr.mxu0 0.0
        %1877 = vmatpush1.msra.mxu0 0.0
        %1878 = vmatprep.subr.mxu0 0.0
        %1879 = vmatpush1.msra.mxu0 0.0
        %1880 = vmatprep.subr.mxu0 0.0
        %1881 = vmatpush1.msra.mxu0 0.0
        %1882 = vmatprep.subr.mxu0 0.0
        %1883 = vmatpush1.msra.mxu0 0.0
        %1884 = vmatprep.subr.mxu0 0.0
        %1885 = vmatpush1.msra.mxu0 0.0
        %1886 = vmatprep.subr.mxu0 0.0
        %1887 = vmatpush1.msra.mxu0 0.0
        %1888 = vmatprep.subr.mxu0 0.0
        %1889 = vmatpush1.msra.mxu0 0.0
        %1890 = vmatprep.subr.mxu0 0.0
        %1891 = vmatpush1.msra.mxu0 0.0
        %1892 = vmatprep.subr.mxu0 0.0
        %1893 = vmatpush1.msra.mxu0 0.0
        %1894 = vmatprep.subr.mxu0 0.0
        %1895 = vmatpush1.msra.mxu0 0.0
        %1896 = vmatprep.subr.mxu0 0.0
        %1897 = vmatpush1.msra.mxu0 0.0
        %1898 = vmatprep.subr.mxu0 0.0
        %1899 = vmatpush1.msra.mxu0 0.0
        %1900 = vmatprep.subr.mxu0 0.0
        %1901 = vmatpush1.msra.mxu0 0.0
        %1902 = vmatprep.subr.mxu0 0.0
        %1903 = vmatpush1.msra.mxu0 0.0
        %1904 = vmatprep.subr.mxu0 0.0
        %1905 = vmatpush1.msra.mxu0 0.0
        %1906 = vmatprep.subr.mxu0 0.0
        %1907 = vmatpush1.msra.mxu0 0.0
        %1908 = vmatprep.subr.mxu0 0.0
        %1909 = vmatpush1.msra.mxu0 0.0
        %1910 = vmatprep.subr.mxu0 0.0
        %1911 = vmatpush1.msra.mxu0 0.0
        %1912 = vmatprep.mubr.f32.mxu0 0.0
        %1913 = vmatmul.mubr.f32.gmra.mrb[0].mxu0 %v1840
        %v1914 = vpop.f32.mrb[0].mxu0
        %v1915 = vadd.f32 0.0, %v1914
        %v1916 = vpop.f32.mrb[0].mxu0
        %1917 = vmatprep.mubr.f32.mxu0 0.0
        %1918 = vmatmul.mubr.f32.gmra.mrb[0].mxu0 %v1843
        %v1919 = vpop.f32.mrb[0].mxu0
        %v1920 = vadd.f32 0.0, %v1919
        %v1921 = vpop.f32.mrb[0].mxu0
        %1922 = vmatprep.mubr.f32.mxu0 0.0
        %1923 = vmatmul.mubr.f32.gmra.mrb[0].mxu0 %v1846
        %v1924 = vpop.f32.mrb[0].mxu0
        %v1925 = vadd.f32 0.0, %v1924
        %v1926 = vpop.f32.mrb[0].mxu0
        %1927 = vdwg.mxu0
        %v1929 = vsel %vm323, %v1915, 0
        %v1932 = vsel %vm323, %v1920, 0
        %v1935 = vsel %vm323, %v1925, 0
        %1937 = vmatprep.subr.mxu0 0.0
        %1938 = vmatpush1.msra.mxu0 %v432
        %1939 = vmatprep.subr.mxu0 0.0
        %1940 = vmatpush1.msra.mxu0 0.0
        %1941 = vmatprep.subr.mxu0 0.0
        %1942 = vmatpush1.msra.mxu0 0.0
        %1943 = vmatprep.subr.mxu0 0.0
        %1944 = vmatpush1.msra.mxu0 0.0
        %1945 = vmatprep.subr.mxu0 0.0
        %1946 = vmatpush1.msra.mxu0 0.0
        %1947 = vmatprep.subr.mxu0 0.0
        %1948 = vmatpush1.msra.mxu0 0.0
        %1949 = vmatprep.subr.mxu0 0.0
        %1950 = vmatpush1.msra.mxu0 0.0
        %1951 = vmatprep.subr.mxu0 0.0
        %1952 = vmatpush1.msra.mxu0 0.0
        %1953 = vmatprep.subr.mxu0 0.0
        %1954 = vmatpush1.msra.mxu0 0.0
        %1955 = vmatprep.subr.mxu0 0.0
        %1956 = vmatpush1.msra.mxu0 0.0
        %1957 = vmatprep.subr.mxu0 0.0
        %1958 = vmatpush1.msra.mxu0 0.0
        %1959 = vmatprep.subr.mxu0 0.0
        %1960 = vmatpush1.msra.mxu0 0.0
        %1961 = vmatprep.subr.mxu0 0.0
        %1962 = vmatpush1.msra.mxu0 0.0
        %1963 = vmatprep.subr.mxu0 0.0
        %1964 = vmatpush1.msra.mxu0 0.0
        %1965 = vmatprep.subr.mxu0 0.0
        %1966 = vmatpush1.msra.mxu0 0.0
        %1967 = vmatprep.subr.mxu0 0.0
        %1968 = vmatpush1.msra.mxu0 0.0
        %1969 = vmatprep.subr.mxu0 0.0
        %1970 = vmatpush1.msra.mxu0 0.0
        %1971 = vmatprep.subr.mxu0 0.0
        %1972 = vmatpush1.msra.mxu0 0.0
        %1973 = vmatprep.subr.mxu0 0.0
        %1974 = vmatpush1.msra.mxu0 0.0
        %1975 = vmatprep.subr.mxu0 0.0
        %1976 = vmatpush1.msra.mxu0 0.0
        %1977 = vmatprep.subr.mxu0 0.0
        %1978 = vmatpush1.msra.mxu0 0.0
        %1979 = vmatprep.subr.mxu0 0.0
        %1980 = vmatpush1.msra.mxu0 0.0
        %1981 = vmatprep.subr.mxu0 0.0
        %1982 = vmatpush1.msra.mxu0 0.0
        %1983 = vmatprep.subr.mxu0 0.0
        %1984 = vmatpush1.msra.mxu0 0.0
        %1985 = vmatprep.subr.mxu0 0.0
        %1986 = vmatpush1.msra.mxu0 0.0
        %1987 = vmatprep.subr.mxu0 0.0
        %1988 = vmatpush1.msra.mxu0 0.0
        %1989 = vmatprep.subr.mxu0 0.0
        %1990 = vmatpush1.msra.mxu0 0.0
        %1991 = vmatprep.subr.mxu0 0.0
        %1992 = vmatpush1.msra.mxu0 0.0
        %1993 = vmatprep.subr.mxu0 0.0
        %1994 = vmatpush1.msra.mxu0 0.0
        %1995 = vmatprep.subr.mxu0 0.0
        %1996 = vmatpush1.msra.mxu0 0.0
        %1997 = vmatprep.subr.mxu0 0.0
        %1998 = vmatpush1.msra.mxu0 0.0
        %1999 = vmatprep.subr.mxu0 0.0
        %2000 = vmatpush1.msra.mxu0 0.0
        %2001 = vmatprep.mubr.f32.mxu0 0.0
        %2002 = vmatmul.mubr.f32.gmra.mrb[0].mxu0 %v1929
        %v2003 = vpop.f32.mrb[0].mxu0
        %v2004 = vadd.f32 0.0, %v2003
        %v2005 = vpop.f32.mrb[0].mxu0
        %2006 = vmatprep.mubr.f32.mxu0 0.0
        %2007 = vmatmul.mubr.f32.gmra.mrb[0].mxu0 %v1932
        %v2008 = vpop.f32.mrb[0].mxu0
        %v2009 = vadd.f32 0.0, %v2008
        %v2010 = vpop.f32.mrb[0].mxu0
        %2011 = vmatprep.mubr.f32.mxu0 0.0
        %2012 = vmatmul.mubr.f32.gmra.mrb[0].mxu0 %v1935
        %v2013 = vpop.f32.mrb[0].mxu0
        %v2014 = vadd.f32 0.0, %v2013
        %v2015 = vpop.f32.mrb[0].mxu0
        %2016 = vdwg.mxu0
        %v2017 = vadd.f32 %v1684, %v2004
        %v2018 = vadd.f32 %v1685, %v2009
        %v2019 = vadd.f32 %v1686, %v2014
        %v2020 = vlaneseq
        %v2021 = vshrl.u32 %v2020, 7
        %v2022 = vsub.s32 3, %v2021
        %v2023 = vrot.slane %v441, %v2022
        %v2024 = vadd.f32 %v2017, %v2023
        %v2025 = vadd.f32 %v2018, %v2023
        %v2026 = vadd.f32 %v2019, %v2023
        %v2027 = vadd.f32 %v400, %v2024
        %v2028 = vadd.f32 %v405, %v2025
        %v2029 = vadd.f32 %v410, %v2026
        %v2030 = vsel %vm447, %v2027, 0.0
        %2031 = vadd.xlane.f32.xlu0 %v2030
        %v2032 = vpop.xlane.xlu0 %2031
        %v2033 = vsel %vm447, %v2028, 0.0
        %2034 = vadd.xlane.f32.xlu0 %v2033
        %v2035 = vpop.xlane.xlu0 %2034
        %v2036 = vsel %vm447, %v2029, 0.0
        %2037 = vadd.xlane.f32.xlu0 %v2036
        %v2038 = vpop.xlane.xlu0 %2037
        %v2039 = vrcp.pop 32.0
        %v2040 = vmul.f32 %v2032, %v2039
        %v2041 = vmul.f32 %v2035, %v2039
        %v2042 = vmul.f32 %v2038, %v2039
        %v2043 = vsub.f32 %v2027, %v2040
        %v2044 = vsub.f32 %v2028, %v2041
        %v2045 = vsub.f32 %v2029, %v2042
        %v2046 = vmul.f32 %v2043, %v2043
        %v2047 = vmul.f32 %v2044, %v2044
        %v2048 = vmul.f32 %v2045, %v2045
        %v2049 = vsel %vm447, %v2046, 0.0
        %2050 = vadd.xlane.f32.xlu0 %v2049
        %v2051 = vpop.xlane.xlu0 %2050
        %v2052 = vsel %vm447, %v2047, 0.0
        %2053 = vadd.xlane.f32.xlu0 %v2052
        %v2054 = vpop.xlane.xlu0 %2053
        %v2055 = vsel %vm447, %v2048, 0.0
        %2056 = vadd.xlane.f32.xlu0 %v2055
        %v2057 = vpop.xlane.xlu0 %2056
        %v2058 = vmul.f32 %v2051, %v2039
        %v2059 = vmul.f32 %v2054, %v2039
        %v2060 = vmul.f32 %v2057, %v2039
        %v2061 = vadd.f32 %v2058, 1e-05
        %v2062 = vadd.f32 %v2059, 1e-05
        %v2063 = vadd.f32 %v2060, 1e-05
        %v2064 = vrsqrt.pop %v2061
        %v2065 = vrsqrt.pop %v2062
        %v2066 = vrsqrt.pop %v2063
        %v2067 = vmul.f32 %v2043, %v2064
        %v2068 = vmul.f32 %v2044, %v2065
        %v2069 = vmul.f32 %v2045, %v2066
        %v2070 = vlaneseq
        %v2071 = vshrl.u32 %v2070, 7
        %v2072 = vsub.s32 6, %v2071
        %v2073 = vrot.slane %v441, %v2072
        %v2074 = vmul.f32 %v2067, %v2073
        %v2075 = vmul.f32 %v2068, %v2073
        %v2076 = vmul.f32 %v2069, %v2073
        %v2077 = vlaneseq
        %v2078 = vshrl.u32 %v2077, 7
        %v2079 = vsub.s32 7, %v2078
        %v2080 = vrot.slane %v441, %v2079
        %v2081 = vadd.f32 %v2074, %v2080
        %v2082 = vadd.f32 %v2075, %v2080
        %v2083 = vadd.f32 %v2076, %v2080
        %v2084 = vlaneseq
        %v2085 = vshrl.u32 %v2084, 7
        %v2086 = vsub.s32 4, %v2085
        %v2087 = vrot.slane %v441, %v2086
        %v2089 = vsel %vm447, %v2081, 0
        %v2092 = vsel %vm447, %v2082, 0
        %v2095 = vsel %vm447, %v2083, 0
        %2097 = vmatprep.subr.mxu0 0.0
        %2098 = vmatpush1.msra.mxu0 %v433
        %2099 = vmatprep.subr.mxu0 0.0
        %2100 = vmatpush1.msra.mxu0 %v434
        %2101 = vmatprep.subr.mxu0 0.0
        %2102 = vmatpush1.msra.mxu0 %v435
        %2103 = vmatprep.subr.mxu0 0.0
        %2104 = vmatpush1.msra.mxu0 %v436
        %2105 = vmatprep.subr.mxu0 0.0
        %2106 = vmatpush1.msra.mxu0 0.0
        %2107 = vmatprep.subr.mxu0 0.0
        %2108 = vmatpush1.msra.mxu0 0.0
        %2109 = vmatprep.subr.mxu0 0.0
        %2110 = vmatpush1.msra.mxu0 0.0
        %2111 = vmatprep.subr.mxu0 0.0
        %2112 = vmatpush1.msra.mxu0 0.0
        %2113 = vmatprep.subr.mxu0 0.0
        %2114 = vmatpush1.msra.mxu0 0.0
        %2115 = vmatprep.subr.mxu0 0.0
        %2116 = vmatpush1.msra.mxu0 0.0
        %2117 = vmatprep.subr.mxu0 0.0
        %2118 = vmatpush1.msra.mxu0 0.0
        %2119 = vmatprep.subr.mxu0 0.0
        %2120 = vmatpush1.msra.mxu0 0.0
        %2121 = vmatprep.subr.mxu0 0.0
        %2122 = vmatpush1.msra.mxu0 0.0
        %2123 = vmatprep.subr.mxu0 0.0
        %2124 = vmatpush1.msra.mxu0 0.0
        %2125 = vmatprep.subr.mxu0 0.0
        %2126 = vmatpush1.msra.mxu0 0.0
        %2127 = vmatprep.subr.mxu0 0.0
        %2128 = vmatpush1.msra.mxu0 0.0
        %2129 = vmatprep.subr.mxu0 0.0
        %2130 = vmatpush1.msra.mxu0 0.0
        %2131 = vmatprep.subr.mxu0 0.0
        %2132 = vmatpush1.msra.mxu0 0.0
        %2133 = vmatprep.subr.mxu0 0.0
        %2134 = vmatpush1.msra.mxu0 0.0
        %2135 = vmatprep.subr.mxu0 0.0
        %2136 = vmatpush1.msra.mxu0 0.0
        %2137 = vmatprep.subr.mxu0 0.0
        %2138 = vmatpush1.msra.mxu0 0.0
        %2139 = vmatprep.subr.mxu0 0.0
        %2140 = vmatpush1.msra.mxu0 0.0
        %2141 = vmatprep.subr.mxu0 0.0
        %2142 = vmatpush1.msra.mxu0 0.0
        %2143 = vmatprep.subr.mxu0 0.0
        %2144 = vmatpush1.msra.mxu0 0.0
        %2145 = vmatprep.subr.mxu0 0.0
        %2146 = vmatpush1.msra.mxu0 0.0
        %2147 = vmatprep.subr.mxu0 0.0
        %2148 = vmatpush1.msra.mxu0 0.0
        %2149 = vmatprep.subr.mxu0 0.0
        %2150 = vmatpush1.msra.mxu0 0.0
        %2151 = vmatprep.subr.mxu0 0.0
        %2152 = vmatpush1.msra.mxu0 0.0
        %2153 = vmatprep.subr.mxu0 0.0
        %2154 = vmatpush1.msra.mxu0 0.0
        %2155 = vmatprep.subr.mxu0 0.0
        %2156 = vmatpush1.msra.mxu0 0.0
        %2157 = vmatprep.subr.mxu0 0.0
        %2158 = vmatpush1.msra.mxu0 0.0
        %2159 = vmatprep.subr.mxu0 0.0
        %2160 = vmatpush1.msra.mxu0 0.0
        %2161 = vmatprep.mubr.f32.mxu0 0.0
        %2162 = vmatmul.mubr.f32.gmra.mrb[0].mxu0 %v2089
        %v2163 = vpop.f32.mrb[0].mxu0
        %v2164 = vadd.f32 %v2087, %v2163
        %v2165 = vpop.f32.mrb[0].mxu0
        %2166 = vmatprep.mubr.f32.mxu0 0.0
        %2167 = vmatmul.mubr.f32.gmra.mrb[0].mxu0 %v2092
        %v2168 = vpop.f32.mrb[0].mxu0
        %v2169 = vadd.f32 %v2087, %v2168
        %v2170 = vpop.f32.mrb[0].mxu0
        %2171 = vmatprep.mubr.f32.mxu0 0.0
        %2172 = vmatmul.mubr.f32.gmra.mrb[0].mxu0 %v2095
        %v2173 = vpop.f32.mrb[0].mxu0
        %v2174 = vadd.f32 %v2087, %v2173
        %v2175 = vpop.f32.mrb[0].mxu0
        %2176 = vdwg.mxu0
        %v2177 = vmax.f32 %v2164, 0.0
        %v2178 = vmax.f32 %v2169, 0.0
        %v2179 = vmax.f32 %v2174, 0.0
        %v2180 = vlaneseq
        %v2181 = vshrl.u32 %v2180, 7
        %v2182 = vsub.s32 5, %v2181
        %v2183 = vrot.slane %v441, %v2182
        %v2185 = vsel %vm447, %v2177, 0
        %v2188 = vsel %vm447, %v2178, 0
        %v2191 = vsel %vm447, %v2179, 0
        %2193 = vmatprep.subr.mxu0 0.0
        %2194 = vmatpush1.msra.mxu0 %v437
        %2195 = vmatprep.subr.mxu0 0.0
        %2196 = vmatpush1.msra.mxu0 %v438
        %2197 = vmatprep.subr.mxu0 0.0
        %2198 = vmatpush1.msra.mxu0 %v439
        %2199 = vmatprep.subr.mxu0 0.0
        %2200 = vmatpush1.msra.mxu0 %v440
        %2201 = vmatprep.subr.mxu0 0.0
        %2202 = vmatpush1.msra.mxu0 0.0
        %2203 = vmatprep.subr.mxu0 0.0
        %2204 = vmatpush1.msra.mxu0 0.0
        %2205 = vmatprep.subr.mxu0 0.0
        %2206 = vmatpush1.msra.mxu0 0.0
        %2207 = vmatprep.subr.mxu0 0.0
        %2208 = vmatpush1.msra.mxu0 0.0
        %2209 = vmatprep.subr.mxu0 0.0
        %2210 = vmatpush1.msra.mxu0 0.0
        %2211 = vmatprep.subr.mxu0 0.0
        %2212 = vmatpush1.msra.mxu0 0.0
        %2213 = vmatprep.subr.mxu0 0.0
        %2214 = vmatpush1.msra.mxu0 0.0
        %2215 = vmatprep.subr.mxu0 0.0
        %2216 = vmatpush1.msra.mxu0 0.0
        %2217 = vmatprep.subr.mxu0 0.0
        %2218 = vmatpush1.msra.mxu0 0.0
        %2219 = vmatprep.subr.mxu0 0.0
        %2220 = vmatpush1.msra.mxu0 0.0
        %2221 = vmatprep.subr.mxu0 0.0
        %2222 = vmatpush1.msra.mxu0 0.0
        %2223 = vmatprep.subr.mxu0 0.0
        %2224 = vmatpush1.msra.mxu0 0.0
        %2225 = vmatprep.subr.mxu0 0.0
        %2226 = vmatpush1.msra.mxu0 0.0
        %2227 = vmatprep.subr.mxu0 0.0
        %2228 = vmatpush1.msra.mxu0 0.0
        %2229 = vmatprep.subr.mxu0 0.0
        %2230 = vmatpush1.msra.mxu0 0.0
        %2231 = vmatprep.subr.mxu0 0.0
        %2232 = vmatpush1.msra.mxu0 0.0
        %2233 = vmatprep.subr.mxu0 0.0
        %2234 = vmatpush1.msra.mxu0 0.0
        %2235 = vmatprep.subr.mxu0 0.0
        %2236 = vmatpush1.msra.mxu0 0.0
        %2237 = vmatprep.subr.mxu0 0.0
        %2238 = vmatpush1.msra.mxu0 0.0
        %2239 = vmatprep.subr.mxu0 0.0
        %2240 = vmatpush1.msra.mxu0 0.0
        %2241 = vmatprep.subr.mxu0 0.0
        %2242 = vmatpush1.msra.mxu0 0.0
        %2243 = vmatprep.subr.mxu0 0.0
        %2244 = vmatpush1.msra.mxu0 0.0
        %2245 = vmatprep.subr.mxu0 0.0
        %2246 = vmatpush1.msra.mxu0 0.0
        %2247 = vmatprep.subr.mxu0 0.0
        %2248 = vmatpush1.msra.mxu0 0.0
        %2249 = vmatprep.subr.mxu0 0.0
        %2250 = vmatpush1.msra.mxu0 0.0
        %2251 = vmatprep.subr.mxu0 0.0
        %2252 = vmatpush1.msra.mxu0 0.0
        %2253 = vmatprep.subr.mxu0 0.0
        %2254 = vmatpush1.msra.mxu0 0.0
        %2255 = vmatprep.subr.mxu0 0.0
        %2256 = vmatpush1.msra.mxu0 0.0
        %2257 = vmatprep.mubr.f32.mxu0 0.0
        %2258 = vmatmul.mubr.f32.gmra.mrb[0].mxu0 %v2185
        %v2259 = vpop.f32.mrb[0].mxu0
        %v2260 = vadd.f32 %v2183, %v2259
        %v2261 = vpop.f32.mrb[0].mxu0
        %2262 = vmatprep.mubr.f32.mxu0 0.0
        %2263 = vmatmul.mubr.f32.gmra.mrb[0].mxu0 %v2188
        %v2264 = vpop.f32.mrb[0].mxu0
        %v2265 = vadd.f32 %v2183, %v2264
        %v2266 = vpop.f32.mrb[0].mxu0
        %2267 = vmatprep.mubr.f32.mxu0 0.0
        %2268 = vmatmul.mubr.f32.gmra.mrb[0].mxu0 %v2191
        %v2269 = vpop.f32.mrb[0].mxu0
        %v2270 = vadd.f32 %v2183, %v2269
        %v2271 = vpop.f32.mrb[0].mxu0
        %2272 = vdwg.mxu0
        %v2273 = vadd.f32 %v2081, %v2260
        %v2274 = vadd.f32 %v2082, %v2265
        %v2275 = vadd.f32 %v2083, %v2270
        %v2276 = vsel %vm447, %v2273, 0.0
        %2277 = vadd.xlane.f32.xlu0 %v2276
        %v2278 = vpop.xlane.xlu0 %2277
        %v2279 = vsel %vm447, %v2274, 0.0
        %2280 = vadd.xlane.f32.xlu0 %v2279
        %v2281 = vpop.xlane.xlu0 %2280
        %v2282 = vsel %vm447, %v2275, 0.0
        %2283 = vadd.xlane.f32.xlu0 %v2282
        %v2284 = vpop.xlane.xlu0 %2283
        %v2285 = vmul.f32 %v2278, %v2039
        %v2286 = vmul.f32 %v2281, %v2039
        %v2287 = vmul.f32 %v2284, %v2039
        %v2288 = vsub.f32 %v2273, %v2285
        %v2289 = vsub.f32 %v2274, %v2286
        %v2290 = vsub.f32 %v2275, %v2287
        %v2291 = vmul.f32 %v2288, %v2288
        %v2292 = vmul.f32 %v2289, %v2289
        %v2293 = vmul.f32 %v2290, %v2290
        %v2294 = vsel %vm447, %v2291, 0.0
        %2295 = vadd.xlane.f32.xlu0 %v2294
        %v2296 = vpop.xlane.xlu0 %2295
        %v2297 = vsel %vm447, %v2292, 0.0
        %2298 = vadd.xlane.f32.xlu0 %v2297
        %v2299 = vpop.xlane.xlu0 %2298
        %v2300 = vsel %vm447, %v2293, 0.0
        %2301 = vadd.xlane.f32.xlu0 %v2300
        %v2302 = vpop.xlane.xlu0 %2301
        %v2303 = vmul.f32 %v2296, %v2039
        %v2304 = vmul.f32 %v2299, %v2039
        %v2305 = vmul.f32 %v2302, %v2039
        %v2306 = vadd.f32 %v2303, 1e-05
        %v2307 = vadd.f32 %v2304, 1e-05
        %v2308 = vadd.f32 %v2305, 1e-05
        %v2309 = vrsqrt.pop %v2306
        %v2310 = vrsqrt.pop %v2307
        %v2311 = vrsqrt.pop %v2308
        %v2312 = vmul.f32 %v2288, %v2309
        %v2313 = vmul.f32 %v2289, %v2310
        %v2314 = vmul.f32 %v2290, %v2311
        %v2315 = vlaneseq
        %v2316 = vshrl.u32 %v2315, 7
        %v2317 = vsub.s32 0, %v2316
        %v2318 = vrot.slane %v442, %v2317
        %v2319 = vmul.f32 %v2312, %v2318
        %v2320 = vmul.f32 %v2313, %v2318
        %v2321 = vmul.f32 %v2314, %v2318
        %v2322 = vlaneseq
        %v2323 = vshrl.u32 %v2322, 7
        %v2324 = vsub.s32 1, %v2323
        %v2325 = vrot.slane %v442, %v2324
        %v2326 = vadd.f32 %v2319, %v2325
        %v2327 = vadd.f32 %v2320, %v2325
        %v2328 = vadd.f32 %v2321, %v2325
        %s2329 = scalar_lea.vmem %s3, 192
        %v2330 = vld [vmem:[%s2329] sm:$0xff]
        %v2331 = vld [vmem:[%s2329 + $0x8] sm:$0xff]
        %v2332 = vld [vmem:[%s2329 + $0x10] sm:$0xff]
        %v2333 = vld [vmem:[%s2329 + $0x18] sm:$0xff]
        %v2334 = vld [vmem:[%s2329 + $0x20] sm:$0xff]
        %v2335 = vld [vmem:[%s2329 + $0x28] sm:$0xff]
        %v2336 = vld [vmem:[%s2329 + $0x30] sm:$0xff]
        %v2337 = vld [vmem:[%s2329 + $0x38] sm:$0xff]
        %v2338 = vld [vmem:[%s2329 + $0x40] sm:$0xff]
        %v2339 = vld [vmem:[%s2329 + $0x48] sm:$0xff]
        %v2340 = vld [vmem:[%s2329 + $0x50] sm:$0xff]
        %v2341 = vld [vmem:[%s2329 + $0x58] sm:$0xff]
        %v2342 = vld [vmem:[%s2329 + $0x60] sm:$0xff]
        %v2343 = vld [vmem:[%s2329 + $0x68] sm:$0xff]
        %v2344 = vld [vmem:[%s2329 + $0x70] sm:$0xff]
        %v2345 = vld [vmem:[%s2329 + $0x78] sm:$0xff]
        %v2346 = vld [vmem:[%s2329 + $0x80] sm:$0xff]
        %v2347 = vld [vmem:[%s2329 + $0x88] sm:$0xff]
        %v2348 = vld [vmem:[%s2329 + $0x90] sm:$0xff]
        %v2349 = vld [vmem:[%s2329 + $0x98] sm:$0xff]
        %v2350 = vld [vmem:[%s2329 + $0xa0] sm:$0xff]
        %v2351 = vld [vmem:[%s2329 + $0xa8] sm:$0xff]
        %v2352 = vld [vmem:[%s2329 + $0xb0] sm:$0xff]
        %v2353 = vld [vmem:[%s2329 + $0xb8] sm:$0xff]
        %s2354 = scalar_lea.vmem %s4, 16
        %v2355 = vld [vmem:[%s2354] sm:$0xff]
        %v2356 = vld [vmem:[%s2354 + $0x8] sm:$0x3]
        %v2357 = vlaneseq
        %v2358 = vshrl.u32 %v2357, 7
        %v2359 = vsub.s32 0, %v2358
        %v2360 = vrot.slane %v2355, %v2359
        %v2362 = vsel %vm447, %v2326, 0
        %v2365 = vsel %vm447, %v2327, 0
        %v2368 = vsel %vm447, %v2328, 0
        %2370 = vmatprep.subr.mxu0 0.0
        %2371 = vmatpush1.msra.mxu0 %v2330
        %2372 = vmatprep.subr.mxu0 0.0
        %2373 = vmatpush1.msra.mxu0 %v2331
        %2374 = vmatprep.subr.mxu0 0.0
        %2375 = vmatpush1.msra.mxu0 %v2332
        %2376 = vmatprep.subr.mxu0 0.0
        %2377 = vmatpush1.msra.mxu0 %v2333
        %2378 = vmatprep.subr.mxu0 0.0
        %2379 = vmatpush1.msra.mxu0 0.0
        %2380 = vmatprep.subr.mxu0 0.0
        %2381 = vmatpush1.msra.mxu0 0.0
        %2382 = vmatprep.subr.mxu0 0.0
        %2383 = vmatpush1.msra.mxu0 0.0
        %2384 = vmatprep.subr.mxu0 0.0
        %2385 = vmatpush1.msra.mxu0 0.0
        %2386 = vmatprep.subr.mxu0 0.0
        %2387 = vmatpush1.msra.mxu0 0.0
        %2388 = vmatprep.subr.mxu0 0.0
        %2389 = vmatpush1.msra.mxu0 0.0
        %2390 = vmatprep.subr.mxu0 0.0
        %2391 = vmatpush1.msra.mxu0 0.0
        %2392 = vmatprep.subr.mxu0 0.0
        %2393 = vmatpush1.msra.mxu0 0.0
        %2394 = vmatprep.subr.mxu0 0.0
        %2395 = vmatpush1.msra.mxu0 0.0
        %2396 = vmatprep.subr.mxu0 0.0
        %2397 = vmatpush1.msra.mxu0 0.0
        %2398 = vmatprep.subr.mxu0 0.0
        %2399 = vmatpush1.msra.mxu0 0.0
        %2400 = vmatprep.subr.mxu0 0.0
        %2401 = vmatpush1.msra.mxu0 0.0
        %2402 = vmatprep.subr.mxu0 0.0
        %2403 = vmatpush1.msra.mxu0 0.0
        %2404 = vmatprep.subr.mxu0 0.0
        %2405 = vmatpush1.msra.mxu0 0.0
        %2406 = vmatprep.subr.mxu0 0.0
        %2407 = vmatpush1.msra.mxu0 0.0
        %2408 = vmatprep.subr.mxu0 0.0
        %2409 = vmatpush1.msra.mxu0 0.0
        %2410 = vmatprep.subr.mxu0 0.0
        %2411 = vmatpush1.msra.mxu0 0.0
        %2412 = vmatprep.subr.mxu0 0.0
        %2413 = vmatpush1.msra.mxu0 0.0
        %2414 = vmatprep.subr.mxu0 0.0
        %2415 = vmatpush1.msra.mxu0 0.0
        %2416 = vmatprep.subr.mxu0 0.0
        %2417 = vmatpush1.msra.mxu0 0.0
        %2418 = vmatprep.subr.mxu0 0.0
        %2419 = vmatpush1.msra.mxu0 0.0
        %2420 = vmatprep.subr.mxu0 0.0
        %2421 = vmatpush1.msra.mxu0 0.0
        %2422 = vmatprep.subr.mxu0 0.0
        %2423 = vmatpush1.msra.mxu0 0.0
        %2424 = vmatprep.subr.mxu0 0.0
        %2425 = vmatpush1.msra.mxu0 0.0
        %2426 = vmatprep.subr.mxu0 0.0
        %2427 = vmatpush1.msra.mxu0 0.0
        %2428 = vmatprep.subr.mxu0 0.0
        %2429 = vmatpush1.msra.mxu0 0.0
        %2430 = vmatprep.subr.mxu0 0.0
        %2431 = vmatpush1.msra.mxu0 0.0
        %2432 = vmatprep.subr.mxu0 0.0
        %2433 = vmatpush1.msra.mxu0 0.0
        %2434 = vmatprep.mubr.f32.mxu0 0.0
        %2435 = vmatmul.mubr.f32.gmra.mrb[0].mxu0 %v2362
        %v2436 = vpop.f32.mrb[0].mxu0
        %v2437 = vadd.f32 %v2360, %v2436
        %v2438 = vpop.f32.mrb[0].mxu0
        %2439 = vmatprep.mubr.f32.mxu0 0.0
        %2440 = vmatmul.mubr.f32.gmra.mrb[0].mxu0 %v2365
        %v2441 = vpop.f32.mrb[0].mxu0
        %v2442 = vadd.f32 %v2360, %v2441
        %v2443 = vpop.f32.mrb[0].mxu0
        %2444 = vmatprep.mubr.f32.mxu0 0.0
        %2445 = vmatmul.mubr.f32.gmra.mrb[0].mxu0 %v2368
        %v2446 = vpop.f32.mrb[0].mxu0
        %v2447 = vadd.f32 %v2360, %v2446
        %v2448 = vpop.f32.mrb[0].mxu0
        %2449 = vdwg.mxu0
        %v2450 = vlaneseq
        %v2451 = vshrl.u32 %v2450, 7
        %v2452 = vsub.s32 1, %v2451
        %v2453 = vrot.slane %v2355, %v2452
        %2454 = vmatprep.subr.mxu0 0.0
        %2455 = vmatpush1.msra.mxu0 %v2334
        %2456 = vmatprep.subr.mxu0 0.0
        %2457 = vmatpush1.msra.mxu0 %v2335
        %2458 = vmatprep.subr.mxu0 0.0
        %2459 = vmatpush1.msra.mxu0 %v2336
        %2460 = vmatprep.subr.mxu0 0.0
        %2461 = vmatpush1.msra.mxu0 %v2337
        %2462 = vmatprep.subr.mxu0 0.0
        %2463 = vmatpush1.msra.mxu0 0.0
        %2464 = vmatprep.subr.mxu0 0.0
        %2465 = vmatpush1.msra.mxu0 0.0
        %2466 = vmatprep.subr.mxu0 0.0
        %2467 = vmatpush1.msra.mxu0 0.0
        %2468 = vmatprep.subr.mxu0 0.0
        %2469 = vmatpush1.msra.mxu0 0.0
        %2470 = vmatprep.subr.mxu0 0.0
        %2471 = vmatpush1.msra.mxu0 0.0
        %2472 = vmatprep.subr.mxu0 0.0
        %2473 = vmatpush1.msra.mxu0 0.0
        %2474 = vmatprep.subr.mxu0 0.0
        %2475 = vmatpush1.msra.mxu0 0.0
        %2476 = vmatprep.subr.mxu0 0.0
        %2477 = vmatpush1.msra.mxu0 0.0
        %2478 = vmatprep.subr.mxu0 0.0
        %2479 = vmatpush1.msra.mxu0 0.0
        %2480 = vmatprep.subr.mxu0 0.0
        %2481 = vmatpush1.msra.mxu0 0.0
        %2482 = vmatprep.subr.mxu0 0.0
        %2483 = vmatpush1.msra.mxu0 0.0
        %2484 = vmatprep.subr.mxu0 0.0
        %2485 = vmatpush1.msra.mxu0 0.0
        %2486 = vmatprep.subr.mxu0 0.0
        %2487 = vmatpush1.msra.mxu0 0.0
        %2488 = vmatprep.subr.mxu0 0.0
        %2489 = vmatpush1.msra.mxu0 0.0
        %2490 = vmatprep.subr.mxu0 0.0
        %2491 = vmatpush1.msra.mxu0 0.0
        %2492 = vmatprep.subr.mxu0 0.0
        %2493 = vmatpush1.msra.mxu0 0.0
        %2494 = vmatprep.subr.mxu0 0.0
        %2495 = vmatpush1.msra.mxu0 0.0
        %2496 = vmatprep.subr.mxu0 0.0
        %2497 = vmatpush1.msra.mxu0 0.0
        %2498 = vmatprep.subr.mxu0 0.0
        %2499 = vmatpush1.msra.mxu0 0.0
        %2500 = vmatprep.subr.mxu0 0.0
        %2501 = vmatpush1.msra.mxu0 0.0
        %2502 = vmatprep.subr.mxu0 0.0
        %2503 = vmatpush1.msra.mxu0 0.0
        %2504 = vmatprep.subr.mxu0 0.0
        %2505 = vmatpush1.msra.mxu0 0.0
        %2506 = vmatprep.subr.mxu0 0.0
        %2507 = vmatpush1.msra.mxu0 0.0
        %2508 = vmatprep.subr.mxu0 0.0
        %2509 = vmatpush1.msra.mxu0 0.0
        %2510 = vmatprep.subr.mxu0 0.0
        %2511 = vmatpush1.msra.mxu0 0.0
        %2512 = vmatprep.subr.mxu0 0.0
        %2513 = vmatpush1.msra.mxu0 0.0
        %2514 = vmatprep.subr.mxu0 0.0
        %2515 = vmatpush1.msra.mxu0 0.0
        %2516 = vmatprep.subr.mxu0 0.0
        %2517 = vmatpush1.msra.mxu0 0.0
        %2518 = vmatprep.mubr.f32.mxu0 0.0
        %2519 = vmatmul.mubr.f32.gmra.mrb[0].mxu0 %v2362
        %v2520 = vpop.f32.mrb[0].mxu0
        %v2521 = vadd.f32 %v2453, %v2520
        %v2522 = vpop.f32.mrb[0].mxu0
        %2523 = vmatprep.mubr.f32.mxu0 0.0
        %2524 = vmatmul.mubr.f32.gmra.mrb[0].mxu0 %v2365
        %v2525 = vpop.f32.mrb[0].mxu0
        %v2526 = vadd.f32 %v2453, %v2525
        %v2527 = vpop.f32.mrb[0].mxu0
        %2528 = vmatprep.mubr.f32.mxu0 0.0
        %2529 = vmatmul.mubr.f32.gmra.mrb[0].mxu0 %v2368
        %v2530 = vpop.f32.mrb[0].mxu0
        %v2531 = vadd.f32 %v2453, %v2530
        %v2532 = vpop.f32.mrb[0].mxu0
        %2533 = vdwg.mxu0
        %v2534 = vlaneseq
        %v2535 = vshrl.u32 %v2534, 7
        %v2536 = vsub.s32 2, %v2535
        %v2537 = vrot.slane %v2355, %v2536
        %2538 = vmatprep.subr.mxu0 0.0
        %2539 = vmatpush1.msra.mxu0 %v2338
        %2540 = vmatprep.subr.mxu0 0.0
        %2541 = vmatpush1.msra.mxu0 %v2339
        %2542 = vmatprep.subr.mxu0 0.0
        %2543 = vmatpush1.msra.mxu0 %v2340
        %2544 = vmatprep.subr.mxu0 0.0
        %2545 = vmatpush1.msra.mxu0 %v2341
        %2546 = vmatprep.subr.mxu0 0.0
        %2547 = vmatpush1.msra.mxu0 0.0
        %2548 = vmatprep.subr.mxu0 0.0
        %2549 = vmatpush1.msra.mxu0 0.0
        %2550 = vmatprep.subr.mxu0 0.0
        %2551 = vmatpush1.msra.mxu0 0.0
        %2552 = vmatprep.subr.mxu0 0.0
        %2553 = vmatpush1.msra.mxu0 0.0
        %2554 = vmatprep.subr.mxu0 0.0
        %2555 = vmatpush1.msra.mxu0 0.0
        %2556 = vmatprep.subr.mxu0 0.0
        %2557 = vmatpush1.msra.mxu0 0.0
        %2558 = vmatprep.subr.mxu0 0.0
        %2559 = vmatpush1.msra.mxu0 0.0
        %2560 = vmatprep.subr.mxu0 0.0
        %2561 = vmatpush1.msra.mxu0 0.0
        %2562 = vmatprep.subr.mxu0 0.0
        %2563 = vmatpush1.msra.mxu0 0.0
        %2564 = vmatprep.subr.mxu0 0.0
        %2565 = vmatpush1.msra.mxu0 0.0
        %2566 = vmatprep.subr.mxu0 0.0
        %2567 = vmatpush1.msra.mxu0 0.0
        %2568 = vmatprep.subr.mxu0 0.0
        %2569 = vmatpush1.msra.mxu0 0.0
        %2570 = vmatprep.subr.mxu0 0.0
        %2571 = vmatpush1.msra.mxu0 0.0
        %2572 = vmatprep.subr.mxu0 0.0
        %2573 = vmatpush1.msra.mxu0 0.0
        %2574 = vmatprep.subr.mxu0 0.0
        %2575 = vmatpush1.msra.mxu0 0.0
        %2576 = vmatprep.subr.mxu0 0.0
        %2577 = vmatpush1.msra.mxu0 0.0
        %2578 = vmatprep.subr.mxu0 0.0
        %2579 = vmatpush1.msra.mxu0 0.0
        %2580 = vmatprep.subr.mxu0 0.0
        %2581 = vmatpush1.msra.mxu0 0.0
        %2582 = vmatprep.subr.mxu0 0.0
        %2583 = vmatpush1.msra.mxu0 0.0
        %2584 = vmatprep.subr.mxu0 0.0
        %2585 = vmatpush1.msra.mxu0 0.0
        %2586 = vmatprep.subr.mxu0 0.0
        %2587 = vmatpush1.msra.mxu0 0.0
        %2588 = vmatprep.subr.mxu0 0.0
        %2589 = vmatpush1.msra.mxu0 0.0
        %2590 = vmatprep.subr.mxu0 0.0
        %2591 = vmatpush1.msra.mxu0 0.0
        %2592 = vmatprep.subr.mxu0 0.0
        %2593 = vmatpush1.msra.mxu0 0.0
        %2594 = vmatprep.subr.mxu0 0.0
        %2595 = vmatpush1.msra.mxu0 0.0
        %2596 = vmatprep.subr.mxu0 0.0
        %2597 = vmatpush1.msra.mxu0 0.0
        %2598 = vmatprep.subr.mxu0 0.0
        %2599 = vmatpush1.msra.mxu0 0.0
        %2600 = vmatprep.subr.mxu0 0.0
        %2601 = vmatpush1.msra.mxu0 0.0
        %2602 = vmatprep.mubr.f32.mxu0 0.0
        %2603 = vmatmul.mubr.f32.gmra.mrb[0].mxu0 %v2362
        %v2604 = vpop.f32.mrb[0].mxu0
        %v2605 = vadd.f32 %v2537, %v2604
        %v2606 = vpop.f32.mrb[0].mxu0
        %2607 = vmatprep.mubr.f32.mxu0 0.0
        %2608 = vmatmul.mubr.f32.gmra.mrb[0].mxu0 %v2365
        %v2609 = vpop.f32.mrb[0].mxu0
        %v2610 = vadd.f32 %v2537, %v2609
        %v2611 = vpop.f32.mrb[0].mxu0
        %2612 = vmatprep.mubr.f32.mxu0 0.0
        %2613 = vmatmul.mubr.f32.gmra.mrb[0].mxu0 %v2368
        %v2614 = vpop.f32.mrb[0].mxu0
        %v2615 = vadd.f32 %v2537, %v2614
        %v2616 = vpop.f32.mrb[0].mxu0
        %2617 = vdwg.mxu0
        %v2619 = vsel %vm323, %v2437, 0
        %v2622 = vsel %vm323, %v2442, 0
        %v2625 = vsel %vm323, %v2447, 0
        %v2628 = vsel %vm323, %v2521, 0
        %v2631 = vsel %vm323, %v2526, 0
        %v2634 = vsel %vm323, %v2531, 0
        %2636 = vmatprep.subr.mxu0 0.0
        %2637 = vmatpush1.xpose.msra.mxu0 %v2628
        %2638 = vmatprep.subr.mxu0 0.0
        %2639 = vmatpush1.xpose.msra.mxu0 %v2631
        %2640 = vmatprep.subr.mxu0 0.0
        %2641 = vmatpush1.xpose.msra.mxu0 %v2634
        %2642 = vmatprep.subr.mxu0 0.0
        %2643 = vmatpush1.xpose.msra.mxu0 0.0
        %2644 = vmatprep.subr.mxu0 0.0
        %2645 = vmatpush1.xpose.msra.mxu0 0.0
        %2646 = vmatprep.subr.mxu0 0.0
        %2647 = vmatpush1.xpose.msra.mxu0 0.0
        %2648 = vmatprep.subr.mxu0 0.0
        %2649 = vmatpush1.xpose.msra.mxu0 0.0
        %2650 = vmatprep.subr.mxu0 0.0
        %2651 = vmatpush1.xpose.msra.mxu0 0.0
        %2652 = vmatprep.subr.mxu0 0.0
        %2653 = vmatpush1.xpose.msra.mxu0 0.0
        %2654 = vmatprep.subr.mxu0 0.0
        %2655 = vmatpush1.xpose.msra.mxu0 0.0
        %2656 = vmatprep.subr.mxu0 0.0
        %2657 = vmatpush1.xpose.msra.mxu0 0.0
        %2658 = vmatprep.subr.mxu0 0.0
        %2659 = vmatpush1.xpose.msra.mxu0 0.0
        %2660 = vmatprep.subr.mxu0 0.0
        %2661 = vmatpush1.xpose.msra.mxu0 0.0
        %2662 = vmatprep.subr.mxu0 0.0
        %2663 = vmatpush1.xpose.msra.mxu0 0.0
        %2664 = vmatprep.subr.mxu0 0.0
        %2665 = vmatpush1.xpose.msra.mxu0 0.0
        %2666 = vmatprep.subr.mxu0 0.0
        %2667 = vmatpush1.xpose.msra.mxu0 0.0
        %2668 = vmatprep.subr.mxu0 0.0
        %2669 = vmatpush1.xpose.msra.mxu0 0.0
        %2670 = vmatprep.subr.mxu0 0.0
        %2671 = vmatpush1.xpose.msra.mxu0 0.0
        %2672 = vmatprep.subr.mxu0 0.0
        %2673 = vmatpush1.xpose.msra.mxu0 0.0
        %2674 = vmatprep.subr.mxu0 0.0
        %2675 = vmatpush1.xpose.msra.mxu0 0.0
        %2676 = vmatprep.subr.mxu0 0.0
        %2677 = vmatpush1.xpose.msra.mxu0 0.0
        %2678 = vmatprep.subr.mxu0 0.0
        %2679 = vmatpush1.xpose.msra.mxu0 0.0
        %2680 = vmatprep.subr.mxu0 0.0
        %2681 = vmatpush1.xpose.msra.mxu0 0.0
        %2682 = vmatprep.subr.mxu0 0.0
        %2683 = vmatpush1.xpose.msra.mxu0 0.0
        %2684 = vmatprep.subr.mxu0 0.0
        %2685 = vmatpush1.xpose.msra.mxu0 0.0
        %2686 = vmatprep.subr.mxu0 0.0
        %2687 = vmatpush1.xpose.msra.mxu0 0.0
        %2688 = vmatprep.subr.mxu0 0.0
        %2689 = vmatpush1.xpose.msra.mxu0 0.0
        %2690 = vmatprep.subr.mxu0 0.0
        %2691 = vmatpush1.xpose.msra.mxu0 0.0
        %2692 = vmatprep.subr.mxu0 0.0
        %2693 = vmatpush1.xpose.msra.mxu0 0.0
        %2694 = vmatprep.subr.mxu0 0.0
        %2695 = vmatpush1.xpose.msra.mxu0 0.0
        %2696 = vmatprep.subr.mxu0 0.0
        %2697 = vmatpush1.xpose.msra.mxu0 0.0
        %2698 = vmatprep.subr.mxu0 0.0
        %2699 = vmatpush1.xpose.msra.mxu0 0.0
        %2700 = vmatprep.mubr.f32.mxu0 0.0
        %2701 = vmatmul.mubr.f32.gmra.mrb[0].mxu0 %v2619
        %v2702 = vpop.f32.mrb[0].mxu0
        %v2703 = vadd.f32 0.0, %v2702
        %v2704 = vpop.f32.mrb[0].mxu0
        %2705 = vmatprep.mubr.f32.mxu0 0.0
        %2706 = vmatmul.mubr.f32.gmra.mrb[0].mxu0 %v2622
        %v2707 = vpop.f32.mrb[0].mxu0
        %v2708 = vadd.f32 0.0, %v2707
        %v2709 = vpop.f32.mrb[0].mxu0
        %2710 = vmatprep.mubr.f32.mxu0 0.0
        %2711 = vmatmul.mubr.f32.gmra.mrb[0].mxu0 %v2625
        %v2712 = vpop.f32.mrb[0].mxu0
        %v2713 = vadd.f32 0.0, %v2712
        %v2714 = vpop.f32.mrb[0].mxu0
        %2715 = vdwg.mxu0
        %v2716 = vmul.f32 %v2703, 0.35355338
        %v2717 = vmul.f32 %v2708, 0.35355338
        %v2718 = vmul.f32 %v2713, 0.35355338
        %v2719 = vadd.f32 %v2716, %v416
        %v2720 = vadd.f32 %v2717, %v416
        %v2721 = vadd.f32 %v2718, %v416
        %v2722 = vsel %vm809, %v2719, -inf
        %2723 = vmax.xlane.f32.xlu0 %v2722
        %v2724 = vpop.xlane.xlu0 %2723
        %v2725 = vsel %vm809, %v2720, -inf
        %2726 = vmax.xlane.f32.xlu0 %v2725
        %v2727 = vpop.xlane.xlu0 %2726
        %v2728 = vsel %vm809, %v2721, -inf
        %2729 = vmax.xlane.f32.xlu0 %v2728
        %v2730 = vpop.xlane.xlu0 %2729
        %v2731 = vsub.f32 %v2719, %v2724
        %v2732 = vsub.f32 %v2720, %v2727
        %v2733 = vsub.f32 %v2721, %v2730
        %v2734 = vmul.f32 %v2731, 1.442695
        %v2735 = vpow.pop %v2734
        %v2736 = vmul.f32 %v2732, 1.442695
        %v2737 = vpow.pop %v2736
        %v2738 = vmul.f32 %v2733, 1.442695
        %v2739 = vpow.pop %v2738
        %v2740 = vsel %vm809, %v2735, 0.0
        %2741 = vadd.xlane.f32.xlu0 %v2740
        %v2742 = vpop.xlane.xlu0 %2741
        %v2743 = vsel %vm809, %v2737, 0.0
        %2744 = vadd.xlane.f32.xlu0 %v2743
        %v2745 = vpop.xlane.xlu0 %2744
        %v2746 = vsel %vm809, %v2739, 0.0
        %2747 = vadd.xlane.f32.xlu0 %v2746
        %v2748 = vpop.xlane.xlu0 %2747
        %v2749 = vrcp.pop %v2742
        %v2750 = vmul.f32 %v2735, %v2749
        %v2751 = vrcp.pop %v2745
        %v2752 = vmul.f32 %v2737, %v2751
        %v2753 = vrcp.pop %v2748
        %v2754 = vmul.f32 %v2739, %v2753
        %v2756 = vsel %vm809, %v2750, 0
        %v2759 = vsel %vm809, %v2752, 0
        %v2762 = vsel %vm809, %v2754, 0
        %2764 = vmatprep.subr.mxu0 0.0
        %2765 = vmatpush1.msra.mxu0 %v2605
        %2766 = vmatprep.subr.mxu0 0.0
        %2767 = vmatpush1.msra.mxu0 %v2610
        %2768 = vmatprep.subr.mxu0 0.0
        %2769 = vmatpush1.msra.mxu0 %v2615
        %2770 = vmatprep.subr.mxu0 0.0
        %2771 = vmatpush1.msra.mxu0 0.0
        %2772 = vmatprep.subr.mxu0 0.0
        %2773 = vmatpush1.msra.mxu0 0.0
        %2774 = vmatprep.subr.mxu0 0.0
        %2775 = vmatpush1.msra.mxu0 0.0
        %2776 = vmatprep.subr.mxu0 0.0
        %2777 = vmatpush1.msra.mxu0 0.0
        %2778 = vmatprep.subr.mxu0 0.0
        %2779 = vmatpush1.msra.mxu0 0.0
        %2780 = vmatprep.subr.mxu0 0.0
        %2781 = vmatpush1.msra.mxu0 0.0
        %2782 = vmatprep.subr.mxu0 0.0
        %2783 = vmatpush1.msra.mxu0 0.0
        %2784 = vmatprep.subr.mxu0 0.0
        %2785 = vmatpush1.msra.mxu0 0.0
        %2786 = vmatprep.subr.mxu0 0.0
        %2787 = vmatpush1.msra.mxu0 0.0
        %2788 = vmatprep.subr.mxu0 0.0
        %2789 = vmatpush1.msra.mxu0 0.0
        %2790 = vmatprep.subr.mxu0 0.0
        %2791 = vmatpush1.msra.mxu0 0.0
        %2792 = vmatprep.subr.mxu0 0.0
        %2793 = vmatpush1.msra.mxu0 0.0
        %2794 = vmatprep.subr.mxu0 0.0
        %2795 = vmatpush1.msra.mxu0 0.0
        %2796 = vmatprep.subr.mxu0 0.0
        %2797 = vmatpush1.msra.mxu0 0.0
        %2798 = vmatprep.subr.mxu0 0.0
        %2799 = vmatpush1.msra.mxu0 0.0
        %2800 = vmatprep.subr.mxu0 0.0
        %2801 = vmatpush1.msra.mxu0 0.0
        %2802 = vmatprep.subr.mxu0 0.0
        %2803 = vmatpush1.msra.mxu0 0.0
        %2804 = vmatprep.subr.mxu0 0.0
        %2805 = vmatpush1.msra.mxu0 0.0
        %2806 = vmatprep.subr.mxu0 0.0
        %2807 = vmatpush1.msra.mxu0 0.0
        %2808 = vmatprep.subr.mxu0 0.0
        %2809 = vmatpush1.msra.mxu0 0.0
        %2810 = vmatprep.subr.mxu0 0.0
        %2811 = vmatpush1.msra.mxu0 0.0
        %2812 = vmatprep.subr.mxu0 0.0
        %2813 = vmatpush1.msra.mxu0 0.0
        %2814 = vmatprep.subr.mxu0 0.0
        %2815 = vmatpush1.msra.mxu0 0.0
        %2816 = vmatprep.subr.mxu0 0.0
        %2817 = vmatpush1.msra.mxu0 0.0
        %2818 = vmatprep.subr.mxu0 0.0
        %2819 = vmatpush1.msra.mxu0 0.0
        %2820 = vmatprep.subr.mxu0 0.0
        %2821 = vmatpush1.msra.mxu0 0.0
        %2822 = vmatprep.subr.mxu0 0.0
        %2823 = vmatpush1.msra.mxu0 0.0
        %2824 = vmatprep.subr.mxu0 0.0
        %2825 = vmatpush1.msra.mxu0 0.0
        %2826 = vmatprep.subr.mxu0 0.0
        %2827 = vmatpush1.msra.mxu0 0.0
        %2828 = vmatprep.mubr.f32.mxu0 0.0
        %2829 = vmatmul.mubr.f32.gmra.mrb[0].mxu0 %v2756
        %v2830 = vpop.f32.mrb[0].mxu0
        %v2831 = vadd.f32 0.0, %v2830
        %v2832 = vpop.f32.mrb[0].mxu0
        %2833 = vmatprep.mubr.f32.mxu0 0.0
        %2834 = vmatmul.mubr.f32.gmra.mrb[0].mxu0 %v2759
        %v2835 = vpop.f32.mrb[0].mxu0
        %v2836 = vadd.f32 0.0, %v2835
        %v2837 = vpop.f32.mrb[0].mxu0
        %2838 = vmatprep.mubr.f32.mxu0 0.0
        %2839 = vmatmul.mubr.f32.gmra.mrb[0].mxu0 %v2762
        %v2840 = vpop.f32.mrb[0].mxu0
        %v2841 = vadd.f32 0.0, %v2840
        %v2842 = vpop.f32.mrb[0].mxu0
        %2843 = vdwg.mxu0
        %2844 = vrot.lane.b32.xlu0 %v2437, 120
        %v2845 = vpop.permute.xlu0 %2844
        %2846 = vrot.lane.b32.xlu0 %v2442, 120
        %v2847 = vpop.permute.xlu0 %2846
        %2848 = vrot.lane.b32.xlu0 %v2447, 120
        %v2849 = vpop.permute.xlu0 %2848
        %2850 = vrot.lane.b32.xlu0 %v2521, 120
        %v2851 = vpop.permute.xlu0 %2850
        %2852 = vrot.lane.b32.xlu0 %v2526, 120
        %v2853 = vpop.permute.xlu0 %2852
        %2854 = vrot.lane.b32.xlu0 %v2531, 120
        %v2855 = vpop.permute.xlu0 %2854
        %v2856 = vsel %vm323, %v2845, 0
        %v2858 = vsel %vm323, %v2847, 0
        %v2860 = vsel %vm323, %v2849, 0
        %v2862 = vsel %vm323, %v2851, 0
        %v2864 = vsel %vm323, %v2853, 0
        %v2866 = vsel %vm323, %v2855, 0
        %2868 = vmatprep.subr.mxu0 0.0
        %2869 = vmatpush1.xpose.msra.mxu0 %v2862
        %2870 = vmatprep.subr.mxu0 0.0
        %2871 = vmatpush1.xpose.msra.mxu0 %v2864
        %2872 = vmatprep.subr.mxu0 0.0
        %2873 = vmatpush1.xpose.msra.mxu0 %v2866
        %2874 = vmatprep.subr.mxu0 0.0
        %2875 = vmatpush1.xpose.msra.mxu0 0.0
        %2876 = vmatprep.subr.mxu0 0.0
        %2877 = vmatpush1.xpose.msra.mxu0 0.0
        %2878 = vmatprep.subr.mxu0 0.0
        %2879 = vmatpush1.xpose.msra.mxu0 0.0
        %2880 = vmatprep.subr.mxu0 0.0
        %2881 = vmatpush1.xpose.msra.mxu0 0.0
        %2882 = vmatprep.subr.mxu0 0.0
        %2883 = vmatpush1.xpose.msra.mxu0 0.0
        %2884 = vmatprep.subr.mxu0 0.0
        %2885 = vmatpush1.xpose.msra.mxu0 0.0
        %2886 = vmatprep.subr.mxu0 0.0
        %2887 = vmatpush1.xpose.msra.mxu0 0.0
        %2888 = vmatprep.subr.mxu0 0.0
        %2889 = vmatpush1.xpose.msra.mxu0 0.0
        %2890 = vmatprep.subr.mxu0 0.0
        %2891 = vmatpush1.xpose.msra.mxu0 0.0
        %2892 = vmatprep.subr.mxu0 0.0
        %2893 = vmatpush1.xpose.msra.mxu0 0.0
        %2894 = vmatprep.subr.mxu0 0.0
        %2895 = vmatpush1.xpose.msra.mxu0 0.0
        %2896 = vmatprep.subr.mxu0 0.0
        %2897 = vmatpush1.xpose.msra.mxu0 0.0
        %2898 = vmatprep.subr.mxu0 0.0
        %2899 = vmatpush1.xpose.msra.mxu0 0.0
        %2900 = vmatprep.subr.mxu0 0.0
        %2901 = vmatpush1.xpose.msra.mxu0 0.0
        %2902 = vmatprep.subr.mxu0 0.0
        %2903 = vmatpush1.xpose.msra.mxu0 0.0
        %2904 = vmatprep.subr.mxu0 0.0
        %2905 = vmatpush1.xpose.msra.mxu0 0.0
        %2906 = vmatprep.subr.mxu0 0.0
        %2907 = vmatpush1.xpose.msra.mxu0 0.0
        %2908 = vmatprep.subr.mxu0 0.0
        %2909 = vmatpush1.xpose.msra.mxu0 0.0
        %2910 = vmatprep.subr.mxu0 0.0
        %2911 = vmatpush1.xpose.msra.mxu0 0.0
        %2912 = vmatprep.subr.mxu0 0.0
        %2913 = vmatpush1.xpose.msra.mxu0 0.0
        %2914 = vmatprep.subr.mxu0 0.0
        %2915 = vmatpush1.xpose.msra.mxu0 0.0
        %2916 = vmatprep.subr.mxu0 0.0
        %2917 = vmatpush1.xpose.msra.mxu0 0.0
        %2918 = vmatprep.subr.mxu0 0.0
        %2919 = vmatpush1.xpose.msra.mxu0 0.0
        %2920 = vmatprep.subr.mxu0 0.0
        %2921 = vmatpush1.xpose.msra.mxu0 0.0
        %2922 = vmatprep.subr.mxu0 0.0
        %2923 = vmatpush1.xpose.msra.mxu0 0.0
        %2924 = vmatprep.subr.mxu0 0.0
        %2925 = vmatpush1.xpose.msra.mxu0 0.0
        %2926 = vmatprep.subr.mxu0 0.0
        %2927 = vmatpush1.xpose.msra.mxu0 0.0
        %2928 = vmatprep.subr.mxu0 0.0
        %2929 = vmatpush1.xpose.msra.mxu0 0.0
        %2930 = vmatprep.subr.mxu0 0.0
        %2931 = vmatpush1.xpose.msra.mxu0 0.0
        %2932 = vmatprep.mubr.f32.mxu0 0.0
        %2933 = vmatmul.mubr.f32.gmra.mrb[0].mxu0 %v2856
        %v2934 = vpop.f32.mrb[0].mxu0
        %v2935 = vadd.f32 0.0, %v2934
        %v2936 = vpop.f32.mrb[0].mxu0
        %2937 = vmatprep.mubr.f32.mxu0 0.0
        %2938 = vmatmul.mubr.f32.gmra.mrb[0].mxu0 %v2858
        %v2939 = vpop.f32.mrb[0].mxu0
        %v2940 = vadd.f32 0.0, %v2939
        %v2941 = vpop.f32.mrb[0].mxu0
        %2942 = vmatprep.mubr.f32.mxu0 0.0
        %2943 = vmatmul.mubr.f32.gmra.mrb[0].mxu0 %v2860
        %v2944 = vpop.f32.mrb[0].mxu0
        %v2945 = vadd.f32 0.0, %v2944
        %v2946 = vpop.f32.mrb[0].mxu0
        %2947 = vdwg.mxu0
        %v2948 = vmul.f32 %v2935, 0.35355338
        %v2949 = vmul.f32 %v2940, 0.35355338
        %v2950 = vmul.f32 %v2945, 0.35355338
        %v2951 = vadd.f32 %v2948, %v416
        %v2952 = vadd.f32 %v2949, %v416
        %v2953 = vadd.f32 %v2950, %v416
        %v2954 = vsel %vm809, %v2951, -inf
        %2955 = vmax.xlane.f32.xlu0 %v2954
        %v2956 = vpop.xlane.xlu0 %2955
        %v2957 = vsel %vm809, %v2952, -inf
        %2958 = vmax.xlane.f32.xlu0 %v2957
        %v2959 = vpop.xlane.xlu0 %2958
        %v2960 = vsel %vm809, %v2953, -inf
        %2961 = vmax.xlane.f32.xlu0 %v2960
        %v2962 = vpop.xlane.xlu0 %2961
        %v2963 = vsub.f32 %v2951, %v2956
        %v2964 = vsub.f32 %v2952, %v2959
        %v2965 = vsub.f32 %v2953, %v2962
        %v2966 = vmul.f32 %v2963, 1.442695
        %v2967 = vpow.pop %v2966
        %v2968 = vmul.f32 %v2964, 1.442695
        %v2969 = vpow.pop %v2968
        %v2970 = vmul.f32 %v2965, 1.442695
        %v2971 = vpow.pop %v2970
        %v2972 = vsel %vm809, %v2967, 0.0
        %2973 = vadd.xlane.f32.xlu0 %v2972
        %v2974 = vpop.xlane.xlu0 %2973
        %v2975 = vsel %vm809, %v2969, 0.0
        %2976 = vadd.xlane.f32.xlu0 %v2975
        %v2977 = vpop.xlane.xlu0 %2976
        %v2978 = vsel %vm809, %v2971, 0.0
        %2979 = vadd.xlane.f32.xlu0 %v2978
        %v2980 = vpop.xlane.xlu0 %2979
        %v2981 = vrcp.pop %v2974
        %v2982 = vmul.f32 %v2967, %v2981
        %v2983 = vrcp.pop %v2977
        %v2984 = vmul.f32 %v2969, %v2983
        %v2985 = vrcp.pop %v2980
        %v2986 = vmul.f32 %v2971, %v2985
        %2990 = vrot.lane.b32.xlu0 %v2605, 120
        %v2991 = vpop.permute.xlu0 %2990
        %2992 = vrot.lane.b32.xlu0 %v2610, 120
        %v2993 = vpop.permute.xlu0 %2992
        %2994 = vrot.lane.b32.xlu0 %v2615, 120
        %v2995 = vpop.permute.xlu0 %2994
        %v3000 = vsel %vm809, %v2982, 0
        %v3003 = vsel %vm809, %v2984, 0
        %v3006 = vsel %vm809, %v2986, 0
        %3008 = vmatprep.subr.mxu0 0.0
        %3009 = vmatpush1.msra.mxu0 %v2991
        %3010 = vmatprep.subr.mxu0 0.0
        %3011 = vmatpush1.msra.mxu0 %v2993
        %3012 = vmatprep.subr.mxu0 0.0
        %3013 = vmatpush1.msra.mxu0 %v2995
        %3014 = vmatprep.subr.mxu0 0.0
        %3015 = vmatpush1.msra.mxu0 0.0
        %3016 = vmatprep.subr.mxu0 0.0
        %3017 = vmatpush1.msra.mxu0 0.0
        %3018 = vmatprep.subr.mxu0 0.0
        %3019 = vmatpush1.msra.mxu0 0.0
        %3020 = vmatprep.subr.mxu0 0.0
        %3021 = vmatpush1.msra.mxu0 0.0
        %3022 = vmatprep.subr.mxu0 0.0
        %3023 = vmatpush1.msra.mxu0 0.0
        %3024 = vmatprep.subr.mxu0 0.0
        %3025 = vmatpush1.msra.mxu0 0.0
        %3026 = vmatprep.subr.mxu0 0.0
        %3027 = vmatpush1.msra.mxu0 0.0
        %3028 = vmatprep.subr.mxu0 0.0
        %3029 = vmatpush1.msra.mxu0 0.0
        %3030 = vmatprep.subr.mxu0 0.0
        %3031 = vmatpush1.msra.mxu0 0.0
        %3032 = vmatprep.subr.mxu0 0.0
        %3033 = vmatpush1.msra.mxu0 0.0
        %3034 = vmatprep.subr.mxu0 0.0
        %3035 = vmatpush1.msra.mxu0 0.0
        %3036 = vmatprep.subr.mxu0 0.0
        %3037 = vmatpush1.msra.mxu0 0.0
        %3038 = vmatprep.subr.mxu0 0.0
        %3039 = vmatpush1.msra.mxu0 0.0
        %3040 = vmatprep.subr.mxu0 0.0
        %3041 = vmatpush1.msra.mxu0 0.0
        %3042 = vmatprep.subr.mxu0 0.0
        %3043 = vmatpush1.msra.mxu0 0.0
        %3044 = vmatprep.subr.mxu0 0.0
        %3045 = vmatpush1.msra.mxu0 0.0
        %3046 = vmatprep.subr.mxu0 0.0
        %3047 = vmatpush1.msra.mxu0 0.0
        %3048 = vmatprep.subr.mxu0 0.0
        %3049 = vmatpush1.msra.mxu0 0.0
        %3050 = vmatprep.subr.mxu0 0.0
        %3051 = vmatpush1.msra.mxu0 0.0
        %3052 = vmatprep.subr.mxu0 0.0
        %3053 = vmatpush1.msra.mxu0 0.0
        %3054 = vmatprep.subr.mxu0 0.0
        %3055 = vmatpush1.msra.mxu0 0.0
        %3056 = vmatprep.subr.mxu0 0.0
        %3057 = vmatpush1.msra.mxu0 0.0
        %3058 = vmatprep.subr.mxu0 0.0
        %3059 = vmatpush1.msra.mxu0 0.0
        %3060 = vmatprep.subr.mxu0 0.0
        %3061 = vmatpush1.msra.mxu0 0.0
        %3062 = vmatprep.subr.mxu0 0.0
        %3063 = vmatpush1.msra.mxu0 0.0
        %3064 = vmatprep.subr.mxu0 0.0
        %3065 = vmatpush1.msra.mxu0 0.0
        %3066 = vmatprep.subr.mxu0 0.0
        %3067 = vmatpush1.msra.mxu0 0.0
        %3068 = vmatprep.subr.mxu0 0.0
        %3069 = vmatpush1.msra.mxu0 0.0
        %3070 = vmatprep.subr.mxu0 0.0
        %3071 = vmatpush1.msra.mxu0 0.0
        %3072 = vmatprep.mubr.f32.mxu0 0.0
        %3073 = vmatmul.mubr.f32.gmra.mrb[0].mxu0 %v3000
        %v3074 = vpop.f32.mrb[0].mxu0
        %v3075 = vadd.f32 0.0, %v3074
        %v3076 = vpop.f32.mrb[0].mxu0
        %3077 = vmatprep.mubr.f32.mxu0 0.0
        %3078 = vmatmul.mubr.f32.gmra.mrb[0].mxu0 %v3003
        %v3079 = vpop.f32.mrb[0].mxu0
        %v3080 = vadd.f32 0.0, %v3079
        %v3081 = vpop.f32.mrb[0].mxu0
        %3082 = vmatprep.mubr.f32.mxu0 0.0
        %3083 = vmatmul.mubr.f32.gmra.mrb[0].mxu0 %v3006
        %v3084 = vpop.f32.mrb[0].mxu0
        %v3085 = vadd.f32 0.0, %v3084
        %v3086 = vpop.f32.mrb[0].mxu0
        %3087 = vdwg.mxu0
        %v3089 = vsel %vm323, %v3075, 0
        %v3092 = vsel %vm323, %v3080, 0
        %v3095 = vsel %vm323, %v3085, 0
        %3097 = vmatprep.subr.mxu0 0.0
        %3098 = vmatpush1.msra.mxu0 %v2343
        %3099 = vmatprep.subr.mxu0 0.0
        %3100 = vmatpush1.msra.mxu0 0.0
        %3101 = vmatprep.subr.mxu0 0.0
        %3102 = vmatpush1.msra.mxu0 0.0
        %3103 = vmatprep.subr.mxu0 0.0
        %3104 = vmatpush1.msra.mxu0 0.0
        %3105 = vmatprep.subr.mxu0 0.0
        %3106 = vmatpush1.msra.mxu0 0.0
        %3107 = vmatprep.subr.mxu0 0.0
        %3108 = vmatpush1.msra.mxu0 0.0
        %3109 = vmatprep.subr.mxu0 0.0
        %3110 = vmatpush1.msra.mxu0 0.0
        %3111 = vmatprep.subr.mxu0 0.0
        %3112 = vmatpush1.msra.mxu0 0.0
        %3113 = vmatprep.subr.mxu0 0.0
        %3114 = vmatpush1.msra.mxu0 0.0
        %3115 = vmatprep.subr.mxu0 0.0
        %3116 = vmatpush1.msra.mxu0 0.0
        %3117 = vmatprep.subr.mxu0 0.0
        %3118 = vmatpush1.msra.mxu0 0.0
        %3119 = vmatprep.subr.mxu0 0.0
        %3120 = vmatpush1.msra.mxu0 0.0
        %3121 = vmatprep.subr.mxu0 0.0
        %3122 = vmatpush1.msra.mxu0 0.0
        %3123 = vmatprep.subr.mxu0 0.0
        %3124 = vmatpush1.msra.mxu0 0.0
        %3125 = vmatprep.subr.mxu0 0.0
        %3126 = vmatpush1.msra.mxu0 0.0
        %3127 = vmatprep.subr.mxu0 0.0
        %3128 = vmatpush1.msra.mxu0 0.0
        %3129 = vmatprep.subr.mxu0 0.0
        %3130 = vmatpush1.msra.mxu0 0.0
        %3131 = vmatprep.subr.mxu0 0.0
        %3132 = vmatpush1.msra.mxu0 0.0
        %3133 = vmatprep.subr.mxu0 0.0
        %3134 = vmatpush1.msra.mxu0 0.0
        %3135 = vmatprep.subr.mxu0 0.0
        %3136 = vmatpush1.msra.mxu0 0.0
        %3137 = vmatprep.subr.mxu0 0.0
        %3138 = vmatpush1.msra.mxu0 0.0
        %3139 = vmatprep.subr.mxu0 0.0
        %3140 = vmatpush1.msra.mxu0 0.0
        %3141 = vmatprep.subr.mxu0 0.0
        %3142 = vmatpush1.msra.mxu0 0.0
        %3143 = vmatprep.subr.mxu0 0.0
        %3144 = vmatpush1.msra.mxu0 0.0
        %3145 = vmatprep.subr.mxu0 0.0
        %3146 = vmatpush1.msra.mxu0 0.0
        %3147 = vmatprep.subr.mxu0 0.0
        %3148 = vmatpush1.msra.mxu0 0.0
        %3149 = vmatprep.subr.mxu0 0.0
        %3150 = vmatpush1.msra.mxu0 0.0
        %3151 = vmatprep.subr.mxu0 0.0
        %3152 = vmatpush1.msra.mxu0 0.0
        %3153 = vmatprep.subr.mxu0 0.0
        %3154 = vmatpush1.msra.mxu0 0.0
        %3155 = vmatprep.subr.mxu0 0.0
        %3156 = vmatpush1.msra.mxu0 0.0
        %3157 = vmatprep.subr.mxu0 0.0
        %3158 = vmatpush1.msra.mxu0 0.0
        %3159 = vmatprep.subr.mxu0 0.0
        %3160 = vmatpush1.msra.mxu0 0.0
        %3161 = vmatprep.mubr.f32.mxu0 0.0
        %3162 = vmatmul.mubr.f32.gmra.mrb[0].mxu0 %v3089
        %v3163 = vpop.f32.mrb[0].mxu0
        %v3164 = vadd.f32 0.0, %v3163
        %v3165 = vpop.f32.mrb[0].mxu0
        %3166 = vmatprep.mubr.f32.mxu0 0.0
        %3167 = vmatmul.mubr.f32.gmra.mrb[0].mxu0 %v3092
        %v3168 = vpop.f32.mrb[0].mxu0
        %v3169 = vadd.f32 0.0, %v3168
        %v3170 = vpop.f32.mrb[0].mxu0
        %3171 = vmatprep.mubr.f32.mxu0 0.0
        %3172 = vmatmul.mubr.f32.gmra.mrb[0].mxu0 %v3095
        %v3173 = vpop.f32.mrb[0].mxu0
        %v3174 = vadd.f32 0.0, %v3173
        %v3175 = vpop.f32.mrb[0].mxu0
        %3176 = vdwg.mxu0
        %v3178 = vsel %vm323, %v2831, 0
        %v3181 = vsel %vm323, %v2836, 0
        %v3184 = vsel %vm323, %v2841, 0
        %3186 = vmatprep.subr.mxu0 0.0
        %3187 = vmatpush1.msra.mxu0 %v2342
        %3188 = vmatprep.subr.mxu0 0.0
        %3189 = vmatpush1.msra.mxu0 0.0
        %3190 = vmatprep.subr.mxu0 0.0
        %3191 = vmatpush1.msra.mxu0 0.0
        %3192 = vmatprep.subr.mxu0 0.0
        %3193 = vmatpush1.msra.mxu0 0.0
        %3194 = vmatprep.subr.mxu0 0.0
        %3195 = vmatpush1.msra.mxu0 0.0
        %3196 = vmatprep.subr.mxu0 0.0
        %3197 = vmatpush1.msra.mxu0 0.0
        %3198 = vmatprep.subr.mxu0 0.0
        %3199 = vmatpush1.msra.mxu0 0.0
        %3200 = vmatprep.subr.mxu0 0.0
        %3201 = vmatpush1.msra.mxu0 0.0
        %3202 = vmatprep.subr.mxu0 0.0
        %3203 = vmatpush1.msra.mxu0 0.0
        %3204 = vmatprep.subr.mxu0 0.0
        %3205 = vmatpush1.msra.mxu0 0.0
        %3206 = vmatprep.subr.mxu0 0.0
        %3207 = vmatpush1.msra.mxu0 0.0
        %3208 = vmatprep.subr.mxu0 0.0
        %3209 = vmatpush1.msra.mxu0 0.0
        %3210 = vmatprep.subr.mxu0 0.0
        %3211 = vmatpush1.msra.mxu0 0.0
        %3212 = vmatprep.subr.mxu0 0.0
        %3213 = vmatpush1.msra.mxu0 0.0
        %3214 = vmatprep.subr.mxu0 0.0
        %3215 = vmatpush1.msra.mxu0 0.0
        %3216 = vmatprep.subr.mxu0 0.0
        %3217 = vmatpush1.msra.mxu0 0.0
        %3218 = vmatprep.subr.mxu0 0.0
        %3219 = vmatpush1.msra.mxu0 0.0
        %3220 = vmatprep.subr.mxu0 0.0
        %3221 = vmatpush1.msra.mxu0 0.0
        %3222 = vmatprep.subr.mxu0 0.0
        %3223 = vmatpush1.msra.mxu0 0.0
        %3224 = vmatprep.subr.mxu0 0.0
        %3225 = vmatpush1.msra.mxu0 0.0
        %3226 = vmatprep.subr.mxu0 0.0
        %3227 = vmatpush1.msra.mxu0 0.0
        %3228 = vmatprep.subr.mxu0 0.0
        %3229 = vmatpush1.msra.mxu0 0.0
        %3230 = vmatprep.subr.mxu0 0.0
        %3231 = vmatpush1.msra.mxu0 0.0
        %3232 = vmatprep.subr.mxu0 0.0
        %3233 = vmatpush1.msra.mxu0 0.0
        %3234 = vmatprep.subr.mxu0 0.0
        %3235 = vmatpush1.msra.mxu0 0.0
        %3236 = vmatprep.subr.mxu0 0.0
        %3237 = vmatpush1.msra.mxu0 0.0
        %3238 = vmatprep.subr.mxu0 0.0
        %3239 = vmatpush1.msra.mxu0 0.0
        %3240 = vmatprep.subr.mxu0 0.0
        %3241 = vmatpush1.msra.mxu0 0.0
        %3242 = vmatprep.subr.mxu0 0.0
        %3243 = vmatpush1.msra.mxu0 0.0
        %3244 = vmatprep.subr.mxu0 0.0
        %3245 = vmatpush1.msra.mxu0 0.0
        %3246 = vmatprep.subr.mxu0 0.0
        %3247 = vmatpush1.msra.mxu0 0.0
        %3248 = vmatprep.subr.mxu0 0.0
        %3249 = vmatpush1.msra.mxu0 0.0
        %3250 = vmatprep.mubr.f32.mxu0 0.0
        %3251 = vmatmul.mubr.f32.gmra.mrb[0].mxu0 %v3178
        %v3252 = vpop.f32.mrb[0].mxu0
        %v3253 = vadd.f32 %v3164, %v3252
        %v3254 = vpop.f32.mrb[0].mxu0
        %3255 = vmatprep.mubr.f32.mxu0 0.0
        %3256 = vmatmul.mubr.f32.gmra.mrb[0].mxu0 %v3181
        %v3257 = vpop.f32.mrb[0].mxu0
        %v3258 = vadd.f32 %v3169, %v3257
        %v3259 = vpop.f32.mrb[0].mxu0
        %3260 = vmatprep.mubr.f32.mxu0 0.0
        %3261 = vmatmul.mubr.f32.gmra.mrb[0].mxu0 %v3184
        %v3262 = vpop.f32.mrb[0].mxu0
        %v3263 = vadd.f32 %v3174, %v3262
        %v3264 = vpop.f32.mrb[0].mxu0
        %3265 = vdwg.mxu0
        %3266 = vrot.lane.b32.xlu0 %v2437, 112
        %v3267 = vpop.permute.xlu0 %3266
        %3268 = vrot.lane.b32.xlu0 %v2442, 112
        %v3269 = vpop.permute.xlu0 %3268
        %3270 = vrot.lane.b32.xlu0 %v2447, 112
        %v3271 = vpop.permute.xlu0 %3270
        %3272 = vrot.lane.b32.xlu0 %v2521, 112
        %v3273 = vpop.permute.xlu0 %3272
        %3274 = vrot.lane.b32.xlu0 %v2526, 112
        %v3275 = vpop.permute.xlu0 %3274
        %3276 = vrot.lane.b32.xlu0 %v2531, 112
        %v3277 = vpop.permute.xlu0 %3276
        %v3278 = vsel %vm323, %v3267, 0
        %v3280 = vsel %vm323, %v3269, 0
        %v3282 = vsel %vm323, %v3271, 0
        %v3284 = vsel %vm323, %v3273, 0
        %v3286 = vsel %vm323, %v3275, 0
        %v3288 = vsel %vm323, %v3277, 0
        %3290 = vmatprep.subr.mxu0 0.0
        %3291 = vmatpush1.xpose.msra.mxu0 %v3284
        %3292 = vmatprep.subr.mxu0 0.0
        %3293 = vmatpush1.xpose.msra.mxu0 %v3286
        %3294 = vmatprep.subr.mxu0 0.0
        %3295 = vmatpush1.xpose.msra.mxu0 %v3288
        %3296 = vmatprep.subr.mxu0 0.0
        %3297 = vmatpush1.xpose.msra.mxu0 0.0
        %3298 = vmatprep.subr.mxu0 0.0
        %3299 = vmatpush1.xpose.msra.mxu0 0.0
        %3300 = vmatprep.subr.mxu0 0.0
        %3301 = vmatpush1.xpose.msra.mxu0 0.0
        %3302 = vmatprep.subr.mxu0 0.0
        %3303 = vmatpush1.xpose.msra.mxu0 0.0
        %3304 = vmatprep.subr.mxu0 0.0
        %3305 = vmatpush1.xpose.msra.mxu0 0.0
        %3306 = vmatprep.subr.mxu0 0.0
        %3307 = vmatpush1.xpose.msra.mxu0 0.0
        %3308 = vmatprep.subr.mxu0 0.0
        %3309 = vmatpush1.xpose.msra.mxu0 0.0
        %3310 = vmatprep.subr.mxu0 0.0
        %3311 = vmatpush1.xpose.msra.mxu0 0.0
        %3312 = vmatprep.subr.mxu0 0.0
        %3313 = vmatpush1.xpose.msra.mxu0 0.0
        %3314 = vmatprep.subr.mxu0 0.0
        %3315 = vmatpush1.xpose.msra.mxu0 0.0
        %3316 = vmatprep.subr.mxu0 0.0
        %3317 = vmatpush1.xpose.msra.mxu0 0.0
        %3318 = vmatprep.subr.mxu0 0.0
        %3319 = vmatpush1.xpose.msra.mxu0 0.0
        %3320 = vmatprep.subr.mxu0 0.0
        %3321 = vmatpush1.xpose.msra.mxu0 0.0
        %3322 = vmatprep.subr.mxu0 0.0
        %3323 = vmatpush1.xpose.msra.mxu0 0.0
        %3324 = vmatprep.subr.mxu0 0.0
        %3325 = vmatpush1.xpose.msra.mxu0 0.0
        %3326 = vmatprep.subr.mxu0 0.0
        %3327 = vmatpush1.xpose.msra.mxu0 0.0
        %3328 = vmatprep.subr.mxu0 0.0
        %3329 = vmatpush1.xpose.msra.mxu0 0.0
        %3330 = vmatprep.subr.mxu0 0.0
        %3331 = vmatpush1.xpose.msra.mxu0 0.0
        %3332 = vmatprep.subr.mxu0 0.0
        %3333 = vmatpush1.xpose.msra.mxu0 0.0
        %3334 = vmatprep.subr.mxu0 0.0
        %3335 = vmatpush1.xpose.msra.mxu0 0.0
        %3336 = vmatprep.subr.mxu0 0.0
        %3337 = vmatpush1.xpose.msra.mxu0 0.0
        %3338 = vmatprep.subr.mxu0 0.0
        %3339 = vmatpush1.xpose.msra.mxu0 0.0
        %3340 = vmatprep.subr.mxu0 0.0
        %3341 = vmatpush1.xpose.msra.mxu0 0.0
        %3342 = vmatprep.subr.mxu0 0.0
        %3343 = vmatpush1.xpose.msra.mxu0 0.0
        %3344 = vmatprep.subr.mxu0 0.0
        %3345 = vmatpush1.xpose.msra.mxu0 0.0
        %3346 = vmatprep.subr.mxu0 0.0
        %3347 = vmatpush1.xpose.msra.mxu0 0.0
        %3348 = vmatprep.subr.mxu0 0.0
        %3349 = vmatpush1.xpose.msra.mxu0 0.0
        %3350 = vmatprep.subr.mxu0 0.0
        %3351 = vmatpush1.xpose.msra.mxu0 0.0
        %3352 = vmatprep.subr.mxu0 0.0
        %3353 = vmatpush1.xpose.msra.mxu0 0.0
        %3354 = vmatprep.mubr.f32.mxu0 0.0
        %3355 = vmatmul.mubr.f32.gmra.mrb[0].mxu0 %v3278
        %v3356 = vpop.f32.mrb[0].mxu0
        %v3357 = vadd.f32 0.0, %v3356
        %v3358 = vpop.f32.mrb[0].mxu0
        %3359 = vmatprep.mubr.f32.mxu0 0.0
        %3360 = vmatmul.mubr.f32.gmra.mrb[0].mxu0 %v3280
        %v3361 = vpop.f32.mrb[0].mxu0
        %v3362 = vadd.f32 0.0, %v3361
        %v3363 = vpop.f32.mrb[0].mxu0
        %3364 = vmatprep.mubr.f32.mxu0 0.0
        %3365 = vmatmul.mubr.f32.gmra.mrb[0].mxu0 %v3282
        %v3366 = vpop.f32.mrb[0].mxu0
        %v3367 = vadd.f32 0.0, %v3366
        %v3368 = vpop.f32.mrb[0].mxu0
        %3369 = vdwg.mxu0
        %v3370 = vmul.f32 %v3357, 0.35355338
        %v3371 = vmul.f32 %v3362, 0.35355338
        %v3372 = vmul.f32 %v3367, 0.35355338
        %v3373 = vadd.f32 %v3370, %v416
        %v3374 = vadd.f32 %v3371, %v416
        %v3375 = vadd.f32 %v3372, %v416
        %v3376 = vsel %vm809, %v3373, -inf
        %3377 = vmax.xlane.f32.xlu0 %v3376
        %v3378 = vpop.xlane.xlu0 %3377
        %v3379 = vsel %vm809, %v3374, -inf
        %3380 = vmax.xlane.f32.xlu0 %v3379
        %v3381 = vpop.xlane.xlu0 %3380
        %v3382 = vsel %vm809, %v3375, -inf
        %3383 = vmax.xlane.f32.xlu0 %v3382
        %v3384 = vpop.xlane.xlu0 %3383
        %v3385 = vsub.f32 %v3373, %v3378
        %v3386 = vsub.f32 %v3374, %v3381
        %v3387 = vsub.f32 %v3375, %v3384
        %v3388 = vmul.f32 %v3385, 1.442695
        %v3389 = vpow.pop %v3388
        %v3390 = vmul.f32 %v3386, 1.442695
        %v3391 = vpow.pop %v3390
        %v3392 = vmul.f32 %v3387, 1.442695
        %v3393 = vpow.pop %v3392
        %v3394 = vsel %vm809, %v3389, 0.0
        %3395 = vadd.xlane.f32.xlu0 %v3394
        %v3396 = vpop.xlane.xlu0 %3395
        %v3397 = vsel %vm809, %v3391, 0.0
        %3398 = vadd.xlane.f32.xlu0 %v3397
        %v3399 = vpop.xlane.xlu0 %3398
        %v3400 = vsel %vm809, %v3393, 0.0
        %3401 = vadd.xlane.f32.xlu0 %v3400
        %v3402 = vpop.xlane.xlu0 %3401
        %v3403 = vrcp.pop %v3396
        %v3404 = vmul.f32 %v3389, %v3403
        %v3405 = vrcp.pop %v3399
        %v3406 = vmul.f32 %v3391, %v3405
        %v3407 = vrcp.pop %v3402
        %v3408 = vmul.f32 %v3393, %v3407
        %3409 = vrot.lane.b32.xlu0 %v2605, 112
        %v3410 = vpop.permute.xlu0 %3409
        %3411 = vrot.lane.b32.xlu0 %v2610, 112
        %v3412 = vpop.permute.xlu0 %3411
        %3413 = vrot.lane.b32.xlu0 %v2615, 112
        %v3414 = vpop.permute.xlu0 %3413
        %v3419 = vsel %vm809, %v3404, 0
        %v3422 = vsel %vm809, %v3406, 0
        %v3425 = vsel %vm809, %v3408, 0
        %3427 = vmatprep.subr.mxu0 0.0
        %3428 = vmatpush1.msra.mxu0 %v3410
        %3429 = vmatprep.subr.mxu0 0.0
        %3430 = vmatpush1.msra.mxu0 %v3412
        %3431 = vmatprep.subr.mxu0 0.0
        %3432 = vmatpush1.msra.mxu0 %v3414
        %3433 = vmatprep.subr.mxu0 0.0
        %3434 = vmatpush1.msra.mxu0 0.0
        %3435 = vmatprep.subr.mxu0 0.0
        %3436 = vmatpush1.msra.mxu0 0.0
        %3437 = vmatprep.subr.mxu0 0.0
        %3438 = vmatpush1.msra.mxu0 0.0
        %3439 = vmatprep.subr.mxu0 0.0
        %3440 = vmatpush1.msra.mxu0 0.0
        %3441 = vmatprep.subr.mxu0 0.0
        %3442 = vmatpush1.msra.mxu0 0.0
        %3443 = vmatprep.subr.mxu0 0.0
        %3444 = vmatpush1.msra.mxu0 0.0
        %3445 = vmatprep.subr.mxu0 0.0
        %3446 = vmatpush1.msra.mxu0 0.0
        %3447 = vmatprep.subr.mxu0 0.0
        %3448 = vmatpush1.msra.mxu0 0.0
        %3449 = vmatprep.subr.mxu0 0.0
        %3450 = vmatpush1.msra.mxu0 0.0
        %3451 = vmatprep.subr.mxu0 0.0
        %3452 = vmatpush1.msra.mxu0 0.0
        %3453 = vmatprep.subr.mxu0 0.0
        %3454 = vmatpush1.msra.mxu0 0.0
        %3455 = vmatprep.subr.mxu0 0.0
        %3456 = vmatpush1.msra.mxu0 0.0
        %3457 = vmatprep.subr.mxu0 0.0
        %3458 = vmatpush1.msra.mxu0 0.0
        %3459 = vmatprep.subr.mxu0 0.0
        %3460 = vmatpush1.msra.mxu0 0.0
        %3461 = vmatprep.subr.mxu0 0.0
        %3462 = vmatpush1.msra.mxu0 0.0
        %3463 = vmatprep.subr.mxu0 0.0
        %3464 = vmatpush1.msra.mxu0 0.0
        %3465 = vmatprep.subr.mxu0 0.0
        %3466 = vmatpush1.msra.mxu0 0.0
        %3467 = vmatprep.subr.mxu0 0.0
        %3468 = vmatpush1.msra.mxu0 0.0
        %3469 = vmatprep.subr.mxu0 0.0
        %3470 = vmatpush1.msra.mxu0 0.0
        %3471 = vmatprep.subr.mxu0 0.0
        %3472 = vmatpush1.msra.mxu0 0.0
        %3473 = vmatprep.subr.mxu0 0.0
        %3474 = vmatpush1.msra.mxu0 0.0
        %3475 = vmatprep.subr.mxu0 0.0
        %3476 = vmatpush1.msra.mxu0 0.0
        %3477 = vmatprep.subr.mxu0 0.0
        %3478 = vmatpush1.msra.mxu0 0.0
        %3479 = vmatprep.subr.mxu0 0.0
        %3480 = vmatpush1.msra.mxu0 0.0
        %3481 = vmatprep.subr.mxu0 0.0
        %3482 = vmatpush1.msra.mxu0 0.0
        %3483 = vmatprep.subr.mxu0 0.0
        %3484 = vmatpush1.msra.mxu0 0.0
        %3485 = vmatprep.subr.mxu0 0.0
        %3486 = vmatpush1.msra.mxu0 0.0
        %3487 = vmatprep.subr.mxu0 0.0
        %3488 = vmatpush1.msra.mxu0 0.0
        %3489 = vmatprep.subr.mxu0 0.0
        %3490 = vmatpush1.msra.mxu0 0.0
        %3491 = vmatprep.mubr.f32.mxu0 0.0
        %3492 = vmatmul.mubr.f32.gmra.mrb[0].mxu0 %v3419
        %v3493 = vpop.f32.mrb[0].mxu0
        %v3494 = vadd.f32 0.0, %v3493
        %v3495 = vpop.f32.mrb[0].mxu0
        %3496 = vmatprep.mubr.f32.mxu0 0.0
        %3497 = vmatmul.mubr.f32.gmra.mrb[0].mxu0 %v3422
        %v3498 = vpop.f32.mrb[0].mxu0
        %v3499 = vadd.f32 0.0, %v3498
        %v3500 = vpop.f32.mrb[0].mxu0
        %3501 = vmatprep.mubr.f32.mxu0 0.0
        %3502 = vmatmul.mubr.f32.gmra.mrb[0].mxu0 %v3425
        %v3503 = vpop.f32.mrb[0].mxu0
        %v3504 = vadd.f32 0.0, %v3503
        %v3505 = vpop.f32.mrb[0].mxu0
        %3506 = vdwg.mxu0
        %v3508 = vsel %vm323, %v3494, 0
        %v3511 = vsel %vm323, %v3499, 0
        %v3514 = vsel %vm323, %v3504, 0
        %3516 = vmatprep.subr.mxu0 0.0
        %3517 = vmatpush1.msra.mxu0 %v2344
        %3518 = vmatprep.subr.mxu0 0.0
        %3519 = vmatpush1.msra.mxu0 0.0
        %3520 = vmatprep.subr.mxu0 0.0
        %3521 = vmatpush1.msra.mxu0 0.0
        %3522 = vmatprep.subr.mxu0 0.0
        %3523 = vmatpush1.msra.mxu0 0.0
        %3524 = vmatprep.subr.mxu0 0.0
        %3525 = vmatpush1.msra.mxu0 0.0
        %3526 = vmatprep.subr.mxu0 0.0
        %3527 = vmatpush1.msra.mxu0 0.0
        %3528 = vmatprep.subr.mxu0 0.0
        %3529 = vmatpush1.msra.mxu0 0.0
        %3530 = vmatprep.subr.mxu0 0.0
        %3531 = vmatpush1.msra.mxu0 0.0
        %3532 = vmatprep.subr.mxu0 0.0
        %3533 = vmatpush1.msra.mxu0 0.0
        %3534 = vmatprep.subr.mxu0 0.0
        %3535 = vmatpush1.msra.mxu0 0.0
        %3536 = vmatprep.subr.mxu0 0.0
        %3537 = vmatpush1.msra.mxu0 0.0
        %3538 = vmatprep.subr.mxu0 0.0
        %3539 = vmatpush1.msra.mxu0 0.0
        %3540 = vmatprep.subr.mxu0 0.0
        %3541 = vmatpush1.msra.mxu0 0.0
        %3542 = vmatprep.subr.mxu0 0.0
        %3543 = vmatpush1.msra.mxu0 0.0
        %3544 = vmatprep.subr.mxu0 0.0
        %3545 = vmatpush1.msra.mxu0 0.0
        %3546 = vmatprep.subr.mxu0 0.0
        %3547 = vmatpush1.msra.mxu0 0.0
        %3548 = vmatprep.subr.mxu0 0.0
        %3549 = vmatpush1.msra.mxu0 0.0
        %3550 = vmatprep.subr.mxu0 0.0
        %3551 = vmatpush1.msra.mxu0 0.0
        %3552 = vmatprep.subr.mxu0 0.0
        %3553 = vmatpush1.msra.mxu0 0.0
        %3554 = vmatprep.subr.mxu0 0.0
        %3555 = vmatpush1.msra.mxu0 0.0
        %3556 = vmatprep.subr.mxu0 0.0
        %3557 = vmatpush1.msra.mxu0 0.0
        %3558 = vmatprep.subr.mxu0 0.0
        %3559 = vmatpush1.msra.mxu0 0.0
        %3560 = vmatprep.subr.mxu0 0.0
        %3561 = vmatpush1.msra.mxu0 0.0
        %3562 = vmatprep.subr.mxu0 0.0
        %3563 = vmatpush1.msra.mxu0 0.0
        %3564 = vmatprep.subr.mxu0 0.0
        %3565 = vmatpush1.msra.mxu0 0.0
        %3566 = vmatprep.subr.mxu0 0.0
        %3567 = vmatpush1.msra.mxu0 0.0
        %3568 = vmatprep.subr.mxu0 0.0
        %3569 = vmatpush1.msra.mxu0 0.0
        %3570 = vmatprep.subr.mxu0 0.0
        %3571 = vmatpush1.msra.mxu0 0.0
        %3572 = vmatprep.subr.mxu0 0.0
        %3573 = vmatpush1.msra.mxu0 0.0
        %3574 = vmatprep.subr.mxu0 0.0
        %3575 = vmatpush1.msra.mxu0 0.0
        %3576 = vmatprep.subr.mxu0 0.0
        %3577 = vmatpush1.msra.mxu0 0.0
        %3578 = vmatprep.subr.mxu0 0.0
        %3579 = vmatpush1.msra.mxu0 0.0
        %3580 = vmatprep.mubr.f32.mxu0 0.0
        %3581 = vmatmul.mubr.f32.gmra.mrb[0].mxu0 %v3508
        %v3582 = vpop.f32.mrb[0].mxu0
        %v3583 = vadd.f32 0.0, %v3582
        %v3584 = vpop.f32.mrb[0].mxu0
        %3585 = vmatprep.mubr.f32.mxu0 0.0
        %3586 = vmatmul.mubr.f32.gmra.mrb[0].mxu0 %v3511
        %v3587 = vpop.f32.mrb[0].mxu0
        %v3588 = vadd.f32 0.0, %v3587
        %v3589 = vpop.f32.mrb[0].mxu0
        %3590 = vmatprep.mubr.f32.mxu0 0.0
        %3591 = vmatmul.mubr.f32.gmra.mrb[0].mxu0 %v3514
        %v3592 = vpop.f32.mrb[0].mxu0
        %v3593 = vadd.f32 0.0, %v3592
        %v3594 = vpop.f32.mrb[0].mxu0
        %3595 = vdwg.mxu0
        %v3596 = vadd.f32 %v3253, %v3583
        %v3597 = vadd.f32 %v3258, %v3588
        %v3598 = vadd.f32 %v3263, %v3593
        %3599 = vrot.lane.b32.xlu0 %v2437, 104
        %v3600 = vpop.permute.xlu0 %3599
        %3601 = vrot.lane.b32.xlu0 %v2442, 104
        %v3602 = vpop.permute.xlu0 %3601
        %3603 = vrot.lane.b32.xlu0 %v2447, 104
        %v3604 = vpop.permute.xlu0 %3603
        %3605 = vrot.lane.b32.xlu0 %v2521, 104
        %v3606 = vpop.permute.xlu0 %3605
        %3607 = vrot.lane.b32.xlu0 %v2526, 104
        %v3608 = vpop.permute.xlu0 %3607
        %3609 = vrot.lane.b32.xlu0 %v2531, 104
        %v3610 = vpop.permute.xlu0 %3609
        %v3611 = vsel %vm323, %v3600, 0
        %v3613 = vsel %vm323, %v3602, 0
        %v3615 = vsel %vm323, %v3604, 0
        %v3617 = vsel %vm323, %v3606, 0
        %v3619 = vsel %vm323, %v3608, 0
        %v3621 = vsel %vm323, %v3610, 0
        %3623 = vmatprep.subr.mxu0 0.0
        %3624 = vmatpush1.xpose.msra.mxu0 %v3617
        %3625 = vmatprep.subr.mxu0 0.0
        %3626 = vmatpush1.xpose.msra.mxu0 %v3619
        %3627 = vmatprep.subr.mxu0 0.0
        %3628 = vmatpush1.xpose.msra.mxu0 %v3621
        %3629 = vmatprep.subr.mxu0 0.0
        %3630 = vmatpush1.xpose.msra.mxu0 0.0
        %3631 = vmatprep.subr.mxu0 0.0
        %3632 = vmatpush1.xpose.msra.mxu0 0.0
        %3633 = vmatprep.subr.mxu0 0.0
        %3634 = vmatpush1.xpose.msra.mxu0 0.0
        %3635 = vmatprep.subr.mxu0 0.0
        %3636 = vmatpush1.xpose.msra.mxu0 0.0
        %3637 = vmatprep.subr.mxu0 0.0
        %3638 = vmatpush1.xpose.msra.mxu0 0.0
        %3639 = vmatprep.subr.mxu0 0.0
        %3640 = vmatpush1.xpose.msra.mxu0 0.0
        %3641 = vmatprep.subr.mxu0 0.0
        %3642 = vmatpush1.xpose.msra.mxu0 0.0
        %3643 = vmatprep.subr.mxu0 0.0
        %3644 = vmatpush1.xpose.msra.mxu0 0.0
        %3645 = vmatprep.subr.mxu0 0.0
        %3646 = vmatpush1.xpose.msra.mxu0 0.0
        %3647 = vmatprep.subr.mxu0 0.0
        %3648 = vmatpush1.xpose.msra.mxu0 0.0
        %3649 = vmatprep.subr.mxu0 0.0
        %3650 = vmatpush1.xpose.msra.mxu0 0.0
        %3651 = vmatprep.subr.mxu0 0.0
        %3652 = vmatpush1.xpose.msra.mxu0 0.0
        %3653 = vmatprep.subr.mxu0 0.0
        %3654 = vmatpush1.xpose.msra.mxu0 0.0
        %3655 = vmatprep.subr.mxu0 0.0
        %3656 = vmatpush1.xpose.msra.mxu0 0.0
        %3657 = vmatprep.subr.mxu0 0.0
        %3658 = vmatpush1.xpose.msra.mxu0 0.0
        %3659 = vmatprep.subr.mxu0 0.0
        %3660 = vmatpush1.xpose.msra.mxu0 0.0
        %3661 = vmatprep.subr.mxu0 0.0
        %3662 = vmatpush1.xpose.msra.mxu0 0.0
        %3663 = vmatprep.subr.mxu0 0.0
        %3664 = vmatpush1.xpose.msra.mxu0 0.0
        %3665 = vmatprep.subr.mxu0 0.0
        %3666 = vmatpush1.xpose.msra.mxu0 0.0
        %3667 = vmatprep.subr.mxu0 0.0
        %3668 = vmatpush1.xpose.msra.mxu0 0.0
        %3669 = vmatprep.subr.mxu0 0.0
        %3670 = vmatpush1.xpose.msra.mxu0 0.0
        %3671 = vmatprep.subr.mxu0 0.0
        %3672 = vmatpush1.xpose.msra.mxu0 0.0
        %3673 = vmatprep.subr.mxu0 0.0
        %3674 = vmatpush1.xpose.msra.mxu0 0.0
        %3675 = vmatprep.subr.mxu0 0.0
        %3676 = vmatpush1.xpose.msra.mxu0 0.0
        %3677 = vmatprep.subr.mxu0 0.0
        %3678 = vmatpush1.xpose.msra.mxu0 0.0
        %3679 = vmatprep.subr.mxu0 0.0
        %3680 = vmatpush1.xpose.msra.mxu0 0.0
        %3681 = vmatprep.subr.mxu0 0.0
        %3682 = vmatpush1.xpose.msra.mxu0 0.0
        %3683 = vmatprep.subr.mxu0 0.0
        %3684 = vmatpush1.xpose.msra.mxu0 0.0
        %3685 = vmatprep.subr.mxu0 0.0
        %3686 = vmatpush1.xpose.msra.mxu0 0.0
        %3687 = vmatprep.mubr.f32.mxu0 0.0
        %3688 = vmatmul.mubr.f32.gmra.mrb[0].mxu0 %v3611
        %v3689 = vpop.f32.mrb[0].mxu0
        %v3690 = vadd.f32 0.0, %v3689
        %v3691 = vpop.f32.mrb[0].mxu0
        %3692 = vmatprep.mubr.f32.mxu0 0.0
        %3693 = vmatmul.mubr.f32.gmra.mrb[0].mxu0 %v3613
        %v3694 = vpop.f32.mrb[0].mxu0
        %v3695 = vadd.f32 0.0, %v3694
        %v3696 = vpop.f32.mrb[0].mxu0
        %3697 = vmatprep.mubr.f32.mxu0 0.0
        %3698 = vmatmul.mubr.f32.gmra.mrb[0].mxu0 %v3615
        %v3699 = vpop.f32.mrb[0].mxu0
        %v3700 = vadd.f32 0.0, %v3699
        %v3701 = vpop.f32.mrb[0].mxu0
        %3702 = vdwg.mxu0
        %v3703 = vmul.f32 %v3690, 0.35355338
        %v3704 = vmul.f32 %v3695, 0.35355338
        %v3705 = vmul.f32 %v3700, 0.35355338
        %v3706 = vadd.f32 %v3703, %v416
        %v3707 = vadd.f32 %v3704, %v416
        %v3708 = vadd.f32 %v3705, %v416
        %v3709 = vsel %vm809, %v3706, -inf
        %3710 = vmax.xlane.f32.xlu0 %v3709
        %v3711 = vpop.xlane.xlu0 %3710
        %v3712 = vsel %vm809, %v3707, -inf
        %3713 = vmax.xlane.f32.xlu0 %v3712
        %v3714 = vpop.xlane.xlu0 %3713
        %v3715 = vsel %vm809, %v3708, -inf
        %3716 = vmax.xlane.f32.xlu0 %v3715
        %v3717 = vpop.xlane.xlu0 %3716
        %v3718 = vsub.f32 %v3706, %v3711
        %v3719 = vsub.f32 %v3707, %v3714
        %v3720 = vsub.f32 %v3708, %v3717
        %v3721 = vmul.f32 %v3718, 1.442695
        %v3722 = vpow.pop %v3721
        %v3723 = vmul.f32 %v3719, 1.442695
        %v3724 = vpow.pop %v3723
        %v3725 = vmul.f32 %v3720, 1.442695
        %v3726 = vpow.pop %v3725
        %v3727 = vsel %vm809, %v3722, 0.0
        %3728 = vadd.xlane.f32.xlu0 %v3727
        %v3729 = vpop.xlane.xlu0 %3728
        %v3730 = vsel %vm809, %v3724, 0.0
        %3731 = vadd.xlane.f32.xlu0 %v3730
        %v3732 = vpop.xlane.xlu0 %3731
        %v3733 = vsel %vm809, %v3726, 0.0
        %3734 = vadd.xlane.f32.xlu0 %v3733
        %v3735 = vpop.xlane.xlu0 %3734
        %v3736 = vrcp.pop %v3729
        %v3737 = vmul.f32 %v3722, %v3736
        %v3738 = vrcp.pop %v3732
        %v3739 = vmul.f32 %v3724, %v3738
        %v3740 = vrcp.pop %v3735
        %v3741 = vmul.f32 %v3726, %v3740
        %3742 = vrot.lane.b32.xlu0 %v2605, 104
        %v3743 = vpop.permute.xlu0 %3742
        %3744 = vrot.lane.b32.xlu0 %v2610, 104
        %v3745 = vpop.permute.xlu0 %3744
        %3746 = vrot.lane.b32.xlu0 %v2615, 104
        %v3747 = vpop.permute.xlu0 %3746
        %v3752 = vsel %vm809, %v3737, 0
        %v3755 = vsel %vm809, %v3739, 0
        %v3758 = vsel %vm809, %v3741, 0
        %3760 = vmatprep.subr.mxu0 0.0
        %3761 = vmatpush1.msra.mxu0 %v3743
        %3762 = vmatprep.subr.mxu0 0.0
        %3763 = vmatpush1.msra.mxu0 %v3745
        %3764 = vmatprep.subr.mxu0 0.0
        %3765 = vmatpush1.msra.mxu0 %v3747
        %3766 = vmatprep.subr.mxu0 0.0
        %3767 = vmatpush1.msra.mxu0 0.0
        %3768 = vmatprep.subr.mxu0 0.0
        %3769 = vmatpush1.msra.mxu0 0.0
        %3770 = vmatprep.subr.mxu0 0.0
        %3771 = vmatpush1.msra.mxu0 0.0
        %3772 = vmatprep.subr.mxu0 0.0
        %3773 = vmatpush1.msra.mxu0 0.0
        %3774 = vmatprep.subr.mxu0 0.0
        %3775 = vmatpush1.msra.mxu0 0.0
        %3776 = vmatprep.subr.mxu0 0.0
        %3777 = vmatpush1.msra.mxu0 0.0
        %3778 = vmatprep.subr.mxu0 0.0
        %3779 = vmatpush1.msra.mxu0 0.0
        %3780 = vmatprep.subr.mxu0 0.0
        %3781 = vmatpush1.msra.mxu0 0.0
        %3782 = vmatprep.subr.mxu0 0.0
        %3783 = vmatpush1.msra.mxu0 0.0
        %3784 = vmatprep.subr.mxu0 0.0
        %3785 = vmatpush1.msra.mxu0 0.0
        %3786 = vmatprep.subr.mxu0 0.0
        %3787 = vmatpush1.msra.mxu0 0.0
        %3788 = vmatprep.subr.mxu0 0.0
        %3789 = vmatpush1.msra.mxu0 0.0
        %3790 = vmatprep.subr.mxu0 0.0
        %3791 = vmatpush1.msra.mxu0 0.0
        %3792 = vmatprep.subr.mxu0 0.0
        %3793 = vmatpush1.msra.mxu0 0.0
        %3794 = vmatprep.subr.mxu0 0.0
        %3795 = vmatpush1.msra.mxu0 0.0
        %3796 = vmatprep.subr.mxu0 0.0
        %3797 = vmatpush1.msra.mxu0 0.0
        %3798 = vmatprep.subr.mxu0 0.0
        %3799 = vmatpush1.msra.mxu0 0.0
        %3800 = vmatprep.subr.mxu0 0.0
        %3801 = vmatpush1.msra.mxu0 0.0
        %3802 = vmatprep.subr.mxu0 0.0
        %3803 = vmatpush1.msra.mxu0 0.0
        %3804 = vmatprep.subr.mxu0 0.0
        %3805 = vmatpush1.msra.mxu0 0.0
        %3806 = vmatprep.subr.mxu0 0.0
        %3807 = vmatpush1.msra.mxu0 0.0
        %3808 = vmatprep.subr.mxu0 0.0
        %3809 = vmatpush1.msra.mxu0 0.0
        %3810 = vmatprep.subr.mxu0 0.0
        %3811 = vmatpush1.msra.mxu0 0.0
        %3812 = vmatprep.subr.mxu0 0.0
        %3813 = vmatpush1.msra.mxu0 0.0
        %3814 = vmatprep.subr.mxu0 0.0
        %3815 = vmatpush1.msra.mxu0 0.0
        %3816 = vmatprep.subr.mxu0 0.0
        %3817 = vmatpush1.msra.mxu0 0.0
        %3818 = vmatprep.subr.mxu0 0.0
        %3819 = vmatpush1.msra.mxu0 0.0
        %3820 = vmatprep.subr.mxu0 0.0
        %3821 = vmatpush1.msra.mxu0 0.0
        %3822 = vmatprep.subr.mxu0 0.0
        %3823 = vmatpush1.msra.mxu0 0.0
        %3824 = vmatprep.mubr.f32.mxu0 0.0
        %3825 = vmatmul.mubr.f32.gmra.mrb[0].mxu0 %v3752
        %v3826 = vpop.f32.mrb[0].mxu0
        %v3827 = vadd.f32 0.0, %v3826
        %v3828 = vpop.f32.mrb[0].mxu0
        %3829 = vmatprep.mubr.f32.mxu0 0.0
        %3830 = vmatmul.mubr.f32.gmra.mrb[0].mxu0 %v3755
        %v3831 = vpop.f32.mrb[0].mxu0
        %v3832 = vadd.f32 0.0, %v3831
        %v3833 = vpop.f32.mrb[0].mxu0
        %3834 = vmatprep.mubr.f32.mxu0 0.0
        %3835 = vmatmul.mubr.f32.gmra.mrb[0].mxu0 %v3758
        %v3836 = vpop.f32.mrb[0].mxu0
        %v3837 = vadd.f32 0.0, %v3836
        %v3838 = vpop.f32.mrb[0].mxu0
        %3839 = vdwg.mxu0
        %v3841 = vsel %vm323, %v3827, 0
        %v3844 = vsel %vm323, %v3832, 0
        %v3847 = vsel %vm323, %v3837, 0
        %3849 = vmatprep.subr.mxu0 0.0
        %3850 = vmatpush1.msra.mxu0 %v2345
        %3851 = vmatprep.subr.mxu0 0.0
        %3852 = vmatpush1.msra.mxu0 0.0
        %3853 = vmatprep.subr.mxu0 0.0
        %3854 = vmatpush1.msra.mxu0 0.0
        %3855 = vmatprep.subr.mxu0 0.0
        %3856 = vmatpush1.msra.mxu0 0.0
        %3857 = vmatprep.subr.mxu0 0.0
        %3858 = vmatpush1.msra.mxu0 0.0
        %3859 = vmatprep.subr.mxu0 0.0
        %3860 = vmatpush1.msra.mxu0 0.0
        %3861 = vmatprep.subr.mxu0 0.0
        %3862 = vmatpush1.msra.mxu0 0.0
        %3863 = vmatprep.subr.mxu0 0.0
        %3864 = vmatpush1.msra.mxu0 0.0
        %3865 = vmatprep.subr.mxu0 0.0
        %3866 = vmatpush1.msra.mxu0 0.0
        %3867 = vmatprep.subr.mxu0 0.0
        %3868 = vmatpush1.msra.mxu0 0.0
        %3869 = vmatprep.subr.mxu0 0.0
        %3870 = vmatpush1.msra.mxu0 0.0
        %3871 = vmatprep.subr.mxu0 0.0
        %3872 = vmatpush1.msra.mxu0 0.0
        %3873 = vmatprep.subr.mxu0 0.0
        %3874 = vmatpush1.msra.mxu0 0.0
        %3875 = vmatprep.subr.mxu0 0.0
        %3876 = vmatpush1.msra.mxu0 0.0
        %3877 = vmatprep.subr.mxu0 0.0
        %3878 = vmatpush1.msra.mxu0 0.0
        %3879 = vmatprep.subr.mxu0 0.0
        %3880 = vmatpush1.msra.mxu0 0.0
        %3881 = vmatprep.subr.mxu0 0.0
        %3882 = vmatpush1.msra.mxu0 0.0
        %3883 = vmatprep.subr.mxu0 0.0
        %3884 = vmatpush1.msra.mxu0 0.0
        %3885 = vmatprep.subr.mxu0 0.0
        %3886 = vmatpush1.msra.mxu0 0.0
        %3887 = vmatprep.subr.mxu0 0.0
        %3888 = vmatpush1.msra.mxu0 0.0
        %3889 = vmatprep.subr.mxu0 0.0
        %3890 = vmatpush1.msra.mxu0 0.0
        %3891 = vmatprep.subr.mxu0 0.0
        %3892 = vmatpush1.msra.mxu0 0.0
        %3893 = vmatprep.subr.mxu0 0.0
        %3894 = vmatpush1.msra.mxu0 0.0
        %3895 = vmatprep.subr.mxu0 0.0
        %3896 = vmatpush1.msra.mxu0 0.0
        %3897 = vmatprep.subr.mxu0 0.0
        %3898 = vmatpush1.msra.mxu0 0.0
        %3899 = vmatprep.subr.mxu0 0.0
        %3900 = vmatpush1.msra.mxu0 0.0
        %3901 = vmatprep.subr.mxu0 0.0
        %3902 = vmatpush1.msra.mxu0 0.0
        %3903 = vmatprep.subr.mxu0 0.0
        %3904 = vmatpush1.msra.mxu0 0.0
        %3905 = vmatprep.subr.mxu0 0.0
        %3906 = vmatpush1.msra.mxu0 0.0
        %3907 = vmatprep.subr.mxu0 0.0
        %3908 = vmatpush1.msra.mxu0 0.0
        %3909 = vmatprep.subr.mxu0 0.0
        %3910 = vmatpush1.msra.mxu0 0.0
        %3911 = vmatprep.subr.mxu0 0.0
        %3912 = vmatpush1.msra.mxu0 0.0
        %3913 = vmatprep.mubr.f32.mxu0 0.0
        %3914 = vmatmul.mubr.f32.gmra.mrb[0].mxu0 %v3841
        %v3915 = vpop.f32.mrb[0].mxu0
        %v3916 = vadd.f32 0.0, %v3915
        %v3917 = vpop.f32.mrb[0].mxu0
        %3918 = vmatprep.mubr.f32.mxu0 0.0
        %3919 = vmatmul.mubr.f32.gmra.mrb[0].mxu0 %v3844
        %v3920 = vpop.f32.mrb[0].mxu0
        %v3921 = vadd.f32 0.0, %v3920
        %v3922 = vpop.f32.mrb[0].mxu0
        %3923 = vmatprep.mubr.f32.mxu0 0.0
        %3924 = vmatmul.mubr.f32.gmra.mrb[0].mxu0 %v3847
        %v3925 = vpop.f32.mrb[0].mxu0
        %v3926 = vadd.f32 0.0, %v3925
        %v3927 = vpop.f32.mrb[0].mxu0
        %3928 = vdwg.mxu0
        %v3929 = vadd.f32 %v3596, %v3916
        %v3930 = vadd.f32 %v3597, %v3921
        %v3931 = vadd.f32 %v3598, %v3926
        %v3932 = vlaneseq
        %v3933 = vshrl.u32 %v3932, 7
        %v3934 = vsub.s32 3, %v3933
        %v3935 = vrot.slane %v2355, %v3934
        %v3936 = vadd.f32 %v3929, %v3935
        %v3937 = vadd.f32 %v3930, %v3935
        %v3938 = vadd.f32 %v3931, %v3935
        %v3939 = vadd.f32 %v2326, %v3936
        %v3940 = vadd.f32 %v2327, %v3937
        %v3941 = vadd.f32 %v2328, %v3938
        %v3942 = vsel %vm447, %v3939, 0.0
        %3943 = vadd.xlane.f32.xlu0 %v3942
        %v3944 = vpop.xlane.xlu0 %3943
        %v3945 = vsel %vm447, %v3940, 0.0
        %3946 = vadd.xlane.f32.xlu0 %v3945
        %v3947 = vpop.xlane.xlu0 %3946
        %v3948 = vsel %vm447, %v3941, 0.0
        %3949 = vadd.xlane.f32.xlu0 %v3948
        %v3950 = vpop.xlane.xlu0 %3949
        %v3951 = vmul.f32 %v3944, %v2039
        %v3952 = vmul.f32 %v3947, %v2039
        %v3953 = vmul.f32 %v3950, %v2039
        %v3954 = vsub.f32 %v3939, %v3951
        %v3955 = vsub.f32 %v3940, %v3952
        %v3956 = vsub.f32 %v3941, %v3953
        %v3957 = vmul.f32 %v3954, %v3954
        %v3958 = vmul.f32 %v3955, %v3955
        %v3959 = vmul.f32 %v3956, %v3956
        %v3960 = vsel %vm447, %v3957, 0.0
        %3961 = vadd.xlane.f32.xlu0 %v3960
        %v3962 = vpop.xlane.xlu0 %3961
        %v3963 = vsel %vm447, %v3958, 0.0
        %3964 = vadd.xlane.f32.xlu0 %v3963
        %v3965 = vpop.xlane.xlu0 %3964
        %v3966 = vsel %vm447, %v3959, 0.0
        %3967 = vadd.xlane.f32.xlu0 %v3966
        %v3968 = vpop.xlane.xlu0 %3967
        %v3969 = vmul.f32 %v3962, %v2039
        %v3970 = vmul.f32 %v3965, %v2039
        %v3971 = vmul.f32 %v3968, %v2039
        %v3972 = vadd.f32 %v3969, 1e-05
        %v3973 = vadd.f32 %v3970, 1e-05
        %v3974 = vadd.f32 %v3971, 1e-05
        %v3975 = vrsqrt.pop %v3972
        %v3976 = vrsqrt.pop %v3973
        %v3977 = vrsqrt.pop %v3974
        %v3978 = vmul.f32 %v3954, %v3975
        %v3979 = vmul.f32 %v3955, %v3976
        %v3980 = vmul.f32 %v3956, %v3977
        %v3981 = vlaneseq
        %v3982 = vshrl.u32 %v3981, 7
        %v3983 = vsub.s32 6, %v3982
        %v3984 = vrot.slane %v2355, %v3983
        %v3985 = vmul.f32 %v3978, %v3984
        %v3986 = vmul.f32 %v3979, %v3984
        %v3987 = vmul.f32 %v3980, %v3984
        %v3988 = vlaneseq
        %v3989 = vshrl.u32 %v3988, 7
        %v3990 = vsub.s32 7, %v3989
        %v3991 = vrot.slane %v2355, %v3990
        %v3992 = vadd.f32 %v3985, %v3991
        %v3993 = vadd.f32 %v3986, %v3991
        %v3994 = vadd.f32 %v3987, %v3991
        %v3995 = vlaneseq
        %v3996 = vshrl.u32 %v3995, 7
        %v3997 = vsub.s32 4, %v3996
        %v3998 = vrot.slane %v2355, %v3997
        %v4000 = vsel %vm447, %v3992, 0
        %v4003 = vsel %vm447, %v3993, 0
        %v4006 = vsel %vm447, %v3994, 0
        %4008 = vmatprep.subr.mxu0 0.0
        %4009 = vmatpush1.msra.mxu0 %v2346
        %4010 = vmatprep.subr.mxu0 0.0
        %4011 = vmatpush1.msra.mxu0 %v2347
        %4012 = vmatprep.subr.mxu0 0.0
        %4013 = vmatpush1.msra.mxu0 %v2348
        %4014 = vmatprep.subr.mxu0 0.0
        %4015 = vmatpush1.msra.mxu0 %v2349
        %4016 = vmatprep.subr.mxu0 0.0
        %4017 = vmatpush1.msra.mxu0 0.0
        %4018 = vmatprep.subr.mxu0 0.0
        %4019 = vmatpush1.msra.mxu0 0.0
        %4020 = vmatprep.subr.mxu0 0.0
        %4021 = vmatpush1.msra.mxu0 0.0
        %4022 = vmatprep.subr.mxu0 0.0
        %4023 = vmatpush1.msra.mxu0 0.0
        %4024 = vmatprep.subr.mxu0 0.0
        %4025 = vmatpush1.msra.mxu0 0.0
        %4026 = vmatprep.subr.mxu0 0.0
        %4027 = vmatpush1.msra.mxu0 0.0
        %4028 = vmatprep.subr.mxu0 0.0
        %4029 = vmatpush1.msra.mxu0 0.0
        %4030 = vmatprep.subr.mxu0 0.0
        %4031 = vmatpush1.msra.mxu0 0.0
        %4032 = vmatprep.subr.mxu0 0.0
        %4033 = vmatpush1.msra.mxu0 0.0
        %4034 = vmatprep.subr.mxu0 0.0
        %4035 = vmatpush1.msra.mxu0 0.0
        %4036 = vmatprep.subr.mxu0 0.0
        %4037 = vmatpush1.msra.mxu0 0.0
        %4038 = vmatprep.subr.mxu0 0.0
        %4039 = vmatpush1.msra.mxu0 0.0
        %4040 = vmatprep.subr.mxu0 0.0
        %4041 = vmatpush1.msra.mxu0 0.0
        %4042 = vmatprep.subr.mxu0 0.0
        %4043 = vmatpush1.msra.mxu0 0.0
        %4044 = vmatprep.subr.mxu0 0.0
        %4045 = vmatpush1.msra.mxu0 0.0
        %4046 = vmatprep.subr.mxu0 0.0
        %4047 = vmatpush1.msra.mxu0 0.0
        %4048 = vmatprep.subr.mxu0 0.0
        %4049 = vmatpush1.msra.mxu0 0.0
        %4050 = vmatprep.subr.mxu0 0.0
        %4051 = vmatpush1.msra.mxu0 0.0
        %4052 = vmatprep.subr.mxu0 0.0
        %4053 = vmatpush1.msra.mxu0 0.0
        %4054 = vmatprep.subr.mxu0 0.0
        %4055 = vmatpush1.msra.mxu0 0.0
        %4056 = vmatprep.subr.mxu0 0.0
        %4057 = vmatpush1.msra.mxu0 0.0
        %4058 = vmatprep.subr.mxu0 0.0
        %4059 = vmatpush1.msra.mxu0 0.0
        %4060 = vmatprep.subr.mxu0 0.0
        %4061 = vmatpush1.msra.mxu0 0.0
        %4062 = vmatprep.subr.mxu0 0.0
        %4063 = vmatpush1.msra.mxu0 0.0
        %4064 = vmatprep.subr.mxu0 0.0
        %4065 = vmatpush1.msra.mxu0 0.0
        %4066 = vmatprep.subr.mxu0 0.0
        %4067 = vmatpush1.msra.mxu0 0.0
        %4068 = vmatprep.subr.mxu0 0.0
        %4069 = vmatpush1.msra.mxu0 0.0
        %4070 = vmatprep.subr.mxu0 0.0
        %4071 = vmatpush1.msra.mxu0 0.0
        %4072 = vmatprep.mubr.f32.mxu0 0.0
        %4073 = vmatmul.mubr.f32.gmra.mrb[0].mxu0 %v4000
        %v4074 = vpop.f32.mrb[0].mxu0
        %v4075 = vadd.f32 %v3998, %v4074
        %v4076 = vpop.f32.mrb[0].mxu0
        %4077 = vmatprep.mubr.f32.mxu0 0.0
        %4078 = vmatmul.mubr.f32.gmra.mrb[0].mxu0 %v4003
        %v4079 = vpop.f32.mrb[0].mxu0
        %v4080 = vadd.f32 %v3998, %v4079
        %v4081 = vpop.f32.mrb[0].mxu0
        %4082 = vmatprep.mubr.f32.mxu0 0.0
        %4083 = vmatmul.mubr.f32.gmra.mrb[0].mxu0 %v4006
        %v4084 = vpop.f32.mrb[0].mxu0
        %v4085 = vadd.f32 %v3998, %v4084
        %v4086 = vpop.f32.mrb[0].mxu0
        %4087 = vdwg.mxu0
        %v4088 = vmax.f32 %v4075, 0.0
        %v4089 = vmax.f32 %v4080, 0.0
        %v4090 = vmax.f32 %v4085, 0.0
        %v4091 = vlaneseq
        %v4092 = vshrl.u32 %v4091, 7
        %v4093 = vsub.s32 5, %v4092
        %v4094 = vrot.slane %v2355, %v4093
        %v4096 = vsel %vm447, %v4088, 0
        %v4099 = vsel %vm447, %v4089, 0
        %v4102 = vsel %vm447, %v4090, 0
        %4104 = vmatprep.subr.mxu0 0.0
        %4105 = vmatpush1.msra.mxu0 %v2350
        %4106 = vmatprep.subr.mxu0 0.0
        %4107 = vmatpush1.msra.mxu0 %v2351
        %4108 = vmatprep.subr.mxu0 0.0
        %4109 = vmatpush1.msra.mxu0 %v2352
        %4110 = vmatprep.subr.mxu0 0.0
        %4111 = vmatpush1.msra.mxu0 %v2353
        %4112 = vmatprep.subr.mxu0 0.0
        %4113 = vmatpush1.msra.mxu0 0.0
        %4114 = vmatprep.subr.mxu0 0.0
        %4115 = vmatpush1.msra.mxu0 0.0
        %4116 = vmatprep.subr.mxu0 0.0
        %4117 = vmatpush1.msra.mxu0 0.0
        %4118 = vmatprep.subr.mxu0 0.0
        %4119 = vmatpush1.msra.mxu0 0.0
        %4120 = vmatprep.subr.mxu0 0.0
        %4121 = vmatpush1.msra.mxu0 0.0
        %4122 = vmatprep.subr.mxu0 0.0
        %4123 = vmatpush1.msra.mxu0 0.0
        %4124 = vmatprep.subr.mxu0 0.0
        %4125 = vmatpush1.msra.mxu0 0.0
        %4126 = vmatprep.subr.mxu0 0.0
        %4127 = vmatpush1.msra.mxu0 0.0
        %4128 = vmatprep.subr.mxu0 0.0
        %4129 = vmatpush1.msra.mxu0 0.0
        %4130 = vmatprep.subr.mxu0 0.0
        %4131 = vmatpush1.msra.mxu0 0.0
        %4132 = vmatprep.subr.mxu0 0.0
        %4133 = vmatpush1.msra.mxu0 0.0
        %4134 = vmatprep.subr.mxu0 0.0
        %4135 = vmatpush1.msra.mxu0 0.0
        %4136 = vmatprep.subr.mxu0 0.0
        %4137 = vmatpush1.msra.mxu0 0.0
        %4138 = vmatprep.subr.mxu0 0.0
        %4139 = vmatpush1.msra.mxu0 0.0
        %4140 = vmatprep.subr.mxu0 0.0
        %4141 = vmatpush1.msra.mxu0 0.0
        %4142 = vmatprep.subr.mxu0 0.0
        %4143 = vmatpush1.msra.mxu0 0.0
        %4144 = vmatprep.subr.mxu0 0.0
        %4145 = vmatpush1.msra.mxu0 0.0
        %4146 = vmatprep.subr.mxu0 0.0
        %4147 = vmatpush1.msra.mxu0 0.0
        %4148 = vmatprep.subr.mxu0 0.0
        %4149 = vmatpush1.msra.mxu0 0.0
        %4150 = vmatprep.subr.mxu0 0.0
        %4151 = vmatpush1.msra.mxu0 0.0
        %4152 = vmatprep.subr.mxu0 0.0
        %4153 = vmatpush1.msra.mxu0 0.0
        %4154 = vmatprep.subr.mxu0 0.0
        %4155 = vmatpush1.msra.mxu0 0.0
        %4156 = vmatprep.subr.mxu0 0.0
        %4157 = vmatpush1.msra.mxu0 0.0
        %4158 = vmatprep.subr.mxu0 0.0
        %4159 = vmatpush1.msra.mxu0 0.0
        %4160 = vmatprep.subr.mxu0 0.0
        %4161 = vmatpush1.msra.mxu0 0.0
        %4162 = vmatprep.subr.mxu0 0.0
        %4163 = vmatpush1.msra.mxu0 0.0
        %4164 = vmatprep.subr.mxu0 0.0
        %4165 = vmatpush1.msra.mxu0 0.0
        %4166 = vmatprep.subr.mxu0 0.0
        %4167 = vmatpush1.msra.mxu0 0.0
        %4168 = vmatprep.mubr.f32.mxu0 0.0
        %4169 = vmatmul.mubr.f32.gmra.mrb[0].mxu0 %v4096
        %v4170 = vpop.f32.mrb[0].mxu0
        %v4171 = vadd.f32 %v4094, %v4170
        %v4172 = vpop.f32.mrb[0].mxu0
        %4173 = vmatprep.mubr.f32.mxu0 0.0
        %4174 = vmatmul.mubr.f32.gmra.mrb[0].mxu0 %v4099
        %v4175 = vpop.f32.mrb[0].mxu0
        %v4176 = vadd.f32 %v4094, %v4175
        %v4177 = vpop.f32.mrb[0].mxu0
        %4178 = vmatprep.mubr.f32.mxu0 0.0
        %4179 = vmatmul.mubr.f32.gmra.mrb[0].mxu0 %v4102
        %v4180 = vpop.f32.mrb[0].mxu0
        %v4181 = vadd.f32 %v4094, %v4180
        %v4182 = vpop.f32.mrb[0].mxu0
        %4183 = vdwg.mxu0
        %v4184 = vadd.f32 %v3992, %v4171
        %v4185 = vadd.f32 %v3993, %v4176
        %v4186 = vadd.f32 %v3994, %v4181
        %v4187 = vsel %vm447, %v4184, 0.0
        %4188 = vadd.xlane.f32.xlu0 %v4187
        %v4189 = vpop.xlane.xlu0 %4188
        %v4190 = vsel %vm447, %v4185, 0.0
        %4191 = vadd.xlane.f32.xlu0 %v4190
        %v4192 = vpop.xlane.xlu0 %4191
        %v4193 = vsel %vm447, %v4186, 0.0
        %4194 = vadd.xlane.f32.xlu0 %v4193
        %v4195 = vpop.xlane.xlu0 %4194
        %v4196 = vmul.f32 %v4189, %v2039
        %v4197 = vmul.f32 %v4192, %v2039
        %v4198 = vmul.f32 %v4195, %v2039
        %v4199 = vsub.f32 %v4184, %v4196
        %v4200 = vsub.f32 %v4185, %v4197
        %v4201 = vsub.f32 %v4186, %v4198
        %v4202 = vmul.f32 %v4199, %v4199
        %v4203 = vmul.f32 %v4200, %v4200
        %v4204 = vmul.f32 %v4201, %v4201
        %v4205 = vsel %vm447, %v4202, 0.0
        %4206 = vadd.xlane.f32.xlu0 %v4205
        %v4207 = vpop.xlane.xlu0 %4206
        %v4208 = vsel %vm447, %v4203, 0.0
        %4209 = vadd.xlane.f32.xlu0 %v4208
        %v4210 = vpop.xlane.xlu0 %4209
        %v4211 = vsel %vm447, %v4204, 0.0
        %4212 = vadd.xlane.f32.xlu0 %v4211
        %v4213 = vpop.xlane.xlu0 %4212
        %v4214 = vmul.f32 %v4207, %v2039
        %v4215 = vmul.f32 %v4210, %v2039
        %v4216 = vmul.f32 %v4213, %v2039
        %v4217 = vadd.f32 %v4214, 1e-05
        %v4218 = vadd.f32 %v4215, 1e-05
        %v4219 = vadd.f32 %v4216, 1e-05
        %v4220 = vrsqrt.pop %v4217
        %v4221 = vrsqrt.pop %v4218
        %v4222 = vrsqrt.pop %v4219
        %v4223 = vmul.f32 %v4199, %v4220
        %v4224 = vmul.f32 %v4200, %v4221
        %v4225 = vmul.f32 %v4201, %v4222
        %v4226 = vlaneseq
        %v4227 = vshrl.u32 %v4226, 7
        %v4228 = vsub.s32 0, %v4227
        %v4229 = vrot.slane %v2356, %v4228
        %v4230 = vmul.f32 %v4223, %v4229
        %v4231 = vmul.f32 %v4224, %v4229
        %v4232 = vmul.f32 %v4225, %v4229
        %v4233 = vlaneseq
        %v4234 = vshrl.u32 %v4233, 7
        %v4235 = vsub.s32 1, %v4234
        %v4236 = vrot.slane %v2356, %v4235
        %v4237 = vadd.f32 %v4230, %v4236
        %v4238 = vadd.f32 %v4231, %v4236
        %v4239 = vadd.f32 %v4232, %v4236
        %4240 = vst.msk [vmem:[%s315] sm:$0xff] %vm447, %v4237
        %4241 = vst.msk [vmem:[%s315 + $0x8] sm:$0xff] %vm447, %v4238
        %4242 = vst.msk [vmem:[%s315 + $0x10] sm:$0xff] %vm447, %v4239
        %v4243 = vld [vmem:[%s5] sm:$0xff]
        %v4244 = vld [vmem:[%s5 + $0x8] sm:$0xff]
        %v4245 = vld [vmem:[%s5 + $0x10] sm:$0xff]
        %v4246 = vld [vmem:[%s5 + $0x18] sm:$0xff]
        %v4247 = vld [vmem:[%s6] sm:$0x1]
        %v4249 = vsel %vm447, %v4237, 0
        %4251 = vmatprep.subr.mxu0 0.0
        %4252 = vmatpush1.msra.mxu0 %v4243
        %4253 = vmatprep.subr.mxu0 0.0
        %4254 = vmatpush1.msra.mxu0 %v4244
        %4255 = vmatprep.subr.mxu0 0.0
        %4256 = vmatpush1.msra.mxu0 %v4245
        %4257 = vmatprep.subr.mxu0 0.0
        %4258 = vmatpush1.msra.mxu0 %v4246
        %4259 = vmatprep.subr.mxu0 0.0
        %4260 = vmatpush1.msra.mxu0 0.0
        %4261 = vmatprep.subr.mxu0 0.0
        %4262 = vmatpush1.msra.mxu0 0.0
        %4263 = vmatprep.subr.mxu0 0.0
        %4264 = vmatpush1.msra.mxu0 0.0
        %4265 = vmatprep.subr.mxu0 0.0
        %4266 = vmatpush1.msra.mxu0 0.0
        %4267 = vmatprep.subr.mxu0 0.0
        %4268 = vmatpush1.msra.mxu0 0.0
        %4269 = vmatprep.subr.mxu0 0.0
        %4270 = vmatpush1.msra.mxu0 0.0
        %4271 = vmatprep.subr.mxu0 0.0
        %4272 = vmatpush1.msra.mxu0 0.0
        %4273 = vmatprep.subr.mxu0 0.0
        %4274 = vmatpush1.msra.mxu0 0.0
        %4275 = vmatprep.subr.mxu0 0.0
        %4276 = vmatpush1.msra.mxu0 0.0
        %4277 = vmatprep.subr.mxu0 0.0
        %4278 = vmatpush1.msra.mxu0 0.0
        %4279 = vmatprep.subr.mxu0 0.0
        %4280 = vmatpush1.msra.mxu0 0.0
        %4281 = vmatprep.subr.mxu0 0.0
        %4282 = vmatpush1.msra.mxu0 0.0
        %4283 = vmatprep.subr.mxu0 0.0
        %4284 = vmatpush1.msra.mxu0 0.0
        %4285 = vmatprep.subr.mxu0 0.0
        %4286 = vmatpush1.msra.mxu0 0.0
        %4287 = vmatprep.subr.mxu0 0.0
        %4288 = vmatpush1.msra.mxu0 0.0
        %4289 = vmatprep.subr.mxu0 0.0
        %4290 = vmatpush1.msra.mxu0 0.0
        %4291 = vmatprep.subr.mxu0 0.0
        %4292 = vmatpush1.msra.mxu0 0.0
        %4293 = vmatprep.subr.mxu0 0.0
        %4294 = vmatpush1.msra.mxu0 0.0
        %4295 = vmatprep.subr.mxu0 0.0
        %4296 = vmatpush1.msra.mxu0 0.0
        %4297 = vmatprep.subr.mxu0 0.0
        %4298 = vmatpush1.msra.mxu0 0.0
        %4299 = vmatprep.subr.mxu0 0.0
        %4300 = vmatpush1.msra.mxu0 0.0
        %4301 = vmatprep.subr.mxu0 0.0
        %4302 = vmatpush1.msra.mxu0 0.0
        %4303 = vmatprep.subr.mxu0 0.0
        %4304 = vmatpush1.msra.mxu0 0.0
        %4305 = vmatprep.subr.mxu0 0.0
        %4306 = vmatpush1.msra.mxu0 0.0
        %4307 = vmatprep.subr.mxu0 0.0
        %4308 = vmatpush1.msra.mxu0 0.0
        %4309 = vmatprep.subr.mxu0 0.0
        %4310 = vmatpush1.msra.mxu0 0.0
        %4311 = vmatprep.subr.mxu0 0.0
        %4312 = vmatpush1.msra.mxu0 0.0
        %4313 = vmatprep.subr.mxu0 0.0
        %4314 = vmatpush1.msra.mxu0 0.0
        %4315 = vmatprep.mubr.f32.mxu0 0.0
        %4316 = vmatmul.mubr.f32.gmra.mrb[0].mxu0 %v4249
        %v4317 = vpop.f32.mrb[0].mxu0
        %v4318 = vadd.f32 %v4247, %v4317
        %v4319 = vpop.f32.mrb[0].mxu0
        %4320 = vdwg.mxu0
        %vm4321 = vcmask 516096
        %4322 = vst.msk [vmem:[%s298] sm:$0x1] %vm4321, %v4318
        %s4323 = sand.u32 %s183, 1
        %s4324 = scalar_lea.sflag [#allocation3], %s4323
        %s4325 = sand.u32 %s183, 1
        %s4326 = scalar_lea.vmem [#allocation2], %s4325
        %p4327 = scmp.lt.s32.totalorder %s23, 1
        %s4328 = scalar_select %p4327, %s23, 1
        %s4329 = smul.addr %s4328, 3
        %s4330 = smul.addr %s4329, 8
        %s4331 = scalar_lea.vmem %s8, %s4330
        // Predicated region
        $region49: #{transformer_forward.1} parent=47 // pred_check
          %p4332 = pneg %p193
        $region50: #{transformer_forward.1} parent=47 // pred_check_branch
          %4334 = sbr.rel (%p4332) target = $region52
        $region51: #{transformer_forward.1} parent=47 // pred_region
          %s4336 = ssub.s32 16, 16
          %4337 = vsyncadd %s4324, %s4336
          %s4338 = smul.addr %s23, 16
          %s4339 = scalar_lea.hbm %s7, %s4338
          %s4341 = sshll.u32 %s4326, 4
          %s4342 = int_to_ptr.vmem [resolvable:$true] %s4341
          %4344 = dma.vmem_to_hbm [thread:$0]  %s4342, 16, %s4339, %s4324
        $region52: #{transformer_forward.1} parent=47 // pred_fallthru
          _
        // Predicated region
        $region53: #{transformer_forward.1} parent=47 // pred_check
          %p4345 = pneg %p219
        $region54: #{transformer_forward.1} parent=47 // pred_check_branch
          %4347 = sbr.rel (%p4345) target = $region56
        $region55: #{transformer_forward.1} parent=47 // pred_region
          _
        $region56: #{transformer_forward.1} parent=47 // pred_fallthru
          _
      $region48: #{transformer_forward.1} parent=5 // pred_fallthru
        _
      %p4348 = scmp.le.s32.totalorder 2, %s18
      // Predicated region
      $region57: #{transformer_forward.1} parent=5 // pred_check
        %p4349 = pneg %p4348
      $region58: #{transformer_forward.1} parent=5 // pred_check_branch
        %4351 = sbr.rel (%p4349) target = $region60
      $region59: #{transformer_forward.1} parent=5 // pred_region
        %s4352 = ssub.s32 %s18, 2
        // Predicated region
        $region61: #{transformer_forward.1} parent=59 // pred_check
          %p4353 = pneg %p199
        $region62: #{transformer_forward.1} parent=59 // pred_check_branch
          %4355 = sbr.rel (%p4353) target = $region64
        $region63: #{transformer_forward.1} parent=59 // pred_region
          %s4356 = sand.u32 %s184, 1
          %s4357 = scalar_lea.sflag [#allocation3], %s4356
          %s4358 = sand.u32 %s184, 1
          %s4359 = scalar_lea.vmem [#allocation2], %s4358
          %4360 = dma.done %s4357, 16
        $region64: #{transformer_forward.1} parent=59 // pred_fallthru
          _
        // Predicated region
        $region65: #{transformer_forward.1} parent=59 // pred_check
          %p4361 = pneg %p225
        $region66: #{transformer_forward.1} parent=59 // pred_check_branch
          %4363 = sbr.rel (%p4361) target = $region68
        $region67: #{transformer_forward.1} parent=59 // pred_region
          %p4364 = scmp.lt.s32.totalorder %s24, 1
          %s4365 = scalar_select %p4364, %s24, 1
          %s4366 = smul.addr %s4365, 3
          %s4367 = smul.addr %s4366, 8
          %s4368 = scalar_lea.vmem %s8, %s4367
        $region68: #{transformer_forward.1} parent=59 // pred_fallthru
          _
      $region60: #{transformer_forward.1} parent=5 // pred_fallthru
        _
    $region6: #{transformer_forward.1} parent=1 // loop_footer
      %s22 = sadd.s32 1, %s18
    $region7: #{transformer_forward.1} parent=1 // loop_footer_branch
      %17 = sbr.rel target = $region3
    $region8: #{transformer_forward.1} parent=1 // loop_exit
      _
    %4369 = vsyncpa [#allocation3], 1
    %s4370 = scalar_lea.sflag [#allocation3], 1
    %4371 = vsyncpa %s4370, 1

</llo_original>
